<compile_context>
chip_gen: v6e
topology: v6e:2x2x1
jax: 0.10.0
libtpu: 0.0.40
codegen_flags: <defaults>
</compile_context>

<pallas_src>
import math

import jax
import jax.numpy as jnp
from jax import lax
from jax.experimental import pallas as pl
from jax.experimental.pallas import tpu as pltpu


# ----------------------------- Conv GEMM kernel -----------------------------

def _gemm_bias_relu_kernel(x_ref, w_ref, b_ref, o_ref):
    # x: (tm, K) f32, w: (N, K) bf16, b: (1, N) f32 -> o: (tm, N) f32
    acc = lax.dot_general(
        x_ref[...].astype(jnp.bfloat16), w_ref[...],
        dimension_numbers=(((1,), (1,)), ((), ())),
        preferred_element_type=jnp.float32)
    o_ref[...] = jnp.maximum(acc + b_ref[...], 0.0)


def _pick_row_tile(m):
    for cand in (256, 200, 128, 112, 96, 80, 64, 56, 48, 40, 32, 24, 16, 8):
        if m % cand == 0:
            return cand
    return m  # fall back to a single full-M block (full dims are always legal)


def gemm_bias_relu(patches, wmat, b):
    """relu(patches @ wmat.T + b). patches (M,K) f32, wmat (N,K) bf16, b (N,)."""
    m, k = patches.shape
    n = wmat.shape[0]
    tm = _pick_row_tile(m)
    return pl.pallas_call(
        _gemm_bias_relu_kernel,
        out_shape=jax.ShapeDtypeStruct((m, n), jnp.float32),
        grid=(m // tm,),
        in_specs=[
            pl.BlockSpec((tm, k), lambda i: (i, 0)),   # patch row tile
            pl.BlockSpec((n, k), lambda i: (0, 0)),    # weight (resident, DMA'd once)
            pl.BlockSpec((1, n), lambda i: (0, 0)),    # bias
        ],
        out_specs=pl.BlockSpec((tm, n), lambda i: (i, 0)),
        compiler_params=pltpu.CompilerParams(
            dimension_semantics=("parallel",)),
    )(patches, wmat, b.reshape(1, n))


def conv2d_relu(x, wmat, b, *, k, s):
    """x: (B,H,W,C) NHWC f32; wmat: (Cout, k*k*C) bf16 with (kh,kw,Cin) column
    order; b: (Cout,) f32. Returns NHWC (B, OH, OW, Cout) f32."""
    B, H, W, C = x.shape
    OH = (H - k) // s + 1
    OW = (W - k) // s + 1
    cols = [x[:, kh:kh + s * OH:s, kw:kw + s * OW:s, :]
            for kh in range(k) for kw in range(k)]
    patches = jnp.concatenate(cols, axis=-1).reshape(B * OH * OW, k * k * C)
    out = gemm_bias_relu(patches, wmat, b)                # Pallas GEMM
    return out.reshape(B, OH, OW, wmat.shape[0])


# ------------------- Fused noisy head: relu(noisy1(x)) -> output -------------------

def _fused_noisy_head_kernel(x_ref, w1_ref, s1_ref, ei1_ref, eo1_ref, b1_ref,
                             w2_ref, b2_ref, o_ref):
    j = pl.program_id(0)

    @pl.when(j == 0)
    def _init():
        o_ref[...] = jnp.zeros_like(o_ref) + b2_ref[...]   # seed with layer-2 bias

    # Build the noisy layer-1 effective weight for this hidden tile in VMEM.
    noise = eo1_ref[...] * ei1_ref[...]                    # (tn, K1) f32
    w_eff = (w1_ref[...].astype(jnp.float32)
             + s1_ref[...].astype(jnp.float32) * noise).astype(jnp.bfloat16)
    acc = lax.dot_general(
        x_ref[...].astype(jnp.bfloat16), w_eff,
        dimension_numbers=(((1,), (1,)), ((), ())),
        preferred_element_type=jnp.float32)                # (B, tn)
    h = jnp.maximum(acc + b1_ref[...], 0.0)                # relu(noisy1) tile, f32
    # Second noisy linear, K-tiled along the same grid: accumulate into the
    # resident (B, n_actions) output block (f32).
    o_ref[...] += lax.dot_general(
        h.astype(jnp.bfloat16), w2_ref[...],
        dimension_numbers=(((1,), (1,)), ((), ())),
        preferred_element_type=jnp.float32)


def fused_noisy_head(x, w1, s1, ei1, eo1, b1_eff, w2_eff, b2_eff, *, tn=128):
    batch, k1 = x.shape
    n1 = w1.shape[0]
    n_act = w2_eff.shape[0]
    assert n1 % tn == 0
    return pl.pallas_call(
        _fused_noisy_head_kernel,
        out_shape=jax.ShapeDtypeStruct((batch, n_act), jnp.float32),
        grid=(n1 // tn,),
        in_specs=[
            pl.BlockSpec((batch, k1), lambda j: (0, 0)),   # x (resident)
            pl.BlockSpec((tn, k1), lambda j: (j, 0)),      # weight1 tile (bf16)
            pl.BlockSpec((tn, k1), lambda j: (j, 0)),      # sigma_weight1 tile (bf16)
            pl.BlockSpec((1, k1), lambda j: (0, 0)),       # f(eps_in1) (resident)
            pl.BlockSpec((tn, 1), lambda j: (j, 0)),       # f(eps_out1) tile
            pl.BlockSpec((1, tn), lambda j: (0, j)),       # effective bias1 tile
            pl.BlockSpec((n_act, tn), lambda j: (0, j)),   # layer-2 eff weight K-tile
            pl.BlockSpec((1, n_act), lambda j: (0, 0)),    # effective bias2
        ],
        out_specs=pl.BlockSpec((batch, n_act), lambda j: (0, 0)),
        compiler_params=pltpu.CompilerParams(
            dimension_semantics=("arbitrary",),
            vmem_limit_bytes=32 * 1024 * 1024),
    )(x, w1, s1, ei1, eo1, b1_eff, w2_eff, b2_eff)


# ----------------------------- Parameters -----------------------------

def init_params(key, n_actions):
    """Synthetic parameters in the original PyTorch layout (f32, NCHW weights)."""
    def uniform(k, shape, bound):
        return jax.random.uniform(k, shape, jnp.float32, -bound, bound)

    ks = jax.random.split(key, 10)
    p = {}
    bnd = 1.0 / math.sqrt(4 * 8 * 8)
    p["conv1_w"] = uniform(ks[0], (32, 4, 8, 8), bnd)
    p["conv1_b"] = uniform(ks[1], (32,), bnd)
    bnd = 1.0 / math.sqrt(32 * 4 * 4)
    p["conv2_w"] = uniform(ks[2], (64, 32, 4, 4), bnd)
    p["conv2_b"] = uniform(ks[3], (64,), bnd)
    bnd = 1.0 / math.sqrt(64 * 3 * 3)
    p["conv3_w"] = uniform(ks[4], (64, 64, 3, 3), bnd)
    p["conv3_b"] = uniform(ks[5], (64,), bnd)

    def noisy(kw, kb, in_f, out_f):
        bound = 1.0 / math.sqrt(in_f)
        sigma_init = 0.4 / math.sqrt(in_f)
        return {
            "weight": uniform(kw, (out_f, in_f), bound),
            "bias": uniform(kb, (out_f,), bound),
            "sigma_weight": jnp.full((out_f, in_f), sigma_init, jnp.float32),
            "sigma_bias": jnp.full((out_f,), sigma_init, jnp.float32),
        }

    p["noisy1"] = noisy(ks[6], ks[7], 3136, 512)
    p["output"] = noisy(ks[8], ks[9], 512, n_actions)
    return p


def prepare_params(p):
    """One-time reorder/cast: conv weights -> (Cout, kh*kw*Cin) bf16 (matches the
    NHWC im2col column order), big noisy1 weights -> bf16. No per-call copies."""
    def conv_wmat(w):
        o, c, k, _ = w.shape
        return jnp.transpose(w, (0, 2, 3, 1)).reshape(o, k * k * c).astype(jnp.bfloat16)

    return {
        "conv1_w": conv_wmat(p["conv1_w"]), "conv1_b": p["conv1_b"],
        "conv2_w": conv_wmat(p["conv2_w"]), "conv2_b": p["conv2_b"],
        "conv3_w": conv_wmat(p["conv3_w"]), "conv3_b": p["conv3_b"],
        "noisy1_w": p["noisy1"]["weight"].astype(jnp.bfloat16),
        "noisy1_sw": p["noisy1"]["sigma_weight"].astype(jnp.bfloat16),
        "noisy1_b": p["noisy1"]["bias"],
        "noisy1_sb": p["noisy1"]["sigma_bias"],
        "out_w": p["output"]["weight"],
        "out_sw": p["output"]["sigma_weight"],
        "out_b": p["output"]["bias"],
        "out_sb": p["output"]["sigma_bias"],
    }


# ----------------------------- Forward pass -----------------------------

def noisy_net_forward(x_nchw, prep, noise_key):
    # ConvBlock (batch_norm=False branch), internally NHWC.
    x = jnp.transpose(x_nchw, (0, 2, 3, 1))                           # (B,84,84,4)
    x = conv2d_relu(x, prep["conv1_w"], prep["conv1_b"], k=8, s=4)    # (B,20,20,32)
    x = conv2d_relu(x, prep["conv2_w"], prep["conv2_b"], k=4, s=2)    # (B,9,9,64)
    x = conv2d_relu(x, prep["conv3_w"], prep["conv3_b"], k=3, s=1)    # (B,7,7,64)
    B = x.shape[0]
    h = jnp.transpose(x, (0, 3, 1, 2)).reshape(B, -1)                 # NCHW flatten (B,3136)

    # Factorized noise, matching NoisyFactorizedLinear.forward.
    n1_out, n1_in = prep["noisy1_w"].shape
    n_act, n2_in = prep["out_w"].shape
    k1, k2, k3, k4 = jax.random.split(noise_key, 4)
    f = lambda v: jnp.sign(v) * jnp.sqrt(jnp.abs(v))
    ei1 = f(jax.random.normal(k1, (1, n1_in), jnp.float32))
    eo1 = f(jax.random.normal(k2, (n1_out, 1), jnp.float32))
    ei2 = f(jax.random.normal(k3, (1, n2_in), jnp.float32))
    eo2 = f(jax.random.normal(k4, (n_act, 1), jnp.float32))

    # Effective biases (512 / n_actions floats) and the tiny layer-2 effective
    # weight are built host-side; the 6.4 MB layer-1 weight is fused in-kernel.
    b1_eff = (prep["noisy1_b"] + prep["noisy1_sb"] * eo1[:, 0]).reshape(1, n1_out)
    w2_eff = (prep["out_w"] + prep["out_sw"] * (eo2 * ei2)).astype(jnp.bfloat16)
    b2_eff = (prep["out_b"] + prep["out_sb"] * eo2[:, 0]).reshape(1, n_act)

    return fused_noisy_head(h, prep["noisy1_w"], prep["noisy1_sw"], ei1, eo1,
                            b1_eff, w2_eff, b2_eff)


if __name__ == "__main__":
    key = jax.random.PRNGKey(0)
    k_x, k_p, k_noise = jax.random.split(key, 3)

    n_actions = 2
    batch = 2
    # 84x84 input is forced by the 3136 = 64*7*7 flatten in the module.
    x = jax.random.normal(k_x, (batch, 4, 84, 84), jnp.float32)
    params = init_params(k_p, n_actions)
    prep = prepare_params(params)

    fwd = jax.jit(noisy_net_forward)
    out = jax.block_until_ready(fwd(x, prep, k_noise))
    assert out.shape == (batch, n_actions), out.shape
    assert bool(jnp.all(jnp.isfinite(out)))
    print("KERNEL_OK")
</pallas_src>

<mosaic_0001>
module attributes {stable_mosaic.version = 11 : i64} {
  func.func @_gemm_bias_relu_kernel(%arg0: i32, %arg1: memref<200x256xf32, #tpu.memory_space<vmem>>, %arg2: memref<32x256xbf16, #tpu.memory_space<vmem>>, %arg3: memref<1x32xf32, #tpu.memory_space<vmem>>, %arg4: memref<200x32xf32, #tpu.memory_space<vmem>>) attributes {dimension_semantics = [#tpu.dimension_semantics<parallel>], iteration_bounds = array<i64: 4>, scalar_prefetch = 0 : i64, scratch_operands = 0 : i64, tpu.core_type = #tpu.core_type<tc>, window_params = [{transform_indices = @transform_0, window_bounds = array<i64: 200, 256>}, {pipeline_mode = #tpu.pipeline_mode<synchronous>, transform_indices = @transform_1, window_bounds = array<i64: 32, 256>}, {pipeline_mode = #tpu.pipeline_mode<synchronous>, transform_indices = @transform_2, window_bounds = array<i64: 1, 32>}, {transform_indices = @transform_3, window_bounds = array<i64: 200, 32>}]} {
    %c0 = arith.constant 0 : index
    %c0_0 = arith.constant 0 : index
    %0 = vector.load %arg1[%c0, %c0_0] : memref<200x256xf32, #tpu.memory_space<vmem>>, vector<200x256xf32>
    %1 = arith.truncf %0 : vector<200x256xf32> to vector<200x256xbf16>
    %c0_1 = arith.constant 0 : index
    %c0_2 = arith.constant 0 : index
    %2 = vector.load %arg2[%c0_1, %c0_2] : memref<32x256xbf16, #tpu.memory_space<vmem>>, vector<32x256xbf16>
    %cst = arith.constant dense<0.000000e+00> : vector<200x32xf32>
    %3 = tpu.matmul %1, %2, %cst {dimension_numbers = #tpu.dot_dimension_numbers<[1], [1], [0], [0], [0, 0, 1, 0], [], []>} : vector<200x256xbf16>, vector<32x256xbf16>, vector<200x32xf32> -> vector<200x32xf32>
    %c0_3 = arith.constant 0 : index
    %c0_4 = arith.constant 0 : index
    %4 = vector.load %arg3[%c0_3, %c0_4] : memref<1x32xf32, #tpu.memory_space<vmem>>, vector<1x32xf32>
    %5 = vector.broadcast %4 : vector<1x32xf32> to vector<200x32xf32>
    %6 = arith.addf %3, %5 : vector<200x32xf32>
    %cst_5 = arith.constant 0.000000e+00 : f32
    %7 = vector.broadcast %cst_5 : f32 to vector<200x32xf32>
    %8 = arith.maximumf %6, %7 : vector<200x32xf32>
    %c0_6 = arith.constant 0 : index
    %c0_7 = arith.constant 0 : index
    %9 = vector.load %arg4[%c0_6, %c0_7] : memref<200x32xf32, #tpu.memory_space<vmem>>, vector<200x32xf32>
    tpu.vector_store %arg4[%c0_6, %c0_7], %8 {strides = array<i32>} : memref<200x32xf32, #tpu.memory_space<vmem>>, vector<200x32xf32>,
    return
  }
  func.func @transform_0(%arg0: i32) -> (i32, i32) {
    %c0_i32 = arith.constant 0 : i32
    %c0_i32_0 = arith.constant 0 : i32
    return %arg0, %c0_i32 : i32, i32
  }
  func.func @transform_1(%arg0: i32) -> (i32, i32) {
    %c0_i32 = arith.constant 0 : i32
    %c0_i32_0 = arith.constant 0 : i32
    %c0_i32_1 = arith.constant 0 : i32
    return %c0_i32, %c0_i32_0 : i32, i32
  }
  func.func @transform_2(%arg0: i32) -> (i32, i32) {
    %c0_i32 = arith.constant 0 : i32
    %c0_i32_0 = arith.constant 0 : i32
    %c0_i32_1 = arith.constant 0 : i32
    return %c0_i32, %c0_i32_0 : i32, i32
  }
  func.func @transform_3(%arg0: i32) -> (i32, i32) {
    %c0_i32 = arith.constant 0 : i32
    %c0_i32_0 = arith.constant 0 : i32
    return %arg0, %c0_i32 : i32, i32
  }
}

module attributes {stable_mosaic.version = 11 : i64} {
  func.func @_gemm_bias_relu_kernel(%arg0: i32, %arg1: memref<162x512xf32, #tpu.memory_space<vmem>>, %arg2: memref<64x512xbf16, #tpu.memory_space<vmem>>, %arg3: memref<1x64xf32, #tpu.memory_space<vmem>>, %arg4: memref<162x64xf32, #tpu.memory_space<vmem>>) attributes {dimension_semantics = [#tpu.dimension_semantics<parallel>], iteration_bounds = array<i64: 1>, scalar_prefetch = 0 : i64, scratch_operands = 0 : i64, tpu.core_type = #tpu.core_type<tc>, window_params = [{transform_indices = @transform_0, window_bounds = array<i64: 162, 512>}, {pipeline_mode = #tpu.pipeline_mode<synchronous>, transform_indices = @transform_1, window_bounds = array<i64: 64, 512>}, {pipeline_mode = #tpu.pipeline_mode<synchronous>, transform_indices = @transform_2, window_bounds = array<i64: 1, 64>}, {transform_indices = @transform_3, window_bounds = array<i64: 162, 64>}]} {
    %c0 = arith.constant 0 : index
    %c0_0 = arith.constant 0 : index
    %0 = vector.load %arg1[%c0, %c0_0] : memref<162x512xf32, #tpu.memory_space<vmem>>, vector<162x512xf32>
    %1 = arith.truncf %0 : vector<162x512xf32> to vector<162x512xbf16>
    %c0_1 = arith.constant 0 : index
    %c0_2 = arith.constant 0 : index
    %2 = vector.load %arg2[%c0_1, %c0_2] : memref<64x512xbf16, #tpu.memory_space<vmem>>, vector<64x512xbf16>
    %cst = arith.constant dense<0.000000e+00> : vector<162x64xf32>
    %3 = tpu.matmul %1, %2, %cst {dimension_numbers = #tpu.dot_dimension_numbers<[1], [1], [0], [0], [0, 0, 1, 0], [], []>} : vector<162x512xbf16>, vector<64x512xbf16>, vector<162x64xf32> -> vector<162x64xf32>
    %c0_3 = arith.constant 0 : index
    %c0_4 = arith.constant 0 : index
    %4 = vector.load %arg3[%c0_3, %c0_4] : memref<1x64xf32, #tpu.memory_space<vmem>>, vector<1x64xf32>
    %5 = vector.broadcast %4 : vector<1x64xf32> to vector<162x64xf32>
    %6 = arith.addf %3, %5 : vector<162x64xf32>
    %cst_5 = arith.constant 0.000000e+00 : f32
    %7 = vector.broadcast %cst_5 : f32 to vector<162x64xf32>
    %8 = arith.maximumf %6, %7 : vector<162x64xf32>
    %c0_6 = arith.constant 0 : index
    %c0_7 = arith.constant 0 : index
    %9 = vector.load %arg4[%c0_6, %c0_7] : memref<162x64xf32, #tpu.memory_space<vmem>>, vector<162x64xf32>
    tpu.vector_store %arg4[%c0_6, %c0_7], %8 {strides = array<i32>} : memref<162x64xf32, #tpu.memory_space<vmem>>, vector<162x64xf32>,
    return
  }
  func.func @transform_0(%arg0: i32) -> (i32, i32) {
    %c0_i32 = arith.constant 0 : i32
    %c0_i32_0 = arith.constant 0 : i32
    return %arg0, %c0_i32 : i32, i32
  }
  func.func @transform_1(%arg0: i32) -> (i32, i32) {
    %c0_i32 = arith.constant 0 : i32
    %c0_i32_0 = arith.constant 0 : i32
    %c0_i32_1 = arith.constant 0 : i32
    return %c0_i32, %c0_i32_0 : i32, i32
  }
  func.func @transform_2(%arg0: i32) -> (i32, i32) {
    %c0_i32 = arith.constant 0 : i32
    %c0_i32_0 = arith.constant 0 : i32
    %c0_i32_1 = arith.constant 0 : i32
    return %c0_i32, %c0_i32_0 : i32, i32
  }
  func.func @transform_3(%arg0: i32) -> (i32, i32) {
    %c0_i32 = arith.constant 0 : i32
    %c0_i32_0 = arith.constant 0 : i32
    return %arg0, %c0_i32 : i32, i32
  }
}

module attributes {stable_mosaic.version = 11 : i64} {
  func.func @_gemm_bias_relu_kernel(%arg0: i32, %arg1: memref<98x576xf32, #tpu.memory_space<vmem>>, %arg2: memref<64x576xbf16, #tpu.memory_space<vmem>>, %arg3: memref<1x64xf32, #tpu.memory_space<vmem>>, %arg4: memref<98x64xf32, #tpu.memory_space<vmem>>) attributes {dimension_semantics = [#tpu.dimension_semantics<parallel>], iteration_bounds = array<i64: 1>, scalar_prefetch = 0 : i64, scratch_operands = 0 : i64, tpu.core_type = #tpu.core_type<tc>, window_params = [{transform_indices = @transform_0, window_bounds = array<i64: 98, 576>}, {pipeline_mode = #tpu.pipeline_mode<synchronous>, transform_indices = @transform_1, window_bounds = array<i64: 64, 576>}, {pipeline_mode = #tpu.pipeline_mode<synchronous>, transform_indices = @transform_2, window_bounds = array<i64: 1, 64>}, {transform_indices = @transform_3, window_bounds = array<i64: 98, 64>}]} {
    %c0 = arith.constant 0 : index
    %c0_0 = arith.constant 0 : index
    %0 = vector.load %arg1[%c0, %c0_0] : memref<98x576xf32, #tpu.memory_space<vmem>>, vector<98x576xf32>
    %1 = arith.truncf %0 : vector<98x576xf32> to vector<98x576xbf16>
    %c0_1 = arith.constant 0 : index
    %c0_2 = arith.constant 0 : index
    %2 = vector.load %arg2[%c0_1, %c0_2] : memref<64x576xbf16, #tpu.memory_space<vmem>>, vector<64x576xbf16>
    %cst = arith.constant dense<0.000000e+00> : vector<98x64xf32>
    %3 = tpu.matmul %1, %2, %cst {dimension_numbers = #tpu.dot_dimension_numbers<[1], [1], [0], [0], [0, 0, 1, 0], [], []>} : vector<98x576xbf16>, vector<64x576xbf16>, vector<98x64xf32> -> vector<98x64xf32>
    %c0_3 = arith.constant 0 : index
    %c0_4 = arith.constant 0 : index
    %4 = vector.load %arg3[%c0_3, %c0_4] : memref<1x64xf32, #tpu.memory_space<vmem>>, vector<1x64xf32>
    %5 = vector.broadcast %4 : vector<1x64xf32> to vector<98x64xf32>
    %6 = arith.addf %3, %5 : vector<98x64xf32>
    %cst_5 = arith.constant 0.000000e+00 : f32
    %7 = vector.broadcast %cst_5 : f32 to vector<98x64xf32>
    %8 = arith.maximumf %6, %7 : vector<98x64xf32>
    %c0_6 = arith.constant 0 : index
    %c0_7 = arith.constant 0 : index
    %9 = vector.load %arg4[%c0_6, %c0_7] : memref<98x64xf32, #tpu.memory_space<vmem>>, vector<98x64xf32>
    tpu.vector_store %arg4[%c0_6, %c0_7], %8 {strides = array<i32>} : memref<98x64xf32, #tpu.memory_space<vmem>>, vector<98x64xf32>,
    return
  }
  func.func @transform_0(%arg0: i32) -> (i32, i32) {
    %c0_i32 = arith.constant 0 : i32
    %c0_i32_0 = arith.constant 0 : i32
    return %arg0, %c0_i32 : i32, i32
  }
  func.func @transform_1(%arg0: i32) -> (i32, i32) {
    %c0_i32 = arith.constant 0 : i32
    %c0_i32_0 = arith.constant 0 : i32
    %c0_i32_1 = arith.constant 0 : i32
    return %c0_i32, %c0_i32_0 : i32, i32
  }
  func.func @transform_2(%arg0: i32) -> (i32, i32) {
    %c0_i32 = arith.constant 0 : i32
    %c0_i32_0 = arith.constant 0 : i32
    %c0_i32_1 = arith.constant 0 : i32
    return %c0_i32, %c0_i32_0 : i32, i32
  }
  func.func @transform_3(%arg0: i32) -> (i32, i32) {
    %c0_i32 = arith.constant 0 : i32
    %c0_i32_0 = arith.constant 0 : i32
    return %arg0, %c0_i32 : i32, i32
  }
}

module attributes {stable_mosaic.version = 11 : i64} {
  func.func @_fused_noisy_head_kernel(%arg0: i32, %arg1: memref<2x3136xf32, #tpu.memory_space<vmem>>, %arg2: memref<128x3136xbf16, #tpu.memory_space<vmem>>, %arg3: memref<128x3136xbf16, #tpu.memory_space<vmem>>, %arg4: memref<1x3136xf32, #tpu.memory_space<vmem>>, %arg5: memref<128x1xf32, #tpu.memory_space<vmem>>, %arg6: memref<1x128xf32, #tpu.memory_space<vmem>>, %arg7: memref<2x128xbf16, #tpu.memory_space<vmem>>, %arg8: memref<1x2xf32, #tpu.memory_space<vmem>>, %arg9: memref<2x2xf32, #tpu.memory_space<vmem>>) attributes {dimension_semantics = [#tpu.dimension_semantics<arbitrary>], iteration_bounds = array<i64: 4>, scalar_prefetch = 0 : i64, scratch_operands = 0 : i64, tpu.core_type = #tpu.core_type<tc>, window_params = [{pipeline_mode = #tpu.pipeline_mode<synchronous>, transform_indices = @transform_0, window_bounds = array<i64: 2, 3136>}, {transform_indices = @transform_1, window_bounds = array<i64: 128, 3136>}, {transform_indices = @transform_2, window_bounds = array<i64: 128, 3136>}, {pipeline_mode = #tpu.pipeline_mode<synchronous>, transform_indices = @transform_3, window_bounds = array<i64: 1, 3136>}, {transform_indices = @transform_4, window_bounds = array<i64: 128, 1>}, {transform_indices = @transform_5, window_bounds = array<i64: 1, 128>}, {transform_indices = @transform_6, window_bounds = array<i64: 2, 128>}, {pipeline_mode = #tpu.pipeline_mode<synchronous>, transform_indices = @transform_7, window_bounds = array<i64: 1, 2>}, {pipeline_mode = #tpu.pipeline_mode<synchronous>, transform_indices = @transform_8, window_bounds = array<i64: 2, 2>}]} {
    %c0_i32 = arith.constant 0 : i32
    %0 = arith.cmpi eq, %arg0, %c0_i32 : i32
    %1 = arith.extui %0 : i1 to i32
    %c0_i32_0 = arith.constant 0 : i32
    %2 = arith.cmpi ne, %1, %c0_i32_0 : i32
    scf.if %2 {
      %cst_20 = arith.constant 0.000000e+00 : f32
      %29 = vector.broadcast %cst_20 : f32 to vector<2x2xf32>
      %c0_21 = arith.constant 0 : index
      %c0_22 = arith.constant 0 : index
      %30 = vector.load %arg8[%c0_21, %c0_22] : memref<1x2xf32, #tpu.memory_space<vmem>>, vector<1x2xf32>
      %31 = vector.broadcast %30 : vector<1x2xf32> to vector<2x2xf32>
      %32 = arith.addf %29, %31 : vector<2x2xf32>
      %c0_23 = arith.constant 0 : index
      %c0_24 = arith.constant 0 : index
      %33 = vector.load %arg9[%c0_23, %c0_24] : memref<2x2xf32, #tpu.memory_space<vmem>>, vector<2x2xf32>
      tpu.vector_store %arg9[%c0_23, %c0_24], %32 {strides = array<i32>} : memref<2x2xf32, #tpu.memory_space<vmem>>, vector<2x2xf32>,
    } else {
    }
    %c0 = arith.constant 0 : index
    %c0_1 = arith.constant 0 : index
    %3 = vector.load %arg5[%c0, %c0_1] : memref<128x1xf32, #tpu.memory_space<vmem>>, vector<128x1xf32>
    %c0_2 = arith.constant 0 : index
    %c0_3 = arith.constant 0 : index
    %4 = vector.load %arg4[%c0_2, %c0_3] : memref<1x3136xf32, #tpu.memory_space<vmem>>, vector<1x3136xf32>
    %5 = vector.broadcast %3 : vector<128x1xf32> to vector<128x3136xf32>
    %6 = vector.broadcast %4 : vector<1x3136xf32> to vector<128x3136xf32>
    %7 = arith.mulf %5, %6 : vector<128x3136xf32>
    %c0_4 = arith.constant 0 : index
    %c0_5 = arith.constant 0 : index
    %8 = vector.load %arg2[%c0_4, %c0_5] : memref<128x3136xbf16, #tpu.memory_space<vmem>>, vector<128x3136xbf16>
    %9 = arith.extf %8 : vector<128x3136xbf16> to vector<128x3136xf32>
    %c0_6 = arith.constant 0 : index
    %c0_7 = arith.constant 0 : index
    %10 = vector.load %arg3[%c0_6, %c0_7] : memref<128x3136xbf16, #tpu.memory_space<vmem>>, vector<128x3136xbf16>
    %11 = arith.extf %10 : vector<128x3136xbf16> to vector<128x3136xf32>
    %12 = arith.mulf %11, %7 : vector<128x3136xf32>
    %13 = arith.addf %9, %12 : vector<128x3136xf32>
    %14 = arith.truncf %13 : vector<128x3136xf32> to vector<128x3136xbf16>
    %c0_8 = arith.constant 0 : index
    %c0_9 = arith.constant 0 : index
    %15 = vector.load %arg1[%c0_8, %c0_9] : memref<2x3136xf32, #tpu.memory_space<vmem>>, vector<2x3136xf32>
    %16 = arith.truncf %15 : vector<2x3136xf32> to vector<2x3136xbf16>
    %cst = arith.constant dense<0.000000e+00> : vector<2x128xf32>
    %17 = tpu.matmul %16, %14, %cst {dimension_numbers = #tpu.dot_dimension_numbers<[1], [1], [0], [0], [0, 0, 1, 0], [], []>} : vector<2x3136xbf16>, vector<128x3136xbf16>, vector<2x128xf32> -> vector<2x128xf32>
    %c0_10 = arith.constant 0 : index
    %c0_11 = arith.constant 0 : index
    %18 = vector.load %arg6[%c0_10, %c0_11] : memref<1x128xf32, #tpu.memory_space<vmem>>, vector<1x128xf32>
    %19 = vector.broadcast %18 : vector<1x128xf32> to vector<2x128xf32>
    %20 = arith.addf %17, %19 : vector<2x128xf32>
    %cst_12 = arith.constant 0.000000e+00 : f32
    %21 = vector.broadcast %cst_12 : f32 to vector<2x128xf32>
    %22 = arith.maximumf %20, %21 : vector<2x128xf32>
    %c0_13 = arith.constant 0 : index
    %c0_14 = arith.constant 0 : index
    %23 = vector.load %arg9[%c0_13, %c0_14] : memref<2x2xf32, #tpu.memory_space<vmem>>, vector<2x2xf32>
    %24 = arith.truncf %22 : vector<2x128xf32> to vector<2x128xbf16>
    %c0_15 = arith.constant 0 : index
    %c0_16 = arith.constant 0 : index
    %25 = vector.load %arg7[%c0_15, %c0_16] : memref<2x128xbf16, #tpu.memory_space<vmem>>, vector<2x128xbf16>
    %cst_17 = arith.constant dense<0.000000e+00> : vector<2x2xf32>
    %26 = tpu.matmul %24, %25, %cst_17 {dimension_numbers = #tpu.dot_dimension_numbers<[1], [1], [0], [0], [0, 0, 1, 0], [], []>} : vector<2x128xbf16>, vector<2x128xbf16>, vector<2x2xf32> -> vector<2x2xf32>
    %27 = arith.addf %23, %26 : vector<2x2xf32>
    %c0_18 = arith.constant 0 : index
    %c0_19 = arith.constant 0 : index
    %28 = vector.load %arg9[%c0_18, %c0_19] : memref<2x2xf32, #tpu.memory_space<vmem>>, vector<2x2xf32>
    tpu.vector_store %arg9[%c0_18, %c0_19], %27 {strides = array<i32>} : memref<2x2xf32, #tpu.memory_space<vmem>>, vector<2x2xf32>,
    return
  }
  func.func @transform_0(%arg0: i32) -> (i32, i32) {
    %c0_i32 = arith.constant 0 : i32
    %c0_i32_0 = arith.constant 0 : i32
    %c0_i32_1 = arith.constant 0 : i32
    return %c0_i32, %c0_i32_0 : i32, i32
  }
  func.func @transform_1(%arg0: i32) -> (i32, i32) {
    %c0_i32 = arith.constant 0 : i32
    %c0_i32_0 = arith.constant 0 : i32
    return %arg0, %c0_i32 : i32, i32
  }
  func.func @transform_2(%arg0: i32) -> (i32, i32) {
    %c0_i32 = arith.constant 0 : i32
    %c0_i32_0 = arith.constant 0 : i32
    return %arg0, %c0_i32 : i32, i32
  }
  func.func @transform_3(%arg0: i32) -> (i32, i32) {
    %c0_i32 = arith.constant 0 : i32
    %c0_i32_0 = arith.constant 0 : i32
    %c0_i32_1 = arith.constant 0 : i32
    return %c0_i32, %c0_i32_0 : i32, i32
  }
  func.func @transform_4(%arg0: i32) -> (i32, i32) {
    %c0_i32 = arith.constant 0 : i32
    %c0_i32_0 = arith.constant 0 : i32
    return %arg0, %c0_i32 : i32, i32
  }
  func.func @transform_5(%arg0: i32) -> (i32, i32) {
    %c0_i32 = arith.constant 0 : i32
    %c0_i32_0 = arith.constant 0 : i32
    return %c0_i32, %arg0 : i32, i32
  }
  func.func @transform_6(%arg0: i32) -> (i32, i32) {
    %c0_i32 = arith.constant 0 : i32
    %c0_i32_0 = arith.constant 0 : i32
    return %c0_i32, %arg0 : i32, i32
  }
  func.func @transform_7(%arg0: i32) -> (i32, i32) {
    %c0_i32 = arith.constant 0 : i32
    %c0_i32_0 = arith.constant 0 : i32
    %c0_i32_1 = arith.constant 0 : i32
    return %c0_i32, %c0_i32_0 : i32, i32
  }
  func.func @transform_8(%arg0: i32) -> (i32, i32) {
    %c0_i32 = arith.constant 0 : i32
    %c0_i32_0 = arith.constant 0 : i32
    %c0_i32_1 = arith.constant 0 : i32
    return %c0_i32, %c0_i32_0 : i32, i32
  }
}

</mosaic_0001>

<llo_original>
// kernel: noisy_net_forward.6
$region0: #{noisy_net_forward.6}
  #allocation0 [shape = 'u32[]', space=smem, size = 0x4, offset = 0x4, fixed_abs, tag = 'smem constant byte address 0x4 - core index']
  #allocation1 [shape = 'u32[144,128]{1,0:T(1,128)}', space=vmem, size = 0x12000, scoped, tag = 'internal scratch']
  %s0 = inlined_call_operand.vmem [shape: f32[800,256], index: 0, kind: input, shape index: {}]
  %s1 = inlined_call_operand.vmem [shape: bf16[32,256], index: 1, kind: input, shape index: {}]
  %s2 = inlined_call_operand.vmem [shape: f32[1,32], index: 2, kind: input, shape index: {}]
  %s3 = inlined_call_operand.vmem [shape: f32[800,32], index: 3, kind: output, shape index: {}]
  %s4 = sld [smem:[#allocation0]]
  $region45: #{noisy_net_forward.6} parent=0
    _
  %s6 = ssub.s32 1, %s4
  %s7 = scalar_select 0, %s6, %s4
  loop: start=0, step=1, limit=6
  $region2: #{noisy_net_forward.6} parent=0 // loop_pre_header
    _
  $region3: #{noisy_net_forward.6} parent=0 // loop_header
    %s9 = sphi 0, %s13
    %p10 = scmp.ge.s32.totalorder %s9, 6
    %s19 = sphi 0, %s21
    %s22 = sphi 0, %s19
    %s23 = sphi 0, %s22
    %s39 = sphi 0, %s23
    %s43 = sphi 0, %s43
    %s45 = sphi 0, %s43
    %s46 = sphi 0, %s45
    %s60 = sphi 0, %s46
    %s64 = sphi 0, %s64
    %s66 = sphi 0, %s64
    %s67 = sphi 0, %s66
    %s81 = sphi 0, %s67
    %s87 = sphi 0, %s89
    %s90 = sphi 0, %s87
    %s91 = sphi 0, %s90
    %s107 = sphi 0, %s91
  $region4: #{noisy_net_forward.6} parent=0 // loop_header_branch
    %12 = sbr.rel (%p10) target = $region8
  $region5: #{noisy_net_forward.6} parent=0 // loop_body
    %s14 = ssub.s32 %s9, 1
    %s15 = ssub.s32 %s9, 2
    %s16 = sadd.s32 %s9, 1
    %s17 = ssub.s32 %s9, %s16
    %p18 = scmp.eq.s32.totalorder %s17, 0
    %s20 = sadd.s32 %s19, 1
    %s21 = scalar_select %p18, %s19, %s20
    %p24 = pneg %p18
    %p25 = scmp.eq.s32.totalorder %s9, 3
    %p26 = por %p24, %p25
    %p27 = scmp.ne.s32.totalorder %s19, %s22
    %p28 = scmp.eq.s32.totalorder %s9, 0
    %p29 = por %p27, %p28
    %p30 = scmp.ne.s32.totalorder %s19, %s22
    %p31 = scmp.eq.s32.totalorder %s14, 3
    %p32 = por %p30, %p31
    %p33 = scmp.ne.s32.totalorder %s22, %s23
    %p34 = scmp.eq.s32.totalorder %s14, 0
    %p35 = por %p33, %p34
    %p36 = scmp.ne.s32.totalorder %s22, %s23
    %p37 = scmp.eq.s32.totalorder %s15, 3
    %p38 = por %p36, %p37
    %p40 = scmp.ne.s32.totalorder %s23, %s39
    %p41 = scmp.eq.s32.totalorder %s15, 0
    %p42 = por %p40, %p41
    %s44 = sadd.s32 %s43, 1
    %p47 = scmp.eq.s32.totalorder %s9, 3
    %p48 = scmp.ne.s32.totalorder %s43, %s45
    %p49 = scmp.eq.s32.totalorder %s9, 0
    %p50 = por %p48, %p49
    %p51 = scmp.ne.s32.totalorder %s43, %s45
    %p52 = scmp.eq.s32.totalorder %s14, 3
    %p53 = por %p51, %p52
    %p54 = scmp.ne.s32.totalorder %s45, %s46
    %p55 = scmp.eq.s32.totalorder %s14, 0
    %p56 = por %p54, %p55
    %p57 = scmp.ne.s32.totalorder %s45, %s46
    %p58 = scmp.eq.s32.totalorder %s15, 3
    %p59 = por %p57, %p58
    %p61 = scmp.ne.s32.totalorder %s46, %s60
    %p62 = scmp.eq.s32.totalorder %s15, 0
    %p63 = por %p61, %p62
    %s65 = sadd.s32 %s64, 1
    %p68 = scmp.eq.s32.totalorder %s9, 3
    %p69 = scmp.ne.s32.totalorder %s64, %s66
    %p70 = scmp.eq.s32.totalorder %s9, 0
    %p71 = por %p69, %p70
    %p72 = scmp.ne.s32.totalorder %s64, %s66
    %p73 = scmp.eq.s32.totalorder %s14, 3
    %p74 = por %p72, %p73
    %p75 = scmp.ne.s32.totalorder %s66, %s67
    %p76 = scmp.eq.s32.totalorder %s14, 0
    %p77 = por %p75, %p76
    %p78 = scmp.ne.s32.totalorder %s66, %s67
    %p79 = scmp.eq.s32.totalorder %s15, 3
    %p80 = por %p78, %p79
    %p82 = scmp.ne.s32.totalorder %s67, %s81
    %p83 = scmp.eq.s32.totalorder %s15, 0
    %p84 = por %p82, %p83
    %s85 = ssub.s32 %s9, %s16
    %p86 = scmp.eq.s32.totalorder %s85, 0
    %s88 = sadd.s32 %s87, 1
    %s89 = scalar_select %p86, %s87, %s88
    %p92 = pneg %p86
    %p93 = scmp.eq.s32.totalorder %s9, 3
    %p94 = por %p92, %p93
    %p95 = scmp.ne.s32.totalorder %s87, %s90
    %p96 = scmp.eq.s32.totalorder %s9, 0
    %p97 = por %p95, %p96
    %p98 = scmp.ne.s32.totalorder %s87, %s90
    %p99 = scmp.eq.s32.totalorder %s14, 3
    %p100 = por %p98, %p99
    %p101 = scmp.ne.s32.totalorder %s90, %s91
    %p102 = scmp.eq.s32.totalorder %s14, 0
    %p103 = por %p101, %p102
    %p104 = scmp.ne.s32.totalorder %s90, %s91
    %p105 = scmp.eq.s32.totalorder %s15, 3
    %p106 = por %p104, %p105
    %p108 = scmp.ne.s32.totalorder %s91, %s107
    %p109 = scmp.eq.s32.totalorder %s15, 0
    %p110 = por %p108, %p109
    %p111 = scmp.le.s32.totalorder 1, %s9
    %p112 = scmp.lt.s32.totalorder %s9, 5
    %p113 = pnand %p111, %p112
    %p114 = pneg %p113
    // Predicated region
    $region9: #{noisy_net_forward.6} parent=5 // pred_check
      _
    $region10: #{noisy_net_forward.6} parent=5 // pred_check_branch
      %116 = sbr.rel (%p113) target = $region12
    $region11: #{noisy_net_forward.6} parent=5 // pred_region
      %s117 = ssub.s32 %s9, 1
      // Predicated region
      $region13: #{noisy_net_forward.6} parent=11 // pred_check
        %p118 = pneg %p56
      $region14: #{noisy_net_forward.6} parent=11 // pred_check_branch
        %120 = sbr.rel (%p118) target = $region16
      $region15: #{noisy_net_forward.6} parent=11 // pred_region
        _
      $region16: #{noisy_net_forward.6} parent=11 // pred_fallthru
        _
      // Predicated region
      $region17: #{noisy_net_forward.6} parent=11 // pred_check
        %p121 = pneg %p77
      $region18: #{noisy_net_forward.6} parent=11 // pred_check_branch
        %123 = sbr.rel (%p121) target = $region20
      $region19: #{noisy_net_forward.6} parent=11 // pred_region
        _
      $region20: #{noisy_net_forward.6} parent=11 // pred_fallthru
        _
    $region12: #{noisy_net_forward.6} parent=5 // pred_fallthru
      _
    %p124 = scmp.lt.s32.totalorder %s9, 4
    // Predicated region
    $region21: #{noisy_net_forward.6} parent=5 // pred_check
      %p125 = pneg %p124
    $region22: #{noisy_net_forward.6} parent=5 // pred_check_branch
      %127 = sbr.rel (%p125) target = $region24
    $region23: #{noisy_net_forward.6} parent=5 // pred_region
      // Predicated region
      $region25: #{noisy_net_forward.6} parent=23 // pred_check
        %p128 = pneg %p29
      $region26: #{noisy_net_forward.6} parent=23 // pred_check_branch
        %130 = sbr.rel (%p128) target = $region28
      $region27: #{noisy_net_forward.6} parent=23 // pred_region
        %s131 = smul.u32 25, %s9
        %p132 = scmp.lt.s32.totalorder %s131, 99
        %s133 = scalar_select %p132, %s131, 99
        %s134 = smul.addr %s133, 2
        %s135 = smul.addr %s134, 8
        %s136 = scalar_lea.vmem %s0, %s135
        %s137 = smul.u32 25, %s9
      $region28: #{noisy_net_forward.6} parent=23 // pred_fallthru
        _
    $region24: #{noisy_net_forward.6} parent=5 // pred_fallthru
      _
    %p138 = scmp.le.s32.totalorder 1, %s9
    %p139 = scmp.lt.s32.totalorder %s9, 5
    %p140 = pnand %p138, %p139
    %p141 = pneg %p140
    // Predicated region
    $region29: #{noisy_net_forward.6} parent=5 // pred_check
      _
    $region30: #{noisy_net_forward.6} parent=5 // pred_check_branch
      %143 = sbr.rel (%p140) target = $region32
    $region31: #{noisy_net_forward.6} parent=5 // pred_region
      %s144 = ssub.s32 %s9, 1
      %s145 = smul.u32 25, %s14
      %p146 = scmp.lt.s32.totalorder %s145, 99
      %s147 = scalar_select %p146, %s145, 99
      %s148 = smul.addr %s147, 2
      %s149 = smul.addr %s148, 8
      %s150 = scalar_lea.vmem %s0, %s149
      %p151 = pneg %p35
      %p152 = pneg %p32
      %p153 = pneg %p56
      %p154 = pneg %p53
      %p155 = pneg %p77
      %p156 = pneg %p74
      %p157 = pneg %p103
      %p158 = pneg %p100
      %s159 = smul.u32 25, %s14
      %p160 = scmp.lt.s32.totalorder %s159, 99
      %s161 = scalar_select %p160, %s159, 99
      %s162 = smul.addr %s161, 8
      %s163 = scalar_lea.vmem %s3, %s162
      %s164 = smul.u32 25, %s14
      %p165 = scmp.lt.s32.totalorder %s164, 99
      %s166 = scalar_select %p165, %s164, 99
      %s167 = smul.addr %s166, 2
      %s168 = smul.addr %s167, 8
      %s169 = scalar_lea.vmem %s0, %s168
      %s170 = smul.u32 25, %s14
      %s171 = smul.u32 25, %s14
      %p172 = scmp.lt.s32.totalorder %s171, 99
      %s173 = scalar_select %p172, %s171, 99
      %s174 = smul.addr %s173, 8
      %s175 = scalar_lea.vmem %s3, %s174
      %s176 = smul.u32 25, %s14
      %v178 = vld [vmem:[%s169] sm:$0xff]
      %v179 = vld [vmem:[%s169 + $0x8] sm:$0xff]
      %v180 = vld [vmem:[%s169 + $0x10] sm:$0xff]
      %v181 = vld [vmem:[%s169 + $0x18] sm:$0xff]
      %v182 = vld [vmem:[%s169 + $0x20] sm:$0xff]
      %v183 = vld [vmem:[%s169 + $0x28] sm:$0xff]
      %v184 = vld [vmem:[%s169 + $0x30] sm:$0xff]
      %v185 = vld [vmem:[%s169 + $0x38] sm:$0xff]
      %v186 = vld [vmem:[%s169 + $0x40] sm:$0xff]
      %v187 = vld [vmem:[%s169 + $0x48] sm:$0xff]
      %v188 = vld [vmem:[%s169 + $0x50] sm:$0xff]
      %v189 = vld [vmem:[%s169 + $0x58] sm:$0xff]
      %v190 = vld [vmem:[%s169 + $0x60] sm:$0xff]
      %v191 = vld [vmem:[%s169 + $0x68] sm:$0xff]
      %v192 = vld [vmem:[%s169 + $0x70] sm:$0xff]
      %v193 = vld [vmem:[%s169 + $0x78] sm:$0xff]
      %v194 = vld [vmem:[%s169 + $0x80] sm:$0xff]
      %v195 = vld [vmem:[%s169 + $0x88] sm:$0xff]
      %v196 = vld [vmem:[%s169 + $0x90] sm:$0xff]
      %v197 = vld [vmem:[%s169 + $0x98] sm:$0xff]
      %v198 = vld [vmem:[%s169 + $0xa0] sm:$0xff]
      %v199 = vld [vmem:[%s169 + $0xa8] sm:$0xff]
      %v200 = vld [vmem:[%s169 + $0xb0] sm:$0xff]
      %v201 = vld [vmem:[%s169 + $0xb8] sm:$0xff]
      %v202 = vld [vmem:[%s169 + $0xc0] sm:$0xff]
      %v203 = vld [vmem:[%s169 + $0xc8] sm:$0xff]
      %v204 = vld [vmem:[%s169 + $0xd0] sm:$0xff]
      %v205 = vld [vmem:[%s169 + $0xd8] sm:$0xff]
      %v206 = vld [vmem:[%s169 + $0xe0] sm:$0xff]
      %v207 = vld [vmem:[%s169 + $0xe8] sm:$0xff]
      %v208 = vld [vmem:[%s169 + $0xf0] sm:$0xff]
      %v209 = vld [vmem:[%s169 + $0xf8] sm:$0xff]
      %v210 = vld [vmem:[%s169 + $0x100] sm:$0xff]
      %v211 = vld [vmem:[%s169 + $0x108] sm:$0xff]
      %v212 = vld [vmem:[%s169 + $0x110] sm:$0xff]
      %v213 = vld [vmem:[%s169 + $0x118] sm:$0xff]
      %v214 = vld [vmem:[%s169 + $0x120] sm:$0xff]
      %v215 = vld [vmem:[%s169 + $0x128] sm:$0xff]
      %v216 = vld [vmem:[%s169 + $0x130] sm:$0xff]
      %v217 = vld [vmem:[%s169 + $0x138] sm:$0xff]
      %v218 = vld [vmem:[%s169 + $0x140] sm:$0xff]
      %v219 = vld [vmem:[%s169 + $0x148] sm:$0xff]
      %v220 = vld [vmem:[%s169 + $0x150] sm:$0xff]
      %v221 = vld [vmem:[%s169 + $0x158] sm:$0xff]
      %v222 = vld [vmem:[%s169 + $0x160] sm:$0xff]
      %v223 = vld [vmem:[%s169 + $0x168] sm:$0xff]
      %v224 = vld [vmem:[%s169 + $0x170] sm:$0xff]
      %v225 = vld [vmem:[%s169 + $0x178] sm:$0xff]
      %v226 = vld [vmem:[%s169 + $0x180] sm:$0xff]
      %v227 = vld [vmem:[%s169 + $0x188] sm:$0xff]
      %v228 = vpack.c.bf16 %v180, %v178
      %v229 = vpack.c.bf16 %v181, %v179
      %v230 = vpack.c.bf16 %v184, %v182
      %v231 = vpack.c.bf16 %v185, %v183
      %v232 = vpack.c.bf16 %v188, %v186
      %v233 = vpack.c.bf16 %v189, %v187
      %v234 = vpack.c.bf16 %v192, %v190
      %v235 = vpack.c.bf16 %v193, %v191
      %v236 = vpack.c.bf16 %v196, %v194
      %v237 = vpack.c.bf16 %v197, %v195
      %v238 = vpack.c.bf16 %v200, %v198
      %v239 = vpack.c.bf16 %v201, %v199
      %v240 = vpack.c.bf16 %v204, %v202
      %v241 = vpack.c.bf16 %v205, %v203
      %v242 = vpack.c.bf16 %v208, %v206
      %v243 = vpack.c.bf16 %v209, %v207
      %v244 = vpack.c.bf16 %v212, %v210
      %v245 = vpack.c.bf16 %v213, %v211
      %v246 = vpack.c.bf16 %v216, %v214
      %v247 = vpack.c.bf16 %v217, %v215
      %v248 = vpack.c.bf16 %v220, %v218
      %v249 = vpack.c.bf16 %v221, %v219
      %v250 = vpack.c.bf16 %v224, %v222
      %v251 = vpack.c.bf16 %v225, %v223
      %v252 = vpack.c.bf16 %v226, %v226
      %v253 = vpack.c.bf16 %v227, %v227
      %v254 = vld [vmem:[%s1] sm:$0xff]
      %v255 = vld [vmem:[%s1 + $0x8] sm:$0xff]
      %v256 = vld [vmem:[%s1 + $0x10] sm:$0xff]
      %v257 = vld [vmem:[%s1 + $0x18] sm:$0xff]
      %v258 = vld [vmem:[%s2] sm:$0x1]
      %v260 = vlaneseq
      %v261 = vshrl.u32 %v260, 7
      %v262 = vsub.s32 0, %v261
      %v263 = vrot.slane %v258, %v262
      %v269 = vunpack.c.l.b16 %v254
      %v270 = vunpack.c.h.b16 %v254
      %v271 = vunpack.c.l.b16 %v255
      %v272 = vunpack.c.h.b16 %v255
      %v273 = vunpack.c.l.b16 %v256
      %v274 = vunpack.c.h.b16 %v256
      %v275 = vunpack.c.l.b16 %v257
      %v276 = vunpack.c.h.b16 %v257
      %v277 = vpack.c.b16 %v271, %v269
      %v278 = vpack.c.b16 %v272, %v270
      %v279 = vpack.c.b16 %v275, %v273
      %v280 = vpack.c.b16 %v276, %v274
      %285 = vmatprep.subr.bf16.mxu0 0
      %286 = vmatpush1.bf16.xpose.msra.mxu0 0
      %287 = vmatprep.subr.bf16.mxu0 0
      %288 = vmatpush1.bf16.xpose.msra.mxu0 0
      %289 = vmatprep.subr.bf16.mxu0 0
      %290 = vmatpush1.bf16.xpose.msra.mxu0 0
      %291 = vmatprep.subr.bf16.mxu0 0
      %292 = vmatpush1.bf16.xpose.msra.mxu0 0
      %293 = vmatprep.subr.bf16.mxu0 0
      %294 = vmatpush1.bf16.xpose.msra.mxu0 0
      %295 = vmatprep.subr.bf16.mxu0 0
      %296 = vmatpush1.bf16.xpose.msra.mxu0 0
      %297 = vmatprep.subr.bf16.mxu0 %v280
      %298 = vmatpush1.bf16.xpose.msra.mxu0 %v279
      %299 = vmatprep.subr.bf16.mxu0 %v278
      %300 = vmatpush1.bf16.xpose.msra.mxu0 %v277
      %301 = vmatprep.subr.bf16.mxu0 0
      %302 = vmatpush2.bf16.xpose.msra.mxu0 0
      %303 = vmatprep.subr.bf16.mxu0 0
      %304 = vmatpush2.bf16.xpose.msra.mxu0 0
      %305 = vmatprep.subr.bf16.mxu0 0
      %306 = vmatpush2.bf16.xpose.msra.mxu0 0
      %307 = vmatprep.subr.bf16.mxu0 0
      %308 = vmatpush2.bf16.xpose.msra.mxu0 0
      %309 = vmatprep.subr.bf16.mxu0 0
      %310 = vmatpush2.bf16.xpose.msra.mxu0 0
      %311 = vmatprep.subr.bf16.mxu0 0
      %312 = vmatpush2.bf16.xpose.msra.mxu0 0
      %313 = vmatprep.subr.bf16.mxu0 0
      %314 = vmatpush2.bf16.xpose.msra.mxu0 0
      %315 = vmatprep.subr.bf16.mxu0 0
      %316 = vmatpush2.bf16.xpose.msra.mxu0 0
      %317 = vmatprep.mubr.bf16.mxu0 %v229
      %318 = vmatmul.mubr.bf16.gmra.mxu0 %v228
      %v319 = vpop.f32.mrf.mxu0
      %v320 = vadd.f32 %v263, %v319
      %v321 = vpop.f32.mrf.mxu0
      %v322 = vpop.f32.mrf.mxu0
      %v323 = vadd.f32 %v263, %v322
      %v324 = vpop.f32.mrf.mxu0
      %325 = vmatprep.mubr.bf16.mxu0 %v231
      %326 = vmatmul.mubr.bf16.gmra.mxu0 %v230
      %v327 = vpop.f32.mrf.mxu0
      %v328 = vadd.f32 %v263, %v327
      %v329 = vpop.f32.mrf.mxu0
      %v330 = vpop.f32.mrf.mxu0
      %v331 = vadd.f32 %v263, %v330
      %v332 = vpop.f32.mrf.mxu0
      %333 = vmatprep.mubr.bf16.mxu0 %v233
      %334 = vmatmul.mubr.bf16.gmra.mxu0 %v232
      %v335 = vpop.f32.mrf.mxu0
      %v336 = vadd.f32 %v263, %v335
      %v337 = vpop.f32.mrf.mxu0
      %v338 = vpop.f32.mrf.mxu0
      %v339 = vadd.f32 %v263, %v338
      %v340 = vpop.f32.mrf.mxu0
      %341 = vmatprep.mubr.bf16.mxu0 %v235
      %342 = vmatmul.mubr.bf16.gmra.mxu0 %v234
      %v343 = vpop.f32.mrf.mxu0
      %v344 = vadd.f32 %v263, %v343
      %v345 = vpop.f32.mrf.mxu0
      %v346 = vpop.f32.mrf.mxu0
      %v347 = vadd.f32 %v263, %v346
      %v348 = vpop.f32.mrf.mxu0
      %349 = vmatprep.mubr.bf16.mxu0 %v237
      %350 = vmatmul.mubr.bf16.gmra.mxu0 %v236
      %v351 = vpop.f32.mrf.mxu0
      %v352 = vadd.f32 %v263, %v351
      %v353 = vpop.f32.mrf.mxu0
      %v354 = vpop.f32.mrf.mxu0
      %v355 = vadd.f32 %v263, %v354
      %v356 = vpop.f32.mrf.mxu0
      %357 = vmatprep.mubr.bf16.mxu0 %v239
      %358 = vmatmul.mubr.bf16.gmra.mxu0 %v238
      %v359 = vpop.f32.mrf.mxu0
      %v360 = vadd.f32 %v263, %v359
      %v361 = vpop.f32.mrf.mxu0
      %v362 = vpop.f32.mrf.mxu0
      %v363 = vadd.f32 %v263, %v362
      %v364 = vpop.f32.mrf.mxu0
      %365 = vmatprep.mubr.bf16.mxu0 %v241
      %366 = vmatmul.mubr.bf16.gmra.mxu0 %v240
      %v367 = vpop.f32.mrf.mxu0
      %v368 = vadd.f32 %v263, %v367
      %v369 = vpop.f32.mrf.mxu0
      %v370 = vpop.f32.mrf.mxu0
      %v371 = vadd.f32 %v263, %v370
      %v372 = vpop.f32.mrf.mxu0
      %373 = vmatprep.mubr.bf16.mxu0 %v243
      %374 = vmatmul.mubr.bf16.gmra.mxu0 %v242
      %v375 = vpop.f32.mrf.mxu0
      %v376 = vadd.f32 %v263, %v375
      %v377 = vpop.f32.mrf.mxu0
      %v378 = vpop.f32.mrf.mxu0
      %v379 = vadd.f32 %v263, %v378
      %v380 = vpop.f32.mrf.mxu0
      %381 = vmatprep.mubr.bf16.mxu0 %v245
      %382 = vmatmul.mubr.bf16.gmra.mxu0 %v244
      %v383 = vpop.f32.mrf.mxu0
      %v384 = vadd.f32 %v263, %v383
      %v385 = vpop.f32.mrf.mxu0
      %v386 = vpop.f32.mrf.mxu0
      %v387 = vadd.f32 %v263, %v386
      %v388 = vpop.f32.mrf.mxu0
      %389 = vmatprep.mubr.bf16.mxu0 %v247
      %390 = vmatmul.mubr.bf16.gmra.mxu0 %v246
      %v391 = vpop.f32.mrf.mxu0
      %v392 = vadd.f32 %v263, %v391
      %v393 = vpop.f32.mrf.mxu0
      %v394 = vpop.f32.mrf.mxu0
      %v395 = vadd.f32 %v263, %v394
      %v396 = vpop.f32.mrf.mxu0
      %397 = vmatprep.mubr.bf16.mxu0 %v249
      %398 = vmatmul.mubr.bf16.gmra.mxu0 %v248
      %v399 = vpop.f32.mrf.mxu0
      %v400 = vadd.f32 %v263, %v399
      %v401 = vpop.f32.mrf.mxu0
      %v402 = vpop.f32.mrf.mxu0
      %v403 = vadd.f32 %v263, %v402
      %v404 = vpop.f32.mrf.mxu0
      %405 = vmatprep.mubr.bf16.mxu0 %v251
      %406 = vmatmul.mubr.bf16.gmra.mxu0 %v250
      %v407 = vpop.f32.mrf.mxu0
      %v408 = vadd.f32 %v263, %v407
      %v409 = vpop.f32.mrf.mxu0
      %v410 = vpop.f32.mrf.mxu0
      %v411 = vadd.f32 %v263, %v410
      %v412 = vpop.f32.mrf.mxu0
      %413 = vmatprep.mubr.bf16.mxu0 %v253
      %414 = vmatmul.mubr.bf16.gmra.mxu0 %v252
      %v415 = vpop.f32.mrf.mxu0
      %v416 = vadd.f32 %v263, %v415
      %v417 = vpop.f32.mrf.mxu0
      %v418 = vpop.f32.mrf.mxu0
      %v419 = vpop.f32.mrf.mxu0
      %420 = vdwg.mxu0
      %v421 = vmax.f32 %v320, 0.0
      %v422 = vmax.f32 %v323, 0.0
      %v423 = vmax.f32 %v328, 0.0
      %v424 = vmax.f32 %v331, 0.0
      %v425 = vmax.f32 %v336, 0.0
      %v426 = vmax.f32 %v339, 0.0
      %v427 = vmax.f32 %v344, 0.0
      %v428 = vmax.f32 %v347, 0.0
      %v429 = vmax.f32 %v352, 0.0
      %v430 = vmax.f32 %v355, 0.0
      %v431 = vmax.f32 %v360, 0.0
      %v432 = vmax.f32 %v363, 0.0
      %v433 = vmax.f32 %v368, 0.0
      %v434 = vmax.f32 %v371, 0.0
      %v435 = vmax.f32 %v376, 0.0
      %v436 = vmax.f32 %v379, 0.0
      %v437 = vmax.f32 %v384, 0.0
      %v438 = vmax.f32 %v387, 0.0
      %v439 = vmax.f32 %v392, 0.0
      %v440 = vmax.f32 %v395, 0.0
      %v441 = vmax.f32 %v400, 0.0
      %v442 = vmax.f32 %v403, 0.0
      %v443 = vmax.f32 %v408, 0.0
      %v444 = vmax.f32 %v411, 0.0
      %v445 = vmax.f32 %v416, 0.0
      %vm446 = vcmask 261120
      %447 = vst.msk [vmem:[%s175] sm:$0xff] %vm446, %v421
      %448 = vst.msk [vmem:[%s175 + $0x8] sm:$0xff] %vm446, %v422
      %449 = vst.msk [vmem:[%s175 + $0x10] sm:$0xff] %vm446, %v423
      %450 = vst.msk [vmem:[%s175 + $0x18] sm:$0xff] %vm446, %v424
      %451 = vst.msk [vmem:[%s175 + $0x20] sm:$0xff] %vm446, %v425
      %452 = vst.msk [vmem:[%s175 + $0x28] sm:$0xff] %vm446, %v426
      %453 = vst.msk [vmem:[%s175 + $0x30] sm:$0xff] %vm446, %v427
      %454 = vst.msk [vmem:[%s175 + $0x38] sm:$0xff] %vm446, %v428
      %455 = vst.msk [vmem:[%s175 + $0x40] sm:$0xff] %vm446, %v429
      %456 = vst.msk [vmem:[%s175 + $0x48] sm:$0xff] %vm446, %v430
      %457 = vst.msk [vmem:[%s175 + $0x50] sm:$0xff] %vm446, %v431
      %458 = vst.msk [vmem:[%s175 + $0x58] sm:$0xff] %vm446, %v432
      %459 = vst.msk [vmem:[%s175 + $0x60] sm:$0xff] %vm446, %v433
      %460 = vst.msk [vmem:[%s175 + $0x68] sm:$0xff] %vm446, %v434
      %461 = vst.msk [vmem:[%s175 + $0x70] sm:$0xff] %vm446, %v435
      %462 = vst.msk [vmem:[%s175 + $0x78] sm:$0xff] %vm446, %v436
      %463 = vst.msk [vmem:[%s175 + $0x80] sm:$0xff] %vm446, %v437
      %464 = vst.msk [vmem:[%s175 + $0x88] sm:$0xff] %vm446, %v438
      %465 = vst.msk [vmem:[%s175 + $0x90] sm:$0xff] %vm446, %v439
      %466 = vst.msk [vmem:[%s175 + $0x98] sm:$0xff] %vm446, %v440
      %467 = vst.msk [vmem:[%s175 + $0xa0] sm:$0xff] %vm446, %v441
      %468 = vst.msk [vmem:[%s175 + $0xa8] sm:$0xff] %vm446, %v442
      %469 = vst.msk [vmem:[%s175 + $0xb0] sm:$0xff] %vm446, %v443
      %470 = vst.msk [vmem:[%s175 + $0xb8] sm:$0xff] %vm446, %v444
      %471 = vst.msk [vmem:[%s175 + $0xc0] sm:$0xff] %vm446, %v445
      %s472 = smul.u32 25, %s14
      %p473 = scmp.lt.s32.totalorder %s472, 99
      %s474 = scalar_select %p473, %s472, 99
      %s475 = smul.addr %s474, 8
      %s476 = scalar_lea.vmem %s3, %s475
      // Predicated region
      $region33: #{noisy_net_forward.6} parent=31 // pred_check
        %p477 = pneg %p100
      $region34: #{noisy_net_forward.6} parent=31 // pred_check_branch
        %479 = sbr.rel (%p477) target = $region36
      $region35: #{noisy_net_forward.6} parent=31 // pred_region
        %s480 = smul.u32 25, %s14
      $region36: #{noisy_net_forward.6} parent=31 // pred_fallthru
        _
    $region32: #{noisy_net_forward.6} parent=5 // pred_fallthru
      _
    %p481 = scmp.le.s32.totalorder 2, %s9
    // Predicated region
    $region37: #{noisy_net_forward.6} parent=5 // pred_check
      %p482 = pneg %p481
    $region38: #{noisy_net_forward.6} parent=5 // pred_check_branch
      %484 = sbr.rel (%p482) target = $region40
    $region39: #{noisy_net_forward.6} parent=5 // pred_region
      %s485 = ssub.s32 %s9, 2
      // Predicated region
      $region41: #{noisy_net_forward.6} parent=39 // pred_check
        %p486 = pneg %p106
      $region42: #{noisy_net_forward.6} parent=39 // pred_check_branch
        %488 = sbr.rel (%p486) target = $region44
      $region43: #{noisy_net_forward.6} parent=39 // pred_region
        %s489 = smul.u32 25, %s15
        %p490 = scmp.lt.s32.totalorder %s489, 99
        %s491 = scalar_select %p490, %s489, 99
        %s492 = smul.addr %s491, 8
        %s493 = scalar_lea.vmem %s3, %s492
      $region44: #{noisy_net_forward.6} parent=39 // pred_fallthru
        _
    $region40: #{noisy_net_forward.6} parent=5 // pred_fallthru
      _
  $region6: #{noisy_net_forward.6} parent=0 // loop_footer
    %s13 = sadd.s32 1, %s9
  $region7: #{noisy_net_forward.6} parent=0 // loop_footer_branch
    %8 = sbr.rel target = $region3
  $region8: #{noisy_net_forward.6} parent=0 // loop_exit
    _

// kernel: noisy_net_forward.7
$region0: #{noisy_net_forward.7}
  #allocation0 [shape = 'u32[]', space=smem, size = 0x4, offset = 0x4, fixed_abs, tag = 'smem constant byte address 0x4 - core index']
  #allocation1 [shape = 'u32[144,128]{1,0:T(1,128)}', space=vmem, size = 0x12000, scoped, tag = 'internal scratch']
  %s0 = inlined_call_operand.vmem [shape: f32[162,512], index: 0, kind: input, shape index: {}]
  %s1 = inlined_call_operand.vmem [shape: bf16[64,512], index: 1, kind: input, shape index: {}]
  %s2 = inlined_call_operand.vmem [shape: f32[1,64], index: 2, kind: input, shape index: {}]
  %s3 = inlined_call_operand.vmem [shape: f32[162,64], index: 3, kind: output, shape index: {}]
  %s4 = sld [smem:[#allocation0]]
  $region22: #{noisy_net_forward.7} parent=0
    _
  %s6 = ssub.s32 1, %s4
  %s7 = scalar_select 0, %s6, %s4
  // Predicated region
  $region2: #{noisy_net_forward.7} parent=0 // pred_check
    _
  $region3: #{noisy_net_forward.7} parent=0 // pred_check_branch
    %9 = sbr.rel (0) target = $region5
  $region4: #{noisy_net_forward.7} parent=0 // pred_region
    _
  $region5: #{noisy_net_forward.7} parent=0 // pred_fallthru
    _
  // Predicated region
  $region6: #{noisy_net_forward.7} parent=0 // pred_check
    _
  $region7: #{noisy_net_forward.7} parent=0 // pred_check_branch
    %11 = sbr.rel (0) target = $region9
  $region8: #{noisy_net_forward.7} parent=0 // pred_region
    _
  $region9: #{noisy_net_forward.7} parent=0 // pred_fallthru
    _
  // Predicated region
  $region10: #{noisy_net_forward.7} parent=0 // pred_check
    _
  $region11: #{noisy_net_forward.7} parent=0 // pred_check_branch
    %13 = sbr.rel (0) target = $region13
  $region12: #{noisy_net_forward.7} parent=0 // pred_region
    _
  $region13: #{noisy_net_forward.7} parent=0 // pred_fallthru
    _
  %v15 = vld [vmem:[%s0] sm:$0xff]
  %v16 = vld [vmem:[%s0 + $0x8] sm:$0xff]
  %v17 = vld [vmem:[%s0 + $0x10] sm:$0xff]
  %v18 = vld [vmem:[%s0 + $0x18] sm:$0xff]
  %v19 = vld [vmem:[%s0 + $0x20] sm:$0xff]
  %v20 = vld [vmem:[%s0 + $0x28] sm:$0xff]
  %v21 = vld [vmem:[%s0 + $0x30] sm:$0xff]
  %v22 = vld [vmem:[%s0 + $0x38] sm:$0xff]
  %v23 = vld [vmem:[%s0 + $0x40] sm:$0xff]
  %v24 = vld [vmem:[%s0 + $0x48] sm:$0xff]
  %v25 = vld [vmem:[%s0 + $0x50] sm:$0xff]
  %v26 = vld [vmem:[%s0 + $0x58] sm:$0xff]
  %v27 = vld [vmem:[%s0 + $0x60] sm:$0xff]
  %v28 = vld [vmem:[%s0 + $0x68] sm:$0xff]
  %v29 = vld [vmem:[%s0 + $0x70] sm:$0xff]
  %v30 = vld [vmem:[%s0 + $0x78] sm:$0xff]
  %v31 = vld [vmem:[%s0 + $0x80] sm:$0xff]
  %v32 = vld [vmem:[%s0 + $0x88] sm:$0xff]
  %v33 = vld [vmem:[%s0 + $0x90] sm:$0xff]
  %v34 = vld [vmem:[%s0 + $0x98] sm:$0xff]
  %v35 = vld [vmem:[%s0 + $0xa0] sm:$0xff]
  %v36 = vld [vmem:[%s0 + $0xa8] sm:$0xff]
  %v37 = vld [vmem:[%s0 + $0xb0] sm:$0xff]
  %v38 = vld [vmem:[%s0 + $0xb8] sm:$0xff]
  %v39 = vld [vmem:[%s0 + $0xc0] sm:$0xff]
  %v40 = vld [vmem:[%s0 + $0xc8] sm:$0xff]
  %v41 = vld [vmem:[%s0 + $0xd0] sm:$0xff]
  %v42 = vld [vmem:[%s0 + $0xd8] sm:$0xff]
  %v43 = vld [vmem:[%s0 + $0xe0] sm:$0xff]
  %v44 = vld [vmem:[%s0 + $0xe8] sm:$0xff]
  %v45 = vld [vmem:[%s0 + $0xf0] sm:$0xff]
  %v46 = vld [vmem:[%s0 + $0xf8] sm:$0xff]
  %v47 = vld [vmem:[%s0 + $0x100] sm:$0xff]
  %v48 = vld [vmem:[%s0 + $0x108] sm:$0xff]
  %v49 = vld [vmem:[%s0 + $0x110] sm:$0xff]
  %v50 = vld [vmem:[%s0 + $0x118] sm:$0xff]
  %v51 = vld [vmem:[%s0 + $0x120] sm:$0xff]
  %v52 = vld [vmem:[%s0 + $0x128] sm:$0xff]
  %v53 = vld [vmem:[%s0 + $0x130] sm:$0xff]
  %v54 = vld [vmem:[%s0 + $0x138] sm:$0xff]
  %v55 = vld [vmem:[%s0 + $0x140] sm:$0xff]
  %v56 = vld [vmem:[%s0 + $0x148] sm:$0xff]
  %v57 = vld [vmem:[%s0 + $0x150] sm:$0xff]
  %v58 = vld [vmem:[%s0 + $0x158] sm:$0xff]
  %v59 = vld [vmem:[%s0 + $0x160] sm:$0xff]
  %v60 = vld [vmem:[%s0 + $0x168] sm:$0xff]
  %v61 = vld [vmem:[%s0 + $0x170] sm:$0xff]
  %v62 = vld [vmem:[%s0 + $0x178] sm:$0xff]
  %v63 = vld [vmem:[%s0 + $0x180] sm:$0xff]
  %v64 = vld [vmem:[%s0 + $0x188] sm:$0xff]
  %v65 = vld [vmem:[%s0 + $0x190] sm:$0xff]
  %v66 = vld [vmem:[%s0 + $0x198] sm:$0xff]
  %v67 = vld [vmem:[%s0 + $0x1a0] sm:$0xff]
  %v68 = vld [vmem:[%s0 + $0x1a8] sm:$0xff]
  %v69 = vld [vmem:[%s0 + $0x1b0] sm:$0xff]
  %v70 = vld [vmem:[%s0 + $0x1b8] sm:$0xff]
  %v71 = vld [vmem:[%s0 + $0x1c0] sm:$0xff]
  %v72 = vld [vmem:[%s0 + $0x1c8] sm:$0xff]
  %v73 = vld [vmem:[%s0 + $0x1d0] sm:$0xff]
  %v74 = vld [vmem:[%s0 + $0x1d8] sm:$0xff]
  %v75 = vld [vmem:[%s0 + $0x1e0] sm:$0xff]
  %v76 = vld [vmem:[%s0 + $0x1e8] sm:$0xff]
  %v77 = vld [vmem:[%s0 + $0x1f0] sm:$0xff]
  %v78 = vld [vmem:[%s0 + $0x1f8] sm:$0xff]
  %v79 = vld [vmem:[%s0 + $0x200] sm:$0xff]
  %v80 = vld [vmem:[%s0 + $0x208] sm:$0xff]
  %v81 = vld [vmem:[%s0 + $0x210] sm:$0xff]
  %v82 = vld [vmem:[%s0 + $0x218] sm:$0xff]
  %v83 = vld [vmem:[%s0 + $0x220] sm:$0xff]
  %v84 = vld [vmem:[%s0 + $0x228] sm:$0xff]
  %v85 = vld [vmem:[%s0 + $0x230] sm:$0xff]
  %v86 = vld [vmem:[%s0 + $0x238] sm:$0xff]
  %v87 = vld [vmem:[%s0 + $0x240] sm:$0xff]
  %v88 = vld [vmem:[%s0 + $0x248] sm:$0xff]
  %v89 = vld [vmem:[%s0 + $0x250] sm:$0xff]
  %v90 = vld [vmem:[%s0 + $0x258] sm:$0xff]
  %v91 = vld [vmem:[%s0 + $0x260] sm:$0xff]
  %v92 = vld [vmem:[%s0 + $0x268] sm:$0xff]
  %v93 = vld [vmem:[%s0 + $0x270] sm:$0xff]
  %v94 = vld [vmem:[%s0 + $0x278] sm:$0xff]
  %v95 = vld [vmem:[%s0 + $0x280] sm:$0x3]
  %v96 = vld [vmem:[%s0 + $0x288] sm:$0x3]
  %v97 = vld [vmem:[%s0 + $0x290] sm:$0x3]
  %v98 = vld [vmem:[%s0 + $0x298] sm:$0x3]
  %v99 = vpack.c.bf16 %v19, %v15
  %v100 = vpack.c.bf16 %v20, %v16
  %v101 = vpack.c.bf16 %v21, %v17
  %v102 = vpack.c.bf16 %v22, %v18
  %v103 = vpack.c.bf16 %v27, %v23
  %v104 = vpack.c.bf16 %v28, %v24
  %v105 = vpack.c.bf16 %v29, %v25
  %v106 = vpack.c.bf16 %v30, %v26
  %v107 = vpack.c.bf16 %v35, %v31
  %v108 = vpack.c.bf16 %v36, %v32
  %v109 = vpack.c.bf16 %v37, %v33
  %v110 = vpack.c.bf16 %v38, %v34
  %v111 = vpack.c.bf16 %v43, %v39
  %v112 = vpack.c.bf16 %v44, %v40
  %v113 = vpack.c.bf16 %v45, %v41
  %v114 = vpack.c.bf16 %v46, %v42
  %v115 = vpack.c.bf16 %v51, %v47
  %v116 = vpack.c.bf16 %v52, %v48
  %v117 = vpack.c.bf16 %v53, %v49
  %v118 = vpack.c.bf16 %v54, %v50
  %v119 = vpack.c.bf16 %v59, %v55
  %v120 = vpack.c.bf16 %v60, %v56
  %v121 = vpack.c.bf16 %v61, %v57
  %v122 = vpack.c.bf16 %v62, %v58
  %v123 = vpack.c.bf16 %v67, %v63
  %v124 = vpack.c.bf16 %v68, %v64
  %v125 = vpack.c.bf16 %v69, %v65
  %v126 = vpack.c.bf16 %v70, %v66
  %v127 = vpack.c.bf16 %v75, %v71
  %v128 = vpack.c.bf16 %v76, %v72
  %v129 = vpack.c.bf16 %v77, %v73
  %v130 = vpack.c.bf16 %v78, %v74
  %v131 = vpack.c.bf16 %v83, %v79
  %v132 = vpack.c.bf16 %v84, %v80
  %v133 = vpack.c.bf16 %v85, %v81
  %v134 = vpack.c.bf16 %v86, %v82
  %v135 = vpack.c.bf16 %v91, %v87
  %v136 = vpack.c.bf16 %v92, %v88
  %v137 = vpack.c.bf16 %v93, %v89
  %v138 = vpack.c.bf16 %v94, %v90
  %v139 = vpack.c.bf16 %v95, %v95
  %v140 = vpack.c.bf16 %v96, %v96
  %v141 = vpack.c.bf16 %v97, %v97
  %v142 = vpack.c.bf16 %v98, %v98
  %v143 = vld [vmem:[%s1] sm:$0xff]
  %v144 = vld [vmem:[%s1 + $0x8] sm:$0xff]
  %v145 = vld [vmem:[%s1 + $0x10] sm:$0xff]
  %v146 = vld [vmem:[%s1 + $0x18] sm:$0xff]
  %v147 = vld [vmem:[%s1 + $0x20] sm:$0xff]
  %v148 = vld [vmem:[%s1 + $0x28] sm:$0xff]
  %v149 = vld [vmem:[%s1 + $0x30] sm:$0xff]
  %v150 = vld [vmem:[%s1 + $0x38] sm:$0xff]
  %v151 = vld [vmem:[%s1 + $0x40] sm:$0xff]
  %v152 = vld [vmem:[%s1 + $0x48] sm:$0xff]
  %v153 = vld [vmem:[%s1 + $0x50] sm:$0xff]
  %v154 = vld [vmem:[%s1 + $0x58] sm:$0xff]
  %v155 = vld [vmem:[%s1 + $0x60] sm:$0xff]
  %v156 = vld [vmem:[%s1 + $0x68] sm:$0xff]
  %v157 = vld [vmem:[%s1 + $0x70] sm:$0xff]
  %v158 = vld [vmem:[%s1 + $0x78] sm:$0xff]
  %v159 = vld [vmem:[%s2] sm:$0x1]
  %v161 = vlaneseq
  %v162 = vshrl.u32 %v161, 7
  %v163 = vsub.s32 0, %v162
  %v164 = vrot.slane %v159, %v163
  %v182 = vunpack.c.l.b16 %v143
  %v183 = vunpack.c.h.b16 %v143
  %v184 = vunpack.c.l.b16 %v144
  %v185 = vunpack.c.h.b16 %v144
  %v186 = vunpack.c.l.b16 %v145
  %v187 = vunpack.c.h.b16 %v145
  %v188 = vunpack.c.l.b16 %v146
  %v189 = vunpack.c.h.b16 %v146
  %v190 = vunpack.c.l.b16 %v147
  %v191 = vunpack.c.h.b16 %v147
  %v192 = vunpack.c.l.b16 %v148
  %v193 = vunpack.c.h.b16 %v148
  %v194 = vunpack.c.l.b16 %v149
  %v195 = vunpack.c.h.b16 %v149
  %v196 = vunpack.c.l.b16 %v150
  %v197 = vunpack.c.h.b16 %v150
  %v198 = vunpack.c.l.b16 %v151
  %v199 = vunpack.c.h.b16 %v151
  %v200 = vunpack.c.l.b16 %v152
  %v201 = vunpack.c.h.b16 %v152
  %v202 = vunpack.c.l.b16 %v153
  %v203 = vunpack.c.h.b16 %v153
  %v204 = vunpack.c.l.b16 %v154
  %v205 = vunpack.c.h.b16 %v154
  %v206 = vunpack.c.l.b16 %v155
  %v207 = vunpack.c.h.b16 %v155
  %v208 = vunpack.c.l.b16 %v156
  %v209 = vunpack.c.h.b16 %v156
  %v210 = vunpack.c.l.b16 %v157
  %v211 = vunpack.c.h.b16 %v157
  %v212 = vunpack.c.l.b16 %v158
  %v213 = vunpack.c.h.b16 %v158
  %v214 = vpack.c.b16 %v186, %v182
  %v215 = vpack.c.b16 %v187, %v183
  %v216 = vpack.c.b16 %v188, %v184
  %v217 = vpack.c.b16 %v189, %v185
  %v218 = vpack.c.b16 %v194, %v190
  %v219 = vpack.c.b16 %v195, %v191
  %v220 = vpack.c.b16 %v196, %v192
  %v221 = vpack.c.b16 %v197, %v193
  %v222 = vpack.c.b16 %v202, %v198
  %v223 = vpack.c.b16 %v203, %v199
  %v224 = vpack.c.b16 %v204, %v200
  %v225 = vpack.c.b16 %v205, %v201
  %v226 = vpack.c.b16 %v210, %v206
  %v227 = vpack.c.b16 %v211, %v207
  %v228 = vpack.c.b16 %v212, %v208
  %v229 = vpack.c.b16 %v213, %v209
  %246 = vmatprep.subr.bf16.mxu0 0
  %247 = vmatpush1.bf16.xpose.msra.mxu0 0
  %248 = vmatprep.subr.bf16.mxu0 0
  %249 = vmatpush1.bf16.xpose.msra.mxu0 0
  %250 = vmatprep.subr.bf16.mxu0 0
  %251 = vmatpush1.bf16.xpose.msra.mxu0 0
  %252 = vmatprep.subr.bf16.mxu0 0
  %253 = vmatpush1.bf16.xpose.msra.mxu0 0
  %254 = vmatprep.subr.bf16.mxu0 %v227
  %255 = vmatpush1.bf16.xpose.msra.mxu0 %v226
  %256 = vmatprep.subr.bf16.mxu0 %v223
  %257 = vmatpush1.bf16.xpose.msra.mxu0 %v222
  %258 = vmatprep.subr.bf16.mxu0 %v219
  %259 = vmatpush1.bf16.xpose.msra.mxu0 %v218
  %260 = vmatprep.subr.bf16.mxu0 %v215
  %261 = vmatpush1.bf16.xpose.msra.mxu0 %v214
  %262 = vmatprep.subr.bf16.mxu0 0
  %263 = vmatpush2.bf16.xpose.msra.mxu0 0
  %264 = vmatprep.subr.bf16.mxu0 0
  %265 = vmatpush2.bf16.xpose.msra.mxu0 0
  %266 = vmatprep.subr.bf16.mxu0 0
  %267 = vmatpush2.bf16.xpose.msra.mxu0 0
  %268 = vmatprep.subr.bf16.mxu0 0
  %269 = vmatpush2.bf16.xpose.msra.mxu0 0
  %270 = vmatprep.subr.bf16.mxu0 0
  %271 = vmatpush2.bf16.xpose.msra.mxu0 0
  %272 = vmatprep.subr.bf16.mxu0 0
  %273 = vmatpush2.bf16.xpose.msra.mxu0 0
  %274 = vmatprep.subr.bf16.mxu0 0
  %275 = vmatpush2.bf16.xpose.msra.mxu0 0
  %276 = vmatprep.subr.bf16.mxu0 0
  %277 = vmatpush2.bf16.xpose.msra.mxu0 0
  %278 = vmatprep.mubr.bf16.mxu0 %v100
  %279 = vmatmul.mubr.bf16.gmra.mxu0 %v99
  %v280 = vpop.f32.mrf.mxu0
  %v281 = vadd.f32 %v164, %v280
  %v282 = vpop.f32.mrf.mxu0
  %v283 = vpop.f32.mrf.mxu0
  %v284 = vadd.f32 %v164, %v283
  %v285 = vpop.f32.mrf.mxu0
  %286 = vmatprep.mubr.bf16.mxu0 %v104
  %287 = vmatmul.mubr.bf16.gmra.mxu0 %v103
  %v288 = vpop.f32.mrf.mxu0
  %v289 = vadd.f32 %v164, %v288
  %v290 = vpop.f32.mrf.mxu0
  %v291 = vpop.f32.mrf.mxu0
  %v292 = vadd.f32 %v164, %v291
  %v293 = vpop.f32.mrf.mxu0
  %294 = vmatprep.mubr.bf16.mxu0 %v108
  %295 = vmatmul.mubr.bf16.gmra.mxu0 %v107
  %v296 = vpop.f32.mrf.mxu0
  %v297 = vadd.f32 %v164, %v296
  %v298 = vpop.f32.mrf.mxu0
  %v299 = vpop.f32.mrf.mxu0
  %v300 = vadd.f32 %v164, %v299
  %v301 = vpop.f32.mrf.mxu0
  %302 = vmatprep.mubr.bf16.mxu0 %v112
  %303 = vmatmul.mubr.bf16.gmra.mxu0 %v111
  %v304 = vpop.f32.mrf.mxu0
  %v305 = vadd.f32 %v164, %v304
  %v306 = vpop.f32.mrf.mxu0
  %v307 = vpop.f32.mrf.mxu0
  %v308 = vadd.f32 %v164, %v307
  %v309 = vpop.f32.mrf.mxu0
  %310 = vmatprep.mubr.bf16.mxu0 %v116
  %311 = vmatmul.mubr.bf16.gmra.mxu0 %v115
  %v312 = vpop.f32.mrf.mxu0
  %v313 = vadd.f32 %v164, %v312
  %v314 = vpop.f32.mrf.mxu0
  %v315 = vpop.f32.mrf.mxu0
  %v316 = vadd.f32 %v164, %v315
  %v317 = vpop.f32.mrf.mxu0
  %318 = vmatprep.mubr.bf16.mxu0 %v120
  %319 = vmatmul.mubr.bf16.gmra.mxu0 %v119
  %v320 = vpop.f32.mrf.mxu0
  %v321 = vadd.f32 %v164, %v320
  %v322 = vpop.f32.mrf.mxu0
  %v323 = vpop.f32.mrf.mxu0
  %v324 = vadd.f32 %v164, %v323
  %v325 = vpop.f32.mrf.mxu0
  %326 = vmatprep.mubr.bf16.mxu0 %v124
  %327 = vmatmul.mubr.bf16.gmra.mxu0 %v123
  %v328 = vpop.f32.mrf.mxu0
  %v329 = vadd.f32 %v164, %v328
  %v330 = vpop.f32.mrf.mxu0
  %v331 = vpop.f32.mrf.mxu0
  %v332 = vadd.f32 %v164, %v331
  %v333 = vpop.f32.mrf.mxu0
  %334 = vmatprep.mubr.bf16.mxu0 %v128
  %335 = vmatmul.mubr.bf16.gmra.mxu0 %v127
  %v336 = vpop.f32.mrf.mxu0
  %v337 = vadd.f32 %v164, %v336
  %v338 = vpop.f32.mrf.mxu0
  %v339 = vpop.f32.mrf.mxu0
  %v340 = vadd.f32 %v164, %v339
  %v341 = vpop.f32.mrf.mxu0
  %342 = vmatprep.mubr.bf16.mxu0 %v132
  %343 = vmatmul.mubr.bf16.gmra.mxu0 %v131
  %v344 = vpop.f32.mrf.mxu0
  %v345 = vadd.f32 %v164, %v344
  %v346 = vpop.f32.mrf.mxu0
  %v347 = vpop.f32.mrf.mxu0
  %v348 = vadd.f32 %v164, %v347
  %v349 = vpop.f32.mrf.mxu0
  %350 = vmatprep.mubr.bf16.mxu0 %v136
  %351 = vmatmul.mubr.bf16.gmra.mxu0 %v135
  %v352 = vpop.f32.mrf.mxu0
  %v353 = vadd.f32 %v164, %v352
  %v354 = vpop.f32.mrf.mxu0
  %v355 = vpop.f32.mrf.mxu0
  %v356 = vadd.f32 %v164, %v355
  %v357 = vpop.f32.mrf.mxu0
  %358 = vmatprep.mubr.bf16.mxu0 %v140
  %359 = vmatmul.mubr.bf16.gmra.mxu0 %v139
  %v360 = vpop.f32.mrf.mxu0
  %v361 = vadd.f32 %v164, %v360
  %v362 = vpop.f32.mrf.mxu0
  %v363 = vpop.f32.mrf.mxu0
  %v364 = vpop.f32.mrf.mxu0
  %365 = vdwg.mxu0
  %366 = vmatprep.subr.bf16.mxu0 0
  %367 = vmatpush1.bf16.xpose.msra.mxu0 0
  %368 = vmatprep.subr.bf16.mxu0 0
  %369 = vmatpush1.bf16.xpose.msra.mxu0 0
  %370 = vmatprep.subr.bf16.mxu0 0
  %371 = vmatpush1.bf16.xpose.msra.mxu0 0
  %372 = vmatprep.subr.bf16.mxu0 0
  %373 = vmatpush1.bf16.xpose.msra.mxu0 0
  %374 = vmatprep.subr.bf16.mxu0 %v229
  %375 = vmatpush1.bf16.xpose.msra.mxu0 %v228
  %376 = vmatprep.subr.bf16.mxu0 %v225
  %377 = vmatpush1.bf16.xpose.msra.mxu0 %v224
  %378 = vmatprep.subr.bf16.mxu0 %v221
  %379 = vmatpush1.bf16.xpose.msra.mxu0 %v220
  %380 = vmatprep.subr.bf16.mxu0 %v217
  %381 = vmatpush1.bf16.xpose.msra.mxu0 %v216
  %382 = vmatprep.subr.bf16.mxu0 0
  %383 = vmatpush2.bf16.xpose.msra.mxu0 0
  %384 = vmatprep.subr.bf16.mxu0 0
  %385 = vmatpush2.bf16.xpose.msra.mxu0 0
  %386 = vmatprep.subr.bf16.mxu0 0
  %387 = vmatpush2.bf16.xpose.msra.mxu0 0
  %388 = vmatprep.subr.bf16.mxu0 0
  %389 = vmatpush2.bf16.xpose.msra.mxu0 0
  %390 = vmatprep.subr.bf16.mxu0 0
  %391 = vmatpush2.bf16.xpose.msra.mxu0 0
  %392 = vmatprep.subr.bf16.mxu0 0
  %393 = vmatpush2.bf16.xpose.msra.mxu0 0
  %394 = vmatprep.subr.bf16.mxu0 0
  %395 = vmatpush2.bf16.xpose.msra.mxu0 0
  %396 = vmatprep.subr.bf16.mxu0 0
  %397 = vmatpush2.bf16.xpose.msra.mxu0 0
  %398 = vmatprep.mubr.bf16.mxu0 %v102
  %399 = vmatmul.mubr.bf16.gmra.mxu0 %v101
  %v400 = vpop.f32.mrf.mxu0
  %v401 = vadd.f32 %v281, %v400
  %v402 = vpop.f32.mrf.mxu0
  %v403 = vpop.f32.mrf.mxu0
  %v404 = vadd.f32 %v284, %v403
  %v405 = vpop.f32.mrf.mxu0
  %406 = vmatprep.mubr.bf16.mxu0 %v106
  %407 = vmatmul.mubr.bf16.gmra.mxu0 %v105
  %v408 = vpop.f32.mrf.mxu0
  %v409 = vadd.f32 %v289, %v408
  %v410 = vpop.f32.mrf.mxu0
  %v411 = vpop.f32.mrf.mxu0
  %v412 = vadd.f32 %v292, %v411
  %v413 = vpop.f32.mrf.mxu0
  %414 = vmatprep.mubr.bf16.mxu0 %v110
  %415 = vmatmul.mubr.bf16.gmra.mxu0 %v109
  %v416 = vpop.f32.mrf.mxu0
  %v417 = vadd.f32 %v297, %v416
  %v418 = vpop.f32.mrf.mxu0
  %v419 = vpop.f32.mrf.mxu0
  %v420 = vadd.f32 %v300, %v419
  %v421 = vpop.f32.mrf.mxu0
  %422 = vmatprep.mubr.bf16.mxu0 %v114
  %423 = vmatmul.mubr.bf16.gmra.mxu0 %v113
  %v424 = vpop.f32.mrf.mxu0
  %v425 = vadd.f32 %v305, %v424
  %v426 = vpop.f32.mrf.mxu0
  %v427 = vpop.f32.mrf.mxu0
  %v428 = vadd.f32 %v308, %v427
  %v429 = vpop.f32.mrf.mxu0
  %430 = vmatprep.mubr.bf16.mxu0 %v118
  %431 = vmatmul.mubr.bf16.gmra.mxu0 %v117
  %v432 = vpop.f32.mrf.mxu0
  %v433 = vadd.f32 %v313, %v432
  %v434 = vpop.f32.mrf.mxu0
  %v435 = vpop.f32.mrf.mxu0
  %v436 = vadd.f32 %v316, %v435
  %v437 = vpop.f32.mrf.mxu0
  %438 = vmatprep.mubr.bf16.mxu0 %v122
  %439 = vmatmul.mubr.bf16.gmra.mxu0 %v121
  %v440 = vpop.f32.mrf.mxu0
  %v441 = vadd.f32 %v321, %v440
  %v442 = vpop.f32.mrf.mxu0
  %v443 = vpop.f32.mrf.mxu0
  %v444 = vadd.f32 %v324, %v443
  %v445 = vpop.f32.mrf.mxu0
  %446 = vmatprep.mubr.bf16.mxu0 %v126
  %447 = vmatmul.mubr.bf16.gmra.mxu0 %v125
  %v448 = vpop.f32.mrf.mxu0
  %v449 = vadd.f32 %v329, %v448
  %v450 = vpop.f32.mrf.mxu0
  %v451 = vpop.f32.mrf.mxu0
  %v452 = vadd.f32 %v332, %v451
  %v453 = vpop.f32.mrf.mxu0
  %454 = vmatprep.mubr.bf16.mxu0 %v130
  %455 = vmatmul.mubr.bf16.gmra.mxu0 %v129
  %v456 = vpop.f32.mrf.mxu0
  %v457 = vadd.f32 %v337, %v456
  %v458 = vpop.f32.mrf.mxu0
  %v459 = vpop.f32.mrf.mxu0
  %v460 = vadd.f32 %v340, %v459
  %v461 = vpop.f32.mrf.mxu0
  %462 = vmatprep.mubr.bf16.mxu0 %v134
  %463 = vmatmul.mubr.bf16.gmra.mxu0 %v133
  %v464 = vpop.f32.mrf.mxu0
  %v465 = vadd.f32 %v345, %v464
  %v466 = vpop.f32.mrf.mxu0
  %v467 = vpop.f32.mrf.mxu0
  %v468 = vadd.f32 %v348, %v467
  %v469 = vpop.f32.mrf.mxu0
  %470 = vmatprep.mubr.bf16.mxu0 %v138
  %471 = vmatmul.mubr.bf16.gmra.mxu0 %v137
  %v472 = vpop.f32.mrf.mxu0
  %v473 = vadd.f32 %v353, %v472
  %v474 = vpop.f32.mrf.mxu0
  %v475 = vpop.f32.mrf.mxu0
  %v476 = vadd.f32 %v356, %v475
  %v477 = vpop.f32.mrf.mxu0
  %478 = vmatprep.mubr.bf16.mxu0 %v142
  %479 = vmatmul.mubr.bf16.gmra.mxu0 %v141
  %v480 = vpop.f32.mrf.mxu0
  %v481 = vadd.f32 %v361, %v480
  %v482 = vpop.f32.mrf.mxu0
  %v483 = vpop.f32.mrf.mxu0
  %v484 = vpop.f32.mrf.mxu0
  %485 = vdwg.mxu0
  %v486 = vmax.f32 %v401, 0.0
  %v487 = vmax.f32 %v404, 0.0
  %v488 = vmax.f32 %v409, 0.0
  %v489 = vmax.f32 %v412, 0.0
  %v490 = vmax.f32 %v417, 0.0
  %v491 = vmax.f32 %v420, 0.0
  %v492 = vmax.f32 %v425, 0.0
  %v493 = vmax.f32 %v428, 0.0
  %v494 = vmax.f32 %v433, 0.0
  %v495 = vmax.f32 %v436, 0.0
  %v496 = vmax.f32 %v441, 0.0
  %v497 = vmax.f32 %v444, 0.0
  %v498 = vmax.f32 %v449, 0.0
  %v499 = vmax.f32 %v452, 0.0
  %v500 = vmax.f32 %v457, 0.0
  %v501 = vmax.f32 %v460, 0.0
  %v502 = vmax.f32 %v465, 0.0
  %v503 = vmax.f32 %v468, 0.0
  %v504 = vmax.f32 %v473, 0.0
  %v505 = vmax.f32 %v476, 0.0
  %v506 = vmax.f32 %v481, 0.0
  %vm507 = vcmask 523264
  %508 = vst.msk [vmem:[%s3] sm:$0xff] %vm507, %v486
  %509 = vst.msk [vmem:[%s3 + $0x8] sm:$0xff] %vm507, %v487
  %510 = vst.msk [vmem:[%s3 + $0x10] sm:$0xff] %vm507, %v488
  %511 = vst.msk [vmem:[%s3 + $0x18] sm:$0xff] %vm507, %v489
  %512 = vst.msk [vmem:[%s3 + $0x20] sm:$0xff] %vm507, %v490
  %513 = vst.msk [vmem:[%s3 + $0x28] sm:$0xff] %vm507, %v491
  %514 = vst.msk [vmem:[%s3 + $0x30] sm:$0xff] %vm507, %v492
  %515 = vst.msk [vmem:[%s3 + $0x38] sm:$0xff] %vm507, %v493
  %516 = vst.msk [vmem:[%s3 + $0x40] sm:$0xff] %vm507, %v494
  %517 = vst.msk [vmem:[%s3 + $0x48] sm:$0xff] %vm507, %v495
  %518 = vst.msk [vmem:[%s3 + $0x50] sm:$0xff] %vm507, %v496
  %519 = vst.msk [vmem:[%s3 + $0x58] sm:$0xff] %vm507, %v497
  %520 = vst.msk [vmem:[%s3 + $0x60] sm:$0xff] %vm507, %v498
  %521 = vst.msk [vmem:[%s3 + $0x68] sm:$0xff] %vm507, %v499
  %522 = vst.msk [vmem:[%s3 + $0x70] sm:$0xff] %vm507, %v500
  %523 = vst.msk [vmem:[%s3 + $0x78] sm:$0xff] %vm507, %v501
  %524 = vst.msk [vmem:[%s3 + $0x80] sm:$0xff] %vm507, %v502
  %525 = vst.msk [vmem:[%s3 + $0x88] sm:$0xff] %vm507, %v503
  %526 = vst.msk [vmem:[%s3 + $0x90] sm:$0xff] %vm507, %v504
  %527 = vst.msk [vmem:[%s3 + $0x98] sm:$0xff] %vm507, %v505
  %vm528 = vcmask 517120
  %529 = vst.msk [vmem:[%s3 + $0xa0] sm:$0x3] %vm528, %v506
  // Predicated region
  $region14: #{noisy_net_forward.7} parent=0 // pred_check
    _
  $region15: #{noisy_net_forward.7} parent=0 // pred_check_branch
    %531 = sbr.rel (0) target = $region17
  $region16: #{noisy_net_forward.7} parent=0 // pred_region
    _
  $region17: #{noisy_net_forward.7} parent=0 // pred_fallthru
    _
  // Predicated region
  $region18: #{noisy_net_forward.7} parent=0 // pred_check
    _
  $region19: #{noisy_net_forward.7} parent=0 // pred_check_branch
    %533 = sbr.rel (0) target = $region21
  $region20: #{noisy_net_forward.7} parent=0 // pred_region
    _
  $region21: #{noisy_net_forward.7} parent=0 // pred_fallthru
    _

// kernel: noisy_net_forward.8
$region0: #{noisy_net_forward.8}
  #allocation0 [shape = 'u32[]', space=smem, size = 0x4, offset = 0x4, fixed_abs, tag = 'smem constant byte address 0x4 - core index']
  #allocation1 [shape = 'u32[144,128]{1,0:T(1,128)}', space=vmem, size = 0x12000, scoped, tag = 'internal scratch']
  %s0 = inlined_call_operand.vmem [shape: f32[98,576], index: 0, kind: input, shape index: {}]
  %s1 = inlined_call_operand.vmem [shape: bf16[64,576], index: 1, kind: input, shape index: {}]
  %s2 = inlined_call_operand.vmem [shape: f32[1,64], index: 2, kind: input, shape index: {}]
  %s3 = inlined_call_operand.vmem [shape: f32[98,64], index: 3, kind: output, shape index: {}]
  %s4 = sld [smem:[#allocation0]]
  $region22: #{noisy_net_forward.8} parent=0
    _
  %s6 = ssub.s32 1, %s4
  %s7 = scalar_select 0, %s6, %s4
  // Predicated region
  $region2: #{noisy_net_forward.8} parent=0 // pred_check
    _
  $region3: #{noisy_net_forward.8} parent=0 // pred_check_branch
    %9 = sbr.rel (0) target = $region5
  $region4: #{noisy_net_forward.8} parent=0 // pred_region
    _
  $region5: #{noisy_net_forward.8} parent=0 // pred_fallthru
    _
  // Predicated region
  $region6: #{noisy_net_forward.8} parent=0 // pred_check
    _
  $region7: #{noisy_net_forward.8} parent=0 // pred_check_branch
    %11 = sbr.rel (0) target = $region9
  $region8: #{noisy_net_forward.8} parent=0 // pred_region
    _
  $region9: #{noisy_net_forward.8} parent=0 // pred_fallthru
    _
  // Predicated region
  $region10: #{noisy_net_forward.8} parent=0 // pred_check
    _
  $region11: #{noisy_net_forward.8} parent=0 // pred_check_branch
    %13 = sbr.rel (0) target = $region13
  $region12: #{noisy_net_forward.8} parent=0 // pred_region
    _
  $region13: #{noisy_net_forward.8} parent=0 // pred_fallthru
    _
  %v15 = vld [vmem:[%s0] sm:$0xff]
  %v16 = vld [vmem:[%s0 + $0x8] sm:$0xff]
  %v17 = vld [vmem:[%s0 + $0x10] sm:$0xff]
  %v18 = vld [vmem:[%s0 + $0x18] sm:$0xff]
  %v19 = vld [vmem:[%s0 + $0x20] sm:$0xff]
  %v20 = vld [vmem:[%s0 + $0x28] sm:$0xff]
  %v21 = vld [vmem:[%s0 + $0x30] sm:$0xff]
  %v22 = vld [vmem:[%s0 + $0x38] sm:$0xff]
  %v23 = vld [vmem:[%s0 + $0x40] sm:$0xff]
  %v24 = vld [vmem:[%s0 + $0x48] sm:$0xff]
  %v25 = vld [vmem:[%s0 + $0x50] sm:$0xff]
  %v26 = vld [vmem:[%s0 + $0x58] sm:$0xff]
  %v27 = vld [vmem:[%s0 + $0x60] sm:$0xff]
  %v28 = vld [vmem:[%s0 + $0x68] sm:$0xff]
  %v29 = vld [vmem:[%s0 + $0x70] sm:$0xff]
  %v30 = vld [vmem:[%s0 + $0x78] sm:$0xff]
  %v31 = vld [vmem:[%s0 + $0x80] sm:$0xff]
  %v32 = vld [vmem:[%s0 + $0x88] sm:$0xff]
  %v33 = vld [vmem:[%s0 + $0x90] sm:$0xff]
  %v34 = vld [vmem:[%s0 + $0x98] sm:$0xff]
  %v35 = vld [vmem:[%s0 + $0xa0] sm:$0xff]
  %v36 = vld [vmem:[%s0 + $0xa8] sm:$0xff]
  %v37 = vld [vmem:[%s0 + $0xb0] sm:$0xff]
  %v38 = vld [vmem:[%s0 + $0xb8] sm:$0xff]
  %v39 = vld [vmem:[%s0 + $0xc0] sm:$0xff]
  %v40 = vld [vmem:[%s0 + $0xc8] sm:$0xff]
  %v41 = vld [vmem:[%s0 + $0xd0] sm:$0xff]
  %v42 = vld [vmem:[%s0 + $0xd8] sm:$0xff]
  %v43 = vld [vmem:[%s0 + $0xe0] sm:$0xff]
  %v44 = vld [vmem:[%s0 + $0xe8] sm:$0xff]
  %v45 = vld [vmem:[%s0 + $0xf0] sm:$0xff]
  %v46 = vld [vmem:[%s0 + $0xf8] sm:$0xff]
  %v47 = vld [vmem:[%s0 + $0x100] sm:$0xff]
  %v48 = vld [vmem:[%s0 + $0x108] sm:$0xff]
  %v49 = vld [vmem:[%s0 + $0x110] sm:$0xff]
  %v50 = vld [vmem:[%s0 + $0x118] sm:$0xff]
  %v51 = vld [vmem:[%s0 + $0x120] sm:$0xff]
  %v52 = vld [vmem:[%s0 + $0x128] sm:$0xff]
  %v53 = vld [vmem:[%s0 + $0x130] sm:$0xff]
  %v54 = vld [vmem:[%s0 + $0x138] sm:$0xff]
  %v55 = vld [vmem:[%s0 + $0x140] sm:$0xff]
  %v56 = vld [vmem:[%s0 + $0x148] sm:$0xff]
  %v57 = vld [vmem:[%s0 + $0x150] sm:$0xff]
  %v58 = vld [vmem:[%s0 + $0x158] sm:$0xff]
  %v59 = vld [vmem:[%s0 + $0x160] sm:$0xff]
  %v60 = vld [vmem:[%s0 + $0x168] sm:$0xff]
  %v61 = vld [vmem:[%s0 + $0x170] sm:$0xff]
  %v62 = vld [vmem:[%s0 + $0x178] sm:$0xff]
  %v63 = vld [vmem:[%s0 + $0x180] sm:$0xff]
  %v64 = vld [vmem:[%s0 + $0x188] sm:$0xff]
  %v65 = vld [vmem:[%s0 + $0x190] sm:$0xff]
  %v66 = vld [vmem:[%s0 + $0x198] sm:$0xff]
  %v67 = vld [vmem:[%s0 + $0x1a0] sm:$0xff]
  %v68 = vld [vmem:[%s0 + $0x1a8] sm:$0xff]
  %v69 = vld [vmem:[%s0 + $0x1b0] sm:$0xff]
  %v70 = vld [vmem:[%s0 + $0x1b8] sm:$0xff]
  %v71 = vld [vmem:[%s0 + $0x1c0] sm:$0xff]
  %v72 = vld [vmem:[%s0 + $0x1c8] sm:$0xff]
  %v73 = vld [vmem:[%s0 + $0x1d0] sm:$0xff]
  %v74 = vld [vmem:[%s0 + $0x1d8] sm:$0xff]
  %v75 = vld [vmem:[%s0 + $0x1e0] sm:$0x3]
  %v76 = vld [vmem:[%s0 + $0x1e8] sm:$0x3]
  %v77 = vld [vmem:[%s0 + $0x1f0] sm:$0x3]
  %v78 = vld [vmem:[%s0 + $0x1f8] sm:$0x3]
  %v79 = vld [vmem:[%s0 + $0x200] sm:$0x3]
  %v80 = vpack.c.bf16 %v20, %v15
  %v81 = vpack.c.bf16 %v21, %v16
  %v82 = vpack.c.bf16 %v22, %v17
  %v83 = vpack.c.bf16 %v23, %v18
  %v84 = vpack.c.bf16 %v24, %v19
  %v85 = vpack.c.bf16 %v30, %v25
  %v86 = vpack.c.bf16 %v31, %v26
  %v87 = vpack.c.bf16 %v32, %v27
  %v88 = vpack.c.bf16 %v33, %v28
  %v89 = vpack.c.bf16 %v34, %v29
  %v90 = vpack.c.bf16 %v40, %v35
  %v91 = vpack.c.bf16 %v41, %v36
  %v92 = vpack.c.bf16 %v42, %v37
  %v93 = vpack.c.bf16 %v43, %v38
  %v94 = vpack.c.bf16 %v44, %v39
  %v95 = vpack.c.bf16 %v50, %v45
  %v96 = vpack.c.bf16 %v51, %v46
  %v97 = vpack.c.bf16 %v52, %v47
  %v98 = vpack.c.bf16 %v53, %v48
  %v99 = vpack.c.bf16 %v54, %v49
  %v100 = vpack.c.bf16 %v60, %v55
  %v101 = vpack.c.bf16 %v61, %v56
  %v102 = vpack.c.bf16 %v62, %v57
  %v103 = vpack.c.bf16 %v63, %v58
  %v104 = vpack.c.bf16 %v64, %v59
  %v105 = vpack.c.bf16 %v70, %v65
  %v106 = vpack.c.bf16 %v71, %v66
  %v107 = vpack.c.bf16 %v72, %v67
  %v108 = vpack.c.bf16 %v73, %v68
  %v109 = vpack.c.bf16 %v74, %v69
  %v110 = vpack.c.bf16 %v75, %v75
  %v111 = vpack.c.bf16 %v76, %v76
  %v112 = vpack.c.bf16 %v77, %v77
  %v113 = vpack.c.bf16 %v78, %v78
  %v114 = vpack.c.bf16 %v79, %v79
  %v115 = vld [vmem:[%s1] sm:$0xff]
  %v116 = vld [vmem:[%s1 + $0x8] sm:$0xff]
  %v117 = vld [vmem:[%s1 + $0x10] sm:$0xf]
  %v118 = vld [vmem:[%s1 + $0x14] sm:$0xff]
  %v119 = vld [vmem:[%s1 + $0x1c] sm:$0xff]
  %v120 = vld [vmem:[%s1 + $0x24] sm:$0xf]
  %v121 = vld [vmem:[%s1 + $0x28] sm:$0xff]
  %v122 = vld [vmem:[%s1 + $0x30] sm:$0xff]
  %v123 = vld [vmem:[%s1 + $0x38] sm:$0xf]
  %v124 = vld [vmem:[%s1 + $0x3c] sm:$0xff]
  %v125 = vld [vmem:[%s1 + $0x44] sm:$0xff]
  %v126 = vld [vmem:[%s1 + $0x4c] sm:$0xf]
  %v127 = vld [vmem:[%s1 + $0x50] sm:$0xff]
  %v128 = vld [vmem:[%s1 + $0x58] sm:$0xff]
  %v129 = vld [vmem:[%s1 + $0x60] sm:$0xf]
  %v130 = vld [vmem:[%s1 + $0x64] sm:$0xff]
  %v131 = vld [vmem:[%s1 + $0x6c] sm:$0xff]
  %v132 = vld [vmem:[%s1 + $0x74] sm:$0xf]
  %v133 = vld [vmem:[%s1 + $0x78] sm:$0xff]
  %v134 = vld [vmem:[%s1 + $0x80] sm:$0xff]
  %v135 = vld [vmem:[%s1 + $0x88] sm:$0xf]
  %v136 = vld [vmem:[%s1 + $0x8c] sm:$0xff]
  %v137 = vld [vmem:[%s1 + $0x94] sm:$0xff]
  %v138 = vld [vmem:[%s1 + $0x9c] sm:$0xf]
  %v139 = vld [vmem:[%s2] sm:$0x1]
  %v141 = vlaneseq
  %v142 = vshrl.u32 %v141, 7
  %v143 = vsub.s32 0, %v142
  %v144 = vrot.slane %v139, %v143
  %v170 = vunpack.c.l.b16 %v115
  %v171 = vunpack.c.h.b16 %v115
  %v172 = vunpack.c.l.b16 %v116
  %v173 = vunpack.c.h.b16 %v116
  %v174 = vunpack.c.l.b16 %v117
  %v175 = vunpack.c.l.b16 %v118
  %v176 = vunpack.c.h.b16 %v118
  %v177 = vunpack.c.l.b16 %v119
  %v178 = vunpack.c.h.b16 %v119
  %v179 = vunpack.c.l.b16 %v120
  %v180 = vunpack.c.l.b16 %v121
  %v181 = vunpack.c.h.b16 %v121
  %v182 = vunpack.c.l.b16 %v122
  %v183 = vunpack.c.h.b16 %v122
  %v184 = vunpack.c.l.b16 %v123
  %v185 = vunpack.c.l.b16 %v124
  %v186 = vunpack.c.h.b16 %v124
  %v187 = vunpack.c.l.b16 %v125
  %v188 = vunpack.c.h.b16 %v125
  %v189 = vunpack.c.l.b16 %v126
  %v190 = vunpack.c.l.b16 %v127
  %v191 = vunpack.c.h.b16 %v127
  %v192 = vunpack.c.l.b16 %v128
  %v193 = vunpack.c.h.b16 %v128
  %v194 = vunpack.c.l.b16 %v129
  %v195 = vunpack.c.l.b16 %v130
  %v196 = vunpack.c.h.b16 %v130
  %v197 = vunpack.c.l.b16 %v131
  %v198 = vunpack.c.h.b16 %v131
  %v199 = vunpack.c.l.b16 %v132
  %v200 = vunpack.c.l.b16 %v133
  %v201 = vunpack.c.h.b16 %v133
  %v202 = vunpack.c.l.b16 %v134
  %v203 = vunpack.c.h.b16 %v134
  %v204 = vunpack.c.l.b16 %v135
  %v205 = vunpack.c.l.b16 %v136
  %v206 = vunpack.c.h.b16 %v136
  %v207 = vunpack.c.l.b16 %v137
  %v208 = vunpack.c.h.b16 %v137
  %v209 = vunpack.c.l.b16 %v138
  %v210 = vpack.c.b16 %v175, %v170
  %v211 = vpack.c.b16 %v176, %v171
  %v212 = vpack.c.b16 %v177, %v172
  %v213 = vpack.c.b16 %v178, %v173
  %v214 = vpack.c.b16 %v179, %v174
  %v215 = vpack.c.b16 %v185, %v180
  %v216 = vpack.c.b16 %v186, %v181
  %v217 = vpack.c.b16 %v187, %v182
  %v218 = vpack.c.b16 %v188, %v183
  %v219 = vpack.c.b16 %v189, %v184
  %v220 = vpack.c.b16 %v195, %v190
  %v221 = vpack.c.b16 %v196, %v191
  %v222 = vpack.c.b16 %v197, %v192
  %v223 = vpack.c.b16 %v198, %v193
  %v224 = vpack.c.b16 %v199, %v194
  %v225 = vpack.c.b16 %v205, %v200
  %v226 = vpack.c.b16 %v206, %v201
  %v227 = vpack.c.b16 %v207, %v202
  %v228 = vpack.c.b16 %v208, %v203
  %v229 = vpack.c.b16 %v209, %v204
  %vm246 = vcmask 523264
  %v248 = vsel %vm246, %v84, 0
  %v251 = vsel %vm246, %v89, 0
  %v254 = vsel %vm246, %v94, 0
  %v257 = vsel %vm246, %v99, 0
  %v260 = vsel %vm246, %v104, 0
  %v263 = vsel %vm246, %v109, 0
  %v266 = vsel %vm246, %v114, 0
  %v269 = vsel %vm246, %v214, 0
  %v272 = vsel %vm246, %v219, 0
  %v275 = vsel %vm246, %v224, 0
  %v278 = vsel %vm246, %v229, 0
  %280 = vmatprep.subr.bf16.mxu0 0
  %281 = vmatpush1.bf16.xpose.msra.mxu0 0
  %282 = vmatprep.subr.bf16.mxu0 0
  %283 = vmatpush1.bf16.xpose.msra.mxu0 0
  %284 = vmatprep.subr.bf16.mxu0 0
  %285 = vmatpush1.bf16.xpose.msra.mxu0 0
  %286 = vmatprep.subr.bf16.mxu0 0
  %287 = vmatpush1.bf16.xpose.msra.mxu0 0
  %288 = vmatprep.subr.bf16.mxu0 %v226
  %289 = vmatpush1.bf16.xpose.msra.mxu0 %v225
  %290 = vmatprep.subr.bf16.mxu0 %v221
  %291 = vmatpush1.bf16.xpose.msra.mxu0 %v220
  %292 = vmatprep.subr.bf16.mxu0 %v216
  %293 = vmatpush1.bf16.xpose.msra.mxu0 %v215
  %294 = vmatprep.subr.bf16.mxu0 %v211
  %295 = vmatpush1.bf16.xpose.msra.mxu0 %v210
  %296 = vmatprep.subr.bf16.mxu0 0
  %297 = vmatpush2.bf16.xpose.msra.mxu0 0
  %298 = vmatprep.subr.bf16.mxu0 0
  %299 = vmatpush2.bf16.xpose.msra.mxu0 0
  %300 = vmatprep.subr.bf16.mxu0 0
  %301 = vmatpush2.bf16.xpose.msra.mxu0 0
  %302 = vmatprep.subr.bf16.mxu0 0
  %303 = vmatpush2.bf16.xpose.msra.mxu0 0
  %304 = vmatprep.subr.bf16.mxu0 0
  %305 = vmatpush2.bf16.xpose.msra.mxu0 0
  %306 = vmatprep.subr.bf16.mxu0 0
  %307 = vmatpush2.bf16.xpose.msra.mxu0 0
  %308 = vmatprep.subr.bf16.mxu0 0
  %309 = vmatpush2.bf16.xpose.msra.mxu0 0
  %310 = vmatprep.subr.bf16.mxu0 0
  %311 = vmatpush2.bf16.xpose.msra.mxu0 0
  %312 = vmatprep.mubr.bf16.mxu0 %v81
  %313 = vmatmul.mubr.bf16.gmra.mxu0 %v80
  %v314 = vpop.f32.mrf.mxu0
  %v315 = vadd.f32 %v144, %v314
  %v316 = vpop.f32.mrf.mxu0
  %v317 = vpop.f32.mrf.mxu0
  %v318 = vadd.f32 %v144, %v317
  %v319 = vpop.f32.mrf.mxu0
  %320 = vmatprep.mubr.bf16.mxu0 %v86
  %321 = vmatmul.mubr.bf16.gmra.mxu0 %v85
  %v322 = vpop.f32.mrf.mxu0
  %v323 = vadd.f32 %v144, %v322
  %v324 = vpop.f32.mrf.mxu0
  %v325 = vpop.f32.mrf.mxu0
  %v326 = vadd.f32 %v144, %v325
  %v327 = vpop.f32.mrf.mxu0
  %328 = vmatprep.mubr.bf16.mxu0 %v91
  %329 = vmatmul.mubr.bf16.gmra.mxu0 %v90
  %v330 = vpop.f32.mrf.mxu0
  %v331 = vadd.f32 %v144, %v330
  %v332 = vpop.f32.mrf.mxu0
  %v333 = vpop.f32.mrf.mxu0
  %v334 = vadd.f32 %v144, %v333
  %v335 = vpop.f32.mrf.mxu0
  %336 = vmatprep.mubr.bf16.mxu0 %v96
  %337 = vmatmul.mubr.bf16.gmra.mxu0 %v95
  %v338 = vpop.f32.mrf.mxu0
  %v339 = vadd.f32 %v144, %v338
  %v340 = vpop.f32.mrf.mxu0
  %v341 = vpop.f32.mrf.mxu0
  %v342 = vadd.f32 %v144, %v341
  %v343 = vpop.f32.mrf.mxu0
  %344 = vmatprep.mubr.bf16.mxu0 %v101
  %345 = vmatmul.mubr.bf16.gmra.mxu0 %v100
  %v346 = vpop.f32.mrf.mxu0
  %v347 = vadd.f32 %v144, %v346
  %v348 = vpop.f32.mrf.mxu0
  %v349 = vpop.f32.mrf.mxu0
  %v350 = vadd.f32 %v144, %v349
  %v351 = vpop.f32.mrf.mxu0
  %352 = vmatprep.mubr.bf16.mxu0 %v106
  %353 = vmatmul.mubr.bf16.gmra.mxu0 %v105
  %v354 = vpop.f32.mrf.mxu0
  %v355 = vadd.f32 %v144, %v354
  %v356 = vpop.f32.mrf.mxu0
  %v357 = vpop.f32.mrf.mxu0
  %v358 = vadd.f32 %v144, %v357
  %v359 = vpop.f32.mrf.mxu0
  %360 = vmatprep.mubr.bf16.mxu0 %v111
  %361 = vmatmul.mubr.bf16.gmra.mxu0 %v110
  %v362 = vpop.f32.mrf.mxu0
  %v363 = vadd.f32 %v144, %v362
  %v364 = vpop.f32.mrf.mxu0
  %v365 = vpop.f32.mrf.mxu0
  %v366 = vpop.f32.mrf.mxu0
  %367 = vdwg.mxu0
  %368 = vmatprep.subr.bf16.mxu0 0
  %369 = vmatpush1.bf16.xpose.msra.mxu0 0
  %370 = vmatprep.subr.bf16.mxu0 0
  %371 = vmatpush1.bf16.xpose.msra.mxu0 0
  %372 = vmatprep.subr.bf16.mxu0 0
  %373 = vmatpush1.bf16.xpose.msra.mxu0 0
  %374 = vmatprep.subr.bf16.mxu0 0
  %375 = vmatpush1.bf16.xpose.msra.mxu0 0
  %376 = vmatprep.subr.bf16.mxu0 %v228
  %377 = vmatpush1.bf16.xpose.msra.mxu0 %v227
  %378 = vmatprep.subr.bf16.mxu0 %v223
  %379 = vmatpush1.bf16.xpose.msra.mxu0 %v222
  %380 = vmatprep.subr.bf16.mxu0 %v218
  %381 = vmatpush1.bf16.xpose.msra.mxu0 %v217
  %382 = vmatprep.subr.bf16.mxu0 %v213
  %383 = vmatpush1.bf16.xpose.msra.mxu0 %v212
  %384 = vmatprep.subr.bf16.mxu0 0
  %385 = vmatpush2.bf16.xpose.msra.mxu0 0
  %386 = vmatprep.subr.bf16.mxu0 0
  %387 = vmatpush2.bf16.xpose.msra.mxu0 0
  %388 = vmatprep.subr.bf16.mxu0 0
  %389 = vmatpush2.bf16.xpose.msra.mxu0 0
  %390 = vmatprep.subr.bf16.mxu0 0
  %391 = vmatpush2.bf16.xpose.msra.mxu0 0
  %392 = vmatprep.subr.bf16.mxu0 0
  %393 = vmatpush2.bf16.xpose.msra.mxu0 0
  %394 = vmatprep.subr.bf16.mxu0 0
  %395 = vmatpush2.bf16.xpose.msra.mxu0 0
  %396 = vmatprep.subr.bf16.mxu0 0
  %397 = vmatpush2.bf16.xpose.msra.mxu0 0
  %398 = vmatprep.subr.bf16.mxu0 0
  %399 = vmatpush2.bf16.xpose.msra.mxu0 0
  %400 = vmatprep.mubr.bf16.mxu0 %v83
  %401 = vmatmul.mubr.bf16.gmra.mxu0 %v82
  %v402 = vpop.f32.mrf.mxu0
  %v403 = vadd.f32 %v315, %v402
  %v404 = vpop.f32.mrf.mxu0
  %v405 = vpop.f32.mrf.mxu0
  %v406 = vadd.f32 %v318, %v405
  %v407 = vpop.f32.mrf.mxu0
  %408 = vmatprep.mubr.bf16.mxu0 %v88
  %409 = vmatmul.mubr.bf16.gmra.mxu0 %v87
  %v410 = vpop.f32.mrf.mxu0
  %v411 = vadd.f32 %v323, %v410
  %v412 = vpop.f32.mrf.mxu0
  %v413 = vpop.f32.mrf.mxu0
  %v414 = vadd.f32 %v326, %v413
  %v415 = vpop.f32.mrf.mxu0
  %416 = vmatprep.mubr.bf16.mxu0 %v93
  %417 = vmatmul.mubr.bf16.gmra.mxu0 %v92
  %v418 = vpop.f32.mrf.mxu0
  %v419 = vadd.f32 %v331, %v418
  %v420 = vpop.f32.mrf.mxu0
  %v421 = vpop.f32.mrf.mxu0
  %v422 = vadd.f32 %v334, %v421
  %v423 = vpop.f32.mrf.mxu0
  %424 = vmatprep.mubr.bf16.mxu0 %v98
  %425 = vmatmul.mubr.bf16.gmra.mxu0 %v97
  %v426 = vpop.f32.mrf.mxu0
  %v427 = vadd.f32 %v339, %v426
  %v428 = vpop.f32.mrf.mxu0
  %v429 = vpop.f32.mrf.mxu0
  %v430 = vadd.f32 %v342, %v429
  %v431 = vpop.f32.mrf.mxu0
  %432 = vmatprep.mubr.bf16.mxu0 %v103
  %433 = vmatmul.mubr.bf16.gmra.mxu0 %v102
  %v434 = vpop.f32.mrf.mxu0
  %v435 = vadd.f32 %v347, %v434
  %v436 = vpop.f32.mrf.mxu0
  %v437 = vpop.f32.mrf.mxu0
  %v438 = vadd.f32 %v350, %v437
  %v439 = vpop.f32.mrf.mxu0
  %440 = vmatprep.mubr.bf16.mxu0 %v108
  %441 = vmatmul.mubr.bf16.gmra.mxu0 %v107
  %v442 = vpop.f32.mrf.mxu0
  %v443 = vadd.f32 %v355, %v442
  %v444 = vpop.f32.mrf.mxu0
  %v445 = vpop.f32.mrf.mxu0
  %v446 = vadd.f32 %v358, %v445
  %v447 = vpop.f32.mrf.mxu0
  %448 = vmatprep.mubr.bf16.mxu0 %v113
  %449 = vmatmul.mubr.bf16.gmra.mxu0 %v112
  %v450 = vpop.f32.mrf.mxu0
  %v451 = vadd.f32 %v363, %v450
  %v452 = vpop.f32.mrf.mxu0
  %v453 = vpop.f32.mrf.mxu0
  %v454 = vpop.f32.mrf.mxu0
  %455 = vdwg.mxu0
  %456 = vmatprep.subr.bf16.mxu0 0
  %457 = vmatpush1.bf16.xpose.msra.mxu0 0
  %458 = vmatprep.subr.bf16.mxu0 0
  %459 = vmatpush1.bf16.xpose.msra.mxu0 0
  %460 = vmatprep.subr.bf16.mxu0 0
  %461 = vmatpush1.bf16.xpose.msra.mxu0 0
  %462 = vmatprep.subr.bf16.mxu0 0
  %463 = vmatpush1.bf16.xpose.msra.mxu0 0
  %464 = vmatprep.subr.bf16.mxu0 0
  %465 = vmatpush1.bf16.xpose.msra.mxu0 %v278
  %466 = vmatprep.subr.bf16.mxu0 0
  %467 = vmatpush1.bf16.xpose.msra.mxu0 %v275
  %468 = vmatprep.subr.bf16.mxu0 0
  %469 = vmatpush1.bf16.xpose.msra.mxu0 %v272
  %470 = vmatprep.subr.bf16.mxu0 0
  %471 = vmatpush1.bf16.xpose.msra.mxu0 %v269
  %472 = vmatprep.subr.bf16.mxu0 0
  %473 = vmatpush2.bf16.xpose.msra.mxu0 0
  %474 = vmatprep.subr.bf16.mxu0 0
  %475 = vmatpush2.bf16.xpose.msra.mxu0 0
  %476 = vmatprep.subr.bf16.mxu0 0
  %477 = vmatpush2.bf16.xpose.msra.mxu0 0
  %478 = vmatprep.subr.bf16.mxu0 0
  %479 = vmatpush2.bf16.xpose.msra.mxu0 0
  %480 = vmatprep.subr.bf16.mxu0 0
  %481 = vmatpush2.bf16.xpose.msra.mxu0 0
  %482 = vmatprep.subr.bf16.mxu0 0
  %483 = vmatpush2.bf16.xpose.msra.mxu0 0
  %484 = vmatprep.subr.bf16.mxu0 0
  %485 = vmatpush2.bf16.xpose.msra.mxu0 0
  %486 = vmatprep.subr.bf16.mxu0 0
  %487 = vmatpush2.bf16.xpose.msra.mxu0 0
  %488 = vmatprep.mubr.bf16.mxu0 0
  %489 = vmatmul.mubr.bf16.gmra.mxu0 %v248
  %v490 = vpop.f32.mrf.mxu0
  %v491 = vadd.f32 %v403, %v490
  %v492 = vpop.f32.mrf.mxu0
  %v493 = vpop.f32.mrf.mxu0
  %v494 = vadd.f32 %v406, %v493
  %v495 = vpop.f32.mrf.mxu0
  %496 = vmatprep.mubr.bf16.mxu0 0
  %497 = vmatmul.mubr.bf16.gmra.mxu0 %v251
  %v498 = vpop.f32.mrf.mxu0
  %v499 = vadd.f32 %v411, %v498
  %v500 = vpop.f32.mrf.mxu0
  %v501 = vpop.f32.mrf.mxu0
  %v502 = vadd.f32 %v414, %v501
  %v503 = vpop.f32.mrf.mxu0
  %504 = vmatprep.mubr.bf16.mxu0 0
  %505 = vmatmul.mubr.bf16.gmra.mxu0 %v254
  %v506 = vpop.f32.mrf.mxu0
  %v507 = vadd.f32 %v419, %v506
  %v508 = vpop.f32.mrf.mxu0
  %v509 = vpop.f32.mrf.mxu0
  %v510 = vadd.f32 %v422, %v509
  %v511 = vpop.f32.mrf.mxu0
  %512 = vmatprep.mubr.bf16.mxu0 0
  %513 = vmatmul.mubr.bf16.gmra.mxu0 %v257
  %v514 = vpop.f32.mrf.mxu0
  %v515 = vadd.f32 %v427, %v514
  %v516 = vpop.f32.mrf.mxu0
  %v517 = vpop.f32.mrf.mxu0
  %v518 = vadd.f32 %v430, %v517
  %v519 = vpop.f32.mrf.mxu0
  %520 = vmatprep.mubr.bf16.mxu0 0
  %521 = vmatmul.mubr.bf16.gmra.mxu0 %v260
  %v522 = vpop.f32.mrf.mxu0
  %v523 = vadd.f32 %v435, %v522
  %v524 = vpop.f32.mrf.mxu0
  %v525 = vpop.f32.mrf.mxu0
  %v526 = vadd.f32 %v438, %v525
  %v527 = vpop.f32.mrf.mxu0
  %528 = vmatprep.mubr.bf16.mxu0 0
  %529 = vmatmul.mubr.bf16.gmra.mxu0 %v263
  %v530 = vpop.f32.mrf.mxu0
  %v531 = vadd.f32 %v443, %v530
  %v532 = vpop.f32.mrf.mxu0
  %v533 = vpop.f32.mrf.mxu0
  %v534 = vadd.f32 %v446, %v533
  %v535 = vpop.f32.mrf.mxu0
  %536 = vmatprep.mubr.bf16.mxu0 0
  %537 = vmatmul.mubr.bf16.gmra.mxu0 %v266
  %v538 = vpop.f32.mrf.mxu0
  %v539 = vadd.f32 %v451, %v538
  %v540 = vpop.f32.mrf.mxu0
  %v541 = vpop.f32.mrf.mxu0
  %v542 = vpop.f32.mrf.mxu0
  %543 = vdwg.mxu0
  %v544 = vmax.f32 %v491, 0.0
  %v545 = vmax.f32 %v494, 0.0
  %v546 = vmax.f32 %v499, 0.0
  %v547 = vmax.f32 %v502, 0.0
  %v548 = vmax.f32 %v507, 0.0
  %v549 = vmax.f32 %v510, 0.0
  %v550 = vmax.f32 %v515, 0.0
  %v551 = vmax.f32 %v518, 0.0
  %v552 = vmax.f32 %v523, 0.0
  %v553 = vmax.f32 %v526, 0.0
  %v554 = vmax.f32 %v531, 0.0
  %v555 = vmax.f32 %v534, 0.0
  %v556 = vmax.f32 %v539, 0.0
  %557 = vst.msk [vmem:[%s3] sm:$0xff] %vm246, %v544
  %558 = vst.msk [vmem:[%s3 + $0x8] sm:$0xff] %vm246, %v545
  %559 = vst.msk [vmem:[%s3 + $0x10] sm:$0xff] %vm246, %v546
  %560 = vst.msk [vmem:[%s3 + $0x18] sm:$0xff] %vm246, %v547
  %561 = vst.msk [vmem:[%s3 + $0x20] sm:$0xff] %vm246, %v548
  %562 = vst.msk [vmem:[%s3 + $0x28] sm:$0xff] %vm246, %v549
  %563 = vst.msk [vmem:[%s3 + $0x30] sm:$0xff] %vm246, %v550
  %564 = vst.msk [vmem:[%s3 + $0x38] sm:$0xff] %vm246, %v551
  %565 = vst.msk [vmem:[%s3 + $0x40] sm:$0xff] %vm246, %v552
  %566 = vst.msk [vmem:[%s3 + $0x48] sm:$0xff] %vm246, %v553
  %567 = vst.msk [vmem:[%s3 + $0x50] sm:$0xff] %vm246, %v554
  %568 = vst.msk [vmem:[%s3 + $0x58] sm:$0xff] %vm246, %v555
  %vm569 = vcmask 517120
  %570 = vst.msk [vmem:[%s3 + $0x60] sm:$0x3] %vm569, %v556
  // Predicated region
  $region14: #{noisy_net_forward.8} parent=0 // pred_check
    _
  $region15: #{noisy_net_forward.8} parent=0 // pred_check_branch
    %572 = sbr.rel (0) target = $region17
  $region16: #{noisy_net_forward.8} parent=0 // pred_region
    _
  $region17: #{noisy_net_forward.8} parent=0 // pred_fallthru
    _
  // Predicated region
  $region18: #{noisy_net_forward.8} parent=0 // pred_check
    _
  $region19: #{noisy_net_forward.8} parent=0 // pred_check_branch
    %574 = sbr.rel (0) target = $region21
  $region20: #{noisy_net_forward.8} parent=0 // pred_region
    _
  $region21: #{noisy_net_forward.8} parent=0 // pred_fallthru
    _

// kernel: noisy_net_forward.9
$region0: #{noisy_net_forward.9}
  #allocation0 [shape = 'u32[]', space=smem, size = 0x4, offset = 0x4, fixed_abs, tag = 'smem constant byte address 0x4 - core index']
  #allocation1 [shape = 'u32[144,128]{1,0:T(1,128)}', space=vmem, size = 0x12000, scoped, tag = 'internal scratch']
  %s0 = inlined_call_operand.vmem [shape: f32[2,3136], index: 0, kind: input, shape index: {}]
  %s1 = inlined_call_operand.vmem [shape: bf16[512,3136], index: 1, kind: input, shape index: {}]
  %s2 = inlined_call_operand.vmem [shape: bf16[512,3136], index: 2, kind: input, shape index: {}]
  %s3 = inlined_call_operand.vmem [shape: f32[1,3136], index: 3, kind: input, shape index: {}]
  %s4 = inlined_call_operand.vmem [shape: f32[512,1], index: 4, kind: input, shape index: {}]
  %s5 = inlined_call_operand.vmem [shape: f32[1,512], index: 5, kind: input, shape index: {}]
  %s6 = inlined_call_operand.vmem [shape: bf16[2,512], index: 6, kind: input, shape index: {}]
  %s7 = inlined_call_operand.vmem [shape: f32[1,2], index: 7, kind: input, shape index: {}]
  %s8 = inlined_call_operand.hbm [shape: f32[2,2], index: 8, kind: output, shape index: {}]
  %s9 = sld [smem:[#allocation0]]
  $region69: #{noisy_net_forward.9} parent=0
    _
  %s11 = ssub.s32 1, %s9
  %s12 = scalar_select 0, %s11, %s9
  $region1: #{noisy_net_forward.9} parent=0
    #allocation2 [shape = 'u8[1024]{0}', space=vmem, size = 0x400, scoped, tag = 'output window, operand 0, single buffered']
    #allocation3 [shape = 's32[2]{0}', space=sflag, size = 0x8, scoped, tag = 'scoped memory for noisy_net_forward.9']
    %13 = vsyncpa [#allocation3], 0
    loop: start=0, step=1, limit=6
    $region2: #{noisy_net_forward.9} parent=1 // loop_pre_header
      _
    $region3: #{noisy_net_forward.9} parent=1 // loop_header
      %s15 = sphi 0, %s19
      %p16 = scmp.ge.s32.totalorder %s15, 6
      %s23 = sphi 0, %s23
      %s25 = sphi 0, %s23
      %s26 = sphi 0, %s25
      %s40 = sphi 0, %s26
      %s46 = sphi 0, %s48
      %s49 = sphi 0, %s46
      %s50 = sphi 0, %s49
      %s66 = sphi 0, %s50
      %s72 = sphi 0, %s74
      %s75 = sphi 0, %s72
      %s76 = sphi 0, %s75
      %s92 = sphi 0, %s76
      %s96 = sphi 0, %s96
      %s98 = sphi 0, %s96
      %s99 = sphi 0, %s98
      %s113 = sphi 0, %s99
      %s119 = sphi 0, %s121
      %s122 = sphi 0, %s119
      %s123 = sphi 0, %s122
      %s139 = sphi 0, %s123
      %s145 = sphi 0, %s147
      %s148 = sphi 0, %s145
      %s149 = sphi 0, %s148
      %s165 = sphi 0, %s149
      %s171 = sphi 0, %s173
      %s174 = sphi 0, %s171
      %s175 = sphi 0, %s174
      %s191 = sphi 0, %s175
      %s195 = sphi 0, %s195
      %s197 = sphi 0, %s195
      %s198 = sphi 0, %s197
      %s212 = sphi 0, %s198
      %s216 = sphi 0, %s216
      %s218 = sphi 0, %s216
      %s219 = sphi 0, %s218
      %s233 = sphi 0, %s219
    $region4: #{noisy_net_forward.9} parent=1 // loop_header_branch
      %18 = sbr.rel (%p16) target = $region8
    $region5: #{noisy_net_forward.9} parent=1 // loop_body
      %s20 = ssub.s32 %s15, 1
      %s21 = ssub.s32 %s15, 2
      %s22 = sadd.s32 %s15, 1
      %s24 = sadd.s32 %s23, 1
      %p27 = scmp.eq.s32.totalorder %s15, 3
      %p28 = scmp.ne.s32.totalorder %s23, %s25
      %p29 = scmp.eq.s32.totalorder %s15, 0
      %p30 = por %p28, %p29
      %p31 = scmp.ne.s32.totalorder %s23, %s25
      %p32 = scmp.eq.s32.totalorder %s20, 3
      %p33 = por %p31, %p32
      %p34 = scmp.ne.s32.totalorder %s25, %s26
      %p35 = scmp.eq.s32.totalorder %s20, 0
      %p36 = por %p34, %p35
      %p37 = scmp.ne.s32.totalorder %s25, %s26
      %p38 = scmp.eq.s32.totalorder %s21, 3
      %p39 = por %p37, %p38
      %p41 = scmp.ne.s32.totalorder %s26, %s40
      %p42 = scmp.eq.s32.totalorder %s21, 0
      %p43 = por %p41, %p42
      %s44 = ssub.s32 %s15, %s22
      %p45 = scmp.eq.s32.totalorder %s44, 0
      %s47 = sadd.s32 %s46, 1
      %s48 = scalar_select %p45, %s46, %s47
      %p51 = pneg %p45
      %p52 = scmp.eq.s32.totalorder %s15, 3
      %p53 = por %p51, %p52
      %p54 = scmp.ne.s32.totalorder %s46, %s49
      %p55 = scmp.eq.s32.totalorder %s15, 0
      %p56 = por %p54, %p55
      %p57 = scmp.ne.s32.totalorder %s46, %s49
      %p58 = scmp.eq.s32.totalorder %s20, 3
      %p59 = por %p57, %p58
      %p60 = scmp.ne.s32.totalorder %s49, %s50
      %p61 = scmp.eq.s32.totalorder %s20, 0
      %p62 = por %p60, %p61
      %p63 = scmp.ne.s32.totalorder %s49, %s50
      %p64 = scmp.eq.s32.totalorder %s21, 3
      %p65 = por %p63, %p64
      %p67 = scmp.ne.s32.totalorder %s50, %s66
      %p68 = scmp.eq.s32.totalorder %s21, 0
      %p69 = por %p67, %p68
      %s70 = ssub.s32 %s15, %s22
      %p71 = scmp.eq.s32.totalorder %s70, 0
      %s73 = sadd.s32 %s72, 1
      %s74 = scalar_select %p71, %s72, %s73
      %p77 = pneg %p71
      %p78 = scmp.eq.s32.totalorder %s15, 3
      %p79 = por %p77, %p78
      %p80 = scmp.ne.s32.totalorder %s72, %s75
      %p81 = scmp.eq.s32.totalorder %s15, 0
      %p82 = por %p80, %p81
      %p83 = scmp.ne.s32.totalorder %s72, %s75
      %p84 = scmp.eq.s32.totalorder %s20, 3
      %p85 = por %p83, %p84
      %p86 = scmp.ne.s32.totalorder %s75, %s76
      %p87 = scmp.eq.s32.totalorder %s20, 0
      %p88 = por %p86, %p87
      %p89 = scmp.ne.s32.totalorder %s75, %s76
      %p90 = scmp.eq.s32.totalorder %s21, 3
      %p91 = por %p89, %p90
      %p93 = scmp.ne.s32.totalorder %s76, %s92
      %p94 = scmp.eq.s32.totalorder %s21, 0
      %p95 = por %p93, %p94
      %s97 = sadd.s32 %s96, 1
      %p100 = scmp.eq.s32.totalorder %s15, 3
      %p101 = scmp.ne.s32.totalorder %s96, %s98
      %p102 = scmp.eq.s32.totalorder %s15, 0
      %p103 = por %p101, %p102
      %p104 = scmp.ne.s32.totalorder %s96, %s98
      %p105 = scmp.eq.s32.totalorder %s20, 3
      %p106 = por %p104, %p105
      %p107 = scmp.ne.s32.totalorder %s98, %s99
      %p108 = scmp.eq.s32.totalorder %s20, 0
      %p109 = por %p107, %p108
      %p110 = scmp.ne.s32.totalorder %s98, %s99
      %p111 = scmp.eq.s32.totalorder %s21, 3
      %p112 = por %p110, %p111
      %p114 = scmp.ne.s32.totalorder %s99, %s113
      %p115 = scmp.eq.s32.totalorder %s21, 0
      %p116 = por %p114, %p115
      %s117 = ssub.s32 %s15, %s22
      %p118 = scmp.eq.s32.totalorder %s117, 0
      %s120 = sadd.s32 %s119, 1
      %s121 = scalar_select %p118, %s119, %s120
      %p124 = pneg %p118
      %p125 = scmp.eq.s32.totalorder %s15, 3
      %p126 = por %p124, %p125
      %p127 = scmp.ne.s32.totalorder %s119, %s122
      %p128 = scmp.eq.s32.totalorder %s15, 0
      %p129 = por %p127, %p128
      %p130 = scmp.ne.s32.totalorder %s119, %s122
      %p131 = scmp.eq.s32.totalorder %s20, 3
      %p132 = por %p130, %p131
      %p133 = scmp.ne.s32.totalorder %s122, %s123
      %p134 = scmp.eq.s32.totalorder %s20, 0
      %p135 = por %p133, %p134
      %p136 = scmp.ne.s32.totalorder %s122, %s123
      %p137 = scmp.eq.s32.totalorder %s21, 3
      %p138 = por %p136, %p137
      %p140 = scmp.ne.s32.totalorder %s123, %s139
      %p141 = scmp.eq.s32.totalorder %s21, 0
      %p142 = por %p140, %p141
      %s143 = ssub.s32 %s15, %s22
      %p144 = scmp.eq.s32.totalorder %s143, 0
      %s146 = sadd.s32 %s145, 1
      %s147 = scalar_select %p144, %s145, %s146
      %p150 = pneg %p144
      %p151 = scmp.eq.s32.totalorder %s15, 3
      %p152 = por %p150, %p151
      %p153 = scmp.ne.s32.totalorder %s145, %s148
      %p154 = scmp.eq.s32.totalorder %s15, 0
      %p155 = por %p153, %p154
      %p156 = scmp.ne.s32.totalorder %s145, %s148
      %p157 = scmp.eq.s32.totalorder %s20, 3
      %p158 = por %p156, %p157
      %p159 = scmp.ne.s32.totalorder %s148, %s149
      %p160 = scmp.eq.s32.totalorder %s20, 0
      %p161 = por %p159, %p160
      %p162 = scmp.ne.s32.totalorder %s148, %s149
      %p163 = scmp.eq.s32.totalorder %s21, 3
      %p164 = por %p162, %p163
      %p166 = scmp.ne.s32.totalorder %s149, %s165
      %p167 = scmp.eq.s32.totalorder %s21, 0
      %p168 = por %p166, %p167
      %s169 = ssub.s32 %s15, %s22
      %p170 = scmp.eq.s32.totalorder %s169, 0
      %s172 = sadd.s32 %s171, 1
      %s173 = scalar_select %p170, %s171, %s172
      %p176 = pneg %p170
      %p177 = scmp.eq.s32.totalorder %s15, 3
      %p178 = por %p176, %p177
      %p179 = scmp.ne.s32.totalorder %s171, %s174
      %p180 = scmp.eq.s32.totalorder %s15, 0
      %p181 = por %p179, %p180
      %p182 = scmp.ne.s32.totalorder %s171, %s174
      %p183 = scmp.eq.s32.totalorder %s20, 3
      %p184 = por %p182, %p183
      %p185 = scmp.ne.s32.totalorder %s174, %s175
      %p186 = scmp.eq.s32.totalorder %s20, 0
      %p187 = por %p185, %p186
      %p188 = scmp.ne.s32.totalorder %s174, %s175
      %p189 = scmp.eq.s32.totalorder %s21, 3
      %p190 = por %p188, %p189
      %p192 = scmp.ne.s32.totalorder %s175, %s191
      %p193 = scmp.eq.s32.totalorder %s21, 0
      %p194 = por %p192, %p193
      %s196 = sadd.s32 %s195, 1
      %p199 = scmp.eq.s32.totalorder %s15, 3
      %p200 = scmp.ne.s32.totalorder %s195, %s197
      %p201 = scmp.eq.s32.totalorder %s15, 0
      %p202 = por %p200, %p201
      %p203 = scmp.ne.s32.totalorder %s195, %s197
      %p204 = scmp.eq.s32.totalorder %s20, 3
      %p205 = por %p203, %p204
      %p206 = scmp.ne.s32.totalorder %s197, %s198
      %p207 = scmp.eq.s32.totalorder %s20, 0
      %p208 = por %p206, %p207
      %p209 = scmp.ne.s32.totalorder %s197, %s198
      %p210 = scmp.eq.s32.totalorder %s21, 3
      %p211 = por %p209, %p210
      %p213 = scmp.ne.s32.totalorder %s198, %s212
      %p214 = scmp.eq.s32.totalorder %s21, 0
      %p215 = por %p213, %p214
      %s217 = sadd.s32 %s216, 1
      %p220 = scmp.eq.s32.totalorder %s15, 3
      %p221 = scmp.ne.s32.totalorder %s216, %s218
      %p222 = scmp.eq.s32.totalorder %s15, 0
      %p223 = por %p221, %p222
      %p224 = scmp.ne.s32.totalorder %s216, %s218
      %p225 = scmp.eq.s32.totalorder %s20, 3
      %p226 = por %p224, %p225
      %p227 = scmp.ne.s32.totalorder %s218, %s219
      %p228 = scmp.eq.s32.totalorder %s20, 0
      %p229 = por %p227, %p228
      %p230 = scmp.ne.s32.totalorder %s218, %s219
      %p231 = scmp.eq.s32.totalorder %s21, 3
      %p232 = por %p230, %p231
      %p234 = scmp.ne.s32.totalorder %s219, %s233
      %p235 = scmp.eq.s32.totalorder %s21, 0
      %p236 = por %p234, %p235
      %p237 = scmp.le.s32.totalorder 1, %s15
      %p238 = scmp.lt.s32.totalorder %s15, 5
      %p239 = pnand %p237, %p238
      %p240 = pneg %p239
      // Predicated region
      $region9: #{noisy_net_forward.9} parent=5 // pred_check
        _
      $region10: #{noisy_net_forward.9} parent=5 // pred_check_branch
        %242 = sbr.rel (%p239) target = $region12
      $region11: #{noisy_net_forward.9} parent=5 // pred_region
        %s243 = ssub.s32 %s15, 1
        // Predicated region
        $region13: #{noisy_net_forward.9} parent=11 // pred_check
          %p244 = pneg %p36
        $region14: #{noisy_net_forward.9} parent=11 // pred_check_branch
          %246 = sbr.rel (%p244) target = $region16
        $region15: #{noisy_net_forward.9} parent=11 // pred_region
          _
        $region16: #{noisy_net_forward.9} parent=11 // pred_fallthru
          _
        // Predicated region
        $region17: #{noisy_net_forward.9} parent=11 // pred_check
          %p247 = pneg %p109
        $region18: #{noisy_net_forward.9} parent=11 // pred_check_branch
          %249 = sbr.rel (%p247) target = $region20
        $region19: #{noisy_net_forward.9} parent=11 // pred_region
          _
        $region20: #{noisy_net_forward.9} parent=11 // pred_fallthru
          _
        // Predicated region
        $region21: #{noisy_net_forward.9} parent=11 // pred_check
          %p250 = pneg %p208
        $region22: #{noisy_net_forward.9} parent=11 // pred_check_branch
          %252 = sbr.rel (%p250) target = $region24
        $region23: #{noisy_net_forward.9} parent=11 // pred_region
          _
        $region24: #{noisy_net_forward.9} parent=11 // pred_fallthru
          _
      $region12: #{noisy_net_forward.9} parent=5 // pred_fallthru
        _
      %p253 = scmp.lt.s32.totalorder %s15, 4
      // Predicated region
      $region25: #{noisy_net_forward.9} parent=5 // pred_check
        %p254 = pneg %p253
      $region26: #{noisy_net_forward.9} parent=5 // pred_check_branch
        %256 = sbr.rel (%p254) target = $region28
      $region27: #{noisy_net_forward.9} parent=5 // pred_region
        // Predicated region
        $region29: #{noisy_net_forward.9} parent=27 // pred_check
          %p257 = pneg %p56
        $region30: #{noisy_net_forward.9} parent=27 // pred_check_branch
          %259 = sbr.rel (%p257) target = $region32
        $region31: #{noisy_net_forward.9} parent=27 // pred_region
          %s260 = smul.u32 16, %s15
          %p261 = scmp.lt.s32.totalorder %s260, 63
          %s262 = scalar_select %p261, %s260, 63
          %s263 = smul.addr %s262, 25
          %s264 = smul.addr %s263, 4
          %s265 = scalar_lea.vmem %s1, %s264
          %s266 = smul.u32 16, %s15
        $region32: #{noisy_net_forward.9} parent=27 // pred_fallthru
          _
        // Predicated region
        $region33: #{noisy_net_forward.9} parent=27 // pred_check
          %p267 = pneg %p82
        $region34: #{noisy_net_forward.9} parent=27 // pred_check_branch
          %269 = sbr.rel (%p267) target = $region36
        $region35: #{noisy_net_forward.9} parent=27 // pred_region
          %s270 = smul.u32 16, %s15
          %p271 = scmp.lt.s32.totalorder %s270, 63
          %s272 = scalar_select %p271, %s270, 63
          %s273 = smul.addr %s272, 25
          %s274 = smul.addr %s273, 4
          %s275 = scalar_lea.vmem %s2, %s274
          %s276 = smul.u32 16, %s15
        $region36: #{noisy_net_forward.9} parent=27 // pred_fallthru
          _
        // Predicated region
        $region37: #{noisy_net_forward.9} parent=27 // pred_check
          %p277 = pneg %p129
        $region38: #{noisy_net_forward.9} parent=27 // pred_check_branch
          %279 = sbr.rel (%p277) target = $region40
        $region39: #{noisy_net_forward.9} parent=27 // pred_region
          %s280 = smul.u32 16, %s15
          %p281 = scmp.lt.s32.totalorder %s280, 63
          %s282 = scalar_select %p281, %s280, 63
          %s283 = smul.addr %s282, 8
          %s284 = scalar_lea.vmem %s4, %s283
          %s285 = smul.u32 16, %s15
        $region40: #{noisy_net_forward.9} parent=27 // pred_fallthru
          _
        // Predicated region
        $region41: #{noisy_net_forward.9} parent=27 // pred_check
          %p286 = pneg %p155
        $region42: #{noisy_net_forward.9} parent=27 // pred_check_branch
          %288 = sbr.rel (%p286) target = $region44
        $region43: #{noisy_net_forward.9} parent=27 // pred_region
          %p289 = scmp.lt.s32.totalorder %s15, 3
          %s290 = scalar_select %p289, %s15, 3
          %s291 = scalar_lea.vmem %s5, %s290
        $region44: #{noisy_net_forward.9} parent=27 // pred_fallthru
          _
        // Predicated region
        $region45: #{noisy_net_forward.9} parent=27 // pred_check
          %p292 = pneg %p181
        $region46: #{noisy_net_forward.9} parent=27 // pred_check_branch
          %294 = sbr.rel (%p292) target = $region48
        $region47: #{noisy_net_forward.9} parent=27 // pred_region
          %p295 = scmp.lt.s32.totalorder %s15, 3
          %s296 = scalar_select %p295, %s15, 3
          %s297 = scalar_lea.vmem %s6, %s296
        $region48: #{noisy_net_forward.9} parent=27 // pred_fallthru
          _
      $region28: #{noisy_net_forward.9} parent=5 // pred_fallthru
        _
      %p298 = scmp.le.s32.totalorder 1, %s15
      %p299 = scmp.lt.s32.totalorder %s15, 5
      %p300 = pnand %p298, %p299
      %p301 = pneg %p300
      // Predicated region
      $region49: #{noisy_net_forward.9} parent=5 // pred_check
        _
      $region50: #{noisy_net_forward.9} parent=5 // pred_check_branch
        %303 = sbr.rel (%p300) target = $region52
      $region51: #{noisy_net_forward.9} parent=5 // pred_region
        %s304 = ssub.s32 %s15, 1
        %p305 = pneg %p36
        %p306 = pneg %p33
        %s307 = smul.u32 16, %s20
        %p308 = scmp.lt.s32.totalorder %s307, 63
        %s309 = scalar_select %p308, %s307, 63
        %s310 = smul.addr %s309, 25
        %s311 = smul.addr %s310, 4
        %s312 = scalar_lea.vmem %s1, %s311
        %p313 = pneg %p62
        %p314 = pneg %p59
        %s315 = smul.u32 16, %s20
        %p316 = scmp.lt.s32.totalorder %s315, 63
        %s317 = scalar_select %p316, %s315, 63
        %s318 = smul.addr %s317, 25
        %s319 = smul.addr %s318, 4
        %s320 = scalar_lea.vmem %s2, %s319
        %p321 = pneg %p88
        %p322 = pneg %p85
        %p323 = pneg %p109
        %p324 = pneg %p106
        %s325 = smul.u32 16, %s20
        %p326 = scmp.lt.s32.totalorder %s325, 63
        %s327 = scalar_select %p326, %s325, 63
        %s328 = smul.addr %s327, 8
        %s329 = scalar_lea.vmem %s4, %s328
        %p330 = pneg %p135
        %p331 = pneg %p132
        %p332 = scmp.lt.s32.totalorder %s20, 3
        %s333 = scalar_select %p332, %s20, 3
        %s334 = scalar_lea.vmem %s5, %s333
        %p335 = pneg %p161
        %p336 = pneg %p158
        %p337 = scmp.lt.s32.totalorder %s20, 3
        %s338 = scalar_select %p337, %s20, 3
        %s339 = scalar_lea.vmem %s6, %s338
        %p340 = pneg %p187
        %p341 = pneg %p184
        %p342 = pneg %p208
        %p343 = pneg %p205
        %p344 = pneg %p229
        %p345 = pneg %p226
        %s346 = smul.u32 16, %s20
        %p347 = scmp.lt.s32.totalorder %s346, 63
        %s348 = scalar_select %p347, %s346, 63
        %s349 = smul.addr %s348, 25
        %s350 = smul.addr %s349, 4
        %s351 = scalar_lea.vmem %s1, %s350
        %s352 = smul.u32 16, %s20
        %s353 = smul.u32 16, %s20
        %p354 = scmp.lt.s32.totalorder %s353, 63
        %s355 = scalar_select %p354, %s353, 63
        %s356 = smul.addr %s355, 25
        %s357 = smul.addr %s356, 4
        %s358 = scalar_lea.vmem %s2, %s357
        %s359 = smul.u32 16, %s20
        %s360 = smul.u32 16, %s20
        %p361 = scmp.lt.s32.totalorder %s360, 63
        %s362 = scalar_select %p361, %s360, 63
        %s363 = smul.addr %s362, 8
        %s364 = scalar_lea.vmem %s4, %s363
        %s365 = smul.u32 16, %s20
        %p366 = scmp.lt.s32.totalorder %s20, 3
        %s367 = scalar_select %p366, %s20, 3
        %s368 = scalar_lea.vmem %s5, %s367
        %p369 = scmp.lt.s32.totalorder %s20, 3
        %s370 = scalar_select %p369, %s20, 3
        %s371 = scalar_lea.vmem %s6, %s370
        %p373 = scmp.eq.s32.totalorder %s20, 0
        // Predicated region
        $region53: #{noisy_net_forward.9} parent=51 // pred_check
          %p374 = pneg %p373
        $region54: #{noisy_net_forward.9} parent=51 // pred_check_branch
          %376 = sbr.rel (%p374) target = $region56
        $region55: #{noisy_net_forward.9} parent=51 // pred_region
          %v377 = vld [vmem:[%s7] sm:$0x1]
          %v379 = vlaneseq
          %v380 = vshrl.u32 %v379, 7
          %v381 = vsub.s32 0, %v380
          %v382 = vrot.slane %v377, %v381
          %v384 = vadd.f32 %v382, 0.0
          %vm385 = vcmask 9216
          %386 = vst.msk [vmem:[#allocation2] sm:$0x3] %vm385, %v384
        $region56: #{noisy_net_forward.9} parent=51 // pred_fallthru
          _
        %v387 = vld [vmem:[%s364] sm:$0xff]
        %v388 = vld [vmem:[%s364 + $0x8] sm:$0xff]
        %v389 = vld [vmem:[%s364 + $0x10] sm:$0xff]
        %v390 = vld [vmem:[%s364 + $0x18] sm:$0xff]
        %v391 = vld [vmem:[%s364 + $0x20] sm:$0xff]
        %v392 = vld [vmem:[%s364 + $0x28] sm:$0xff]
        %v393 = vld [vmem:[%s364 + $0x30] sm:$0xff]
        %v394 = vld [vmem:[%s364 + $0x38] sm:$0xff]
        %v395 = vld [vmem:[%s364 + $0x40] sm:$0xff]
        %v396 = vld [vmem:[%s364 + $0x48] sm:$0xff]
        %v397 = vld [vmem:[%s364 + $0x50] sm:$0xff]
        %v398 = vld [vmem:[%s364 + $0x58] sm:$0xff]
        %v399 = vld [vmem:[%s364 + $0x60] sm:$0xff]
        %v400 = vld [vmem:[%s364 + $0x68] sm:$0xff]
        %v401 = vld [vmem:[%s364 + $0x70] sm:$0xff]
        %v402 = vld [vmem:[%s364 + $0x78] sm:$0xff]
        %v403 = vld [vmem:[%s3] sm:$0xff]
        %v404 = vld [vmem:[%s3 + $0x8] sm:$0xff]
        %v405 = vld [vmem:[%s3 + $0x10] sm:$0xff]
        %v406 = vld [vmem:[%s3 + $0x18] sm:$0x1]
        %408 = vset.pattern.permute.xlu0 0
        %409 = vperm.xlu0 %408, %v387
        %v410 = vpop.permute.xlu0 %409
        %413 = vset.pattern.permute.xlu0 0
        %414 = vperm.xlu0 %413, %v388
        %v415 = vpop.permute.xlu0 %414
        %418 = vset.pattern.permute.xlu0 0
        %419 = vperm.xlu0 %418, %v389
        %v420 = vpop.permute.xlu0 %419
        %423 = vset.pattern.permute.xlu0 0
        %424 = vperm.xlu0 %423, %v390
        %v425 = vpop.permute.xlu0 %424
        %428 = vset.pattern.permute.xlu0 0
        %429 = vperm.xlu0 %428, %v391
        %v430 = vpop.permute.xlu0 %429
        %433 = vset.pattern.permute.xlu0 0
        %434 = vperm.xlu0 %433, %v392
        %v435 = vpop.permute.xlu0 %434
        %438 = vset.pattern.permute.xlu0 0
        %439 = vperm.xlu0 %438, %v393
        %v440 = vpop.permute.xlu0 %439
        %443 = vset.pattern.permute.xlu0 0
        %444 = vperm.xlu0 %443, %v394
        %v445 = vpop.permute.xlu0 %444
        %448 = vset.pattern.permute.xlu0 0
        %449 = vperm.xlu0 %448, %v395
        %v450 = vpop.permute.xlu0 %449
        %453 = vset.pattern.permute.xlu0 0
        %454 = vperm.xlu0 %453, %v396
        %v455 = vpop.permute.xlu0 %454
        %458 = vset.pattern.permute.xlu0 0
        %459 = vperm.xlu0 %458, %v397
        %v460 = vpop.permute.xlu0 %459
        %463 = vset.pattern.permute.xlu0 0
        %464 = vperm.xlu0 %463, %v398
        %v465 = vpop.permute.xlu0 %464
        %468 = vset.pattern.permute.xlu0 0
        %469 = vperm.xlu0 %468, %v399
        %v470 = vpop.permute.xlu0 %469
        %473 = vset.pattern.permute.xlu0 0
        %474 = vperm.xlu0 %473, %v400
        %v475 = vpop.permute.xlu0 %474
        %478 = vset.pattern.permute.xlu0 0
        %479 = vperm.xlu0 %478, %v401
        %v480 = vpop.permute.xlu0 %479
        %483 = vset.pattern.permute.xlu0 0
        %484 = vperm.xlu0 %483, %v402
        %v485 = vpop.permute.xlu0 %484
        %v491 = vlaneseq
        %v492 = vshrl.u32 %v491, 7
        %v493 = vsub.s32 0, %v492
        %v494 = vrot.slane %v403, %v493
        %v495 = vlaneseq
        %v496 = vshrl.u32 %v495, 7
        %v497 = vsub.s32 1, %v496
        %v498 = vrot.slane %v403, %v497
        %v499 = vlaneseq
        %v500 = vshrl.u32 %v499, 7
        %v501 = vsub.s32 2, %v500
        %v502 = vrot.slane %v403, %v501
        %v503 = vlaneseq
        %v504 = vshrl.u32 %v503, 7
        %v505 = vsub.s32 3, %v504
        %v506 = vrot.slane %v403, %v505
        %v507 = vlaneseq
        %v508 = vshrl.u32 %v507, 7
        %v509 = vsub.s32 4, %v508
        %v510 = vrot.slane %v403, %v509
        %v511 = vlaneseq
        %v512 = vshrl.u32 %v511, 7
        %v513 = vsub.s32 5, %v512
        %v514 = vrot.slane %v403, %v513
        %v515 = vlaneseq
        %v516 = vshrl.u32 %v515, 7
        %v517 = vsub.s32 6, %v516
        %v518 = vrot.slane %v403, %v517
        %v519 = vlaneseq
        %v520 = vshrl.u32 %v519, 7
        %v521 = vsub.s32 7, %v520
        %v522 = vrot.slane %v403, %v521
        %v523 = vlaneseq
        %v524 = vshrl.u32 %v523, 7
        %v525 = vsub.s32 0, %v524
        %v526 = vrot.slane %v404, %v525
        %v527 = vlaneseq
        %v528 = vshrl.u32 %v527, 7
        %v529 = vsub.s32 1, %v528
        %v530 = vrot.slane %v404, %v529
        %v531 = vlaneseq
        %v532 = vshrl.u32 %v531, 7
        %v533 = vsub.s32 2, %v532
        %v534 = vrot.slane %v404, %v533
        %v535 = vlaneseq
        %v536 = vshrl.u32 %v535, 7
        %v537 = vsub.s32 3, %v536
        %v538 = vrot.slane %v404, %v537
        %v539 = vlaneseq
        %v540 = vshrl.u32 %v539, 7
        %v541 = vsub.s32 4, %v540
        %v542 = vrot.slane %v404, %v541
        %v543 = vlaneseq
        %v544 = vshrl.u32 %v543, 7
        %v545 = vsub.s32 5, %v544
        %v546 = vrot.slane %v404, %v545
        %v547 = vlaneseq
        %v548 = vshrl.u32 %v547, 7
        %v549 = vsub.s32 6, %v548
        %v550 = vrot.slane %v404, %v549
        %v551 = vlaneseq
        %v552 = vshrl.u32 %v551, 7
        %v553 = vsub.s32 7, %v552
        %v554 = vrot.slane %v404, %v553
        %v555 = vlaneseq
        %v556 = vshrl.u32 %v555, 7
        %v557 = vsub.s32 0, %v556
        %v558 = vrot.slane %v405, %v557
        %v559 = vlaneseq
        %v560 = vshrl.u32 %v559, 7
        %v561 = vsub.s32 1, %v560
        %v562 = vrot.slane %v405, %v561
        %v563 = vlaneseq
        %v564 = vshrl.u32 %v563, 7
        %v565 = vsub.s32 2, %v564
        %v566 = vrot.slane %v405, %v565
        %v567 = vlaneseq
        %v568 = vshrl.u32 %v567, 7
        %v569 = vsub.s32 3, %v568
        %v570 = vrot.slane %v405, %v569
        %v571 = vlaneseq
        %v572 = vshrl.u32 %v571, 7
        %v573 = vsub.s32 4, %v572
        %v574 = vrot.slane %v405, %v573
        %v575 = vlaneseq
        %v576 = vshrl.u32 %v575, 7
        %v577 = vsub.s32 5, %v576
        %v578 = vrot.slane %v405, %v577
        %v579 = vlaneseq
        %v580 = vshrl.u32 %v579, 7
        %v581 = vsub.s32 6, %v580
        %v582 = vrot.slane %v405, %v581
        %v583 = vlaneseq
        %v584 = vshrl.u32 %v583, 7
        %v585 = vsub.s32 7, %v584
        %v586 = vrot.slane %v405, %v585
        %v587 = vlaneseq
        %v588 = vshrl.u32 %v587, 7
        %v589 = vsub.s32 0, %v588
        %v590 = vrot.slane %v406, %v589
        %v616 = vmul.f32 %v410, %v494
        %v617 = vmul.f32 %v410, %v498
        %v618 = vmul.f32 %v410, %v502
        %v619 = vmul.f32 %v410, %v506
        %v620 = vmul.f32 %v410, %v510
        %v621 = vmul.f32 %v410, %v514
        %v622 = vmul.f32 %v410, %v518
        %v623 = vmul.f32 %v410, %v522
        %v624 = vmul.f32 %v410, %v526
        %v625 = vmul.f32 %v410, %v530
        %v626 = vmul.f32 %v410, %v534
        %v627 = vmul.f32 %v410, %v538
        %v628 = vmul.f32 %v410, %v542
        %v629 = vmul.f32 %v410, %v546
        %v630 = vmul.f32 %v410, %v550
        %v631 = vmul.f32 %v410, %v554
        %v632 = vmul.f32 %v410, %v558
        %v633 = vmul.f32 %v410, %v562
        %v634 = vmul.f32 %v410, %v566
        %v635 = vmul.f32 %v410, %v570
        %v636 = vmul.f32 %v410, %v574
        %v637 = vmul.f32 %v410, %v578
        %v638 = vmul.f32 %v410, %v582
        %v639 = vmul.f32 %v410, %v586
        %v640 = vmul.f32 %v410, %v590
        %v641 = vmul.f32 %v415, %v494
        %v642 = vmul.f32 %v415, %v498
        %v643 = vmul.f32 %v415, %v502
        %v644 = vmul.f32 %v415, %v506
        %v645 = vmul.f32 %v415, %v510
        %v646 = vmul.f32 %v415, %v514
        %v647 = vmul.f32 %v415, %v518
        %v648 = vmul.f32 %v415, %v522
        %v649 = vmul.f32 %v415, %v526
        %v650 = vmul.f32 %v415, %v530
        %v651 = vmul.f32 %v415, %v534
        %v652 = vmul.f32 %v415, %v538
        %v653 = vmul.f32 %v415, %v542
        %v654 = vmul.f32 %v415, %v546
        %v655 = vmul.f32 %v415, %v550
        %v656 = vmul.f32 %v415, %v554
        %v657 = vmul.f32 %v415, %v558
        %v658 = vmul.f32 %v415, %v562
        %v659 = vmul.f32 %v415, %v566
        %v660 = vmul.f32 %v415, %v570
        %v661 = vmul.f32 %v415, %v574
        %v662 = vmul.f32 %v415, %v578
        %v663 = vmul.f32 %v415, %v582
        %v664 = vmul.f32 %v415, %v586
        %v665 = vmul.f32 %v415, %v590
        %v666 = vmul.f32 %v420, %v494
        %v667 = vmul.f32 %v420, %v498
        %v668 = vmul.f32 %v420, %v502
        %v669 = vmul.f32 %v420, %v506
        %v670 = vmul.f32 %v420, %v510
        %v671 = vmul.f32 %v420, %v514
        %v672 = vmul.f32 %v420, %v518
        %v673 = vmul.f32 %v420, %v522
        %v674 = vmul.f32 %v420, %v526
        %v675 = vmul.f32 %v420, %v530
        %v676 = vmul.f32 %v420, %v534
        %v677 = vmul.f32 %v420, %v538
        %v678 = vmul.f32 %v420, %v542
        %v679 = vmul.f32 %v420, %v546
        %v680 = vmul.f32 %v420, %v550
        %v681 = vmul.f32 %v420, %v554
        %v682 = vmul.f32 %v420, %v558
        %v683 = vmul.f32 %v420, %v562
        %v684 = vmul.f32 %v420, %v566
        %v685 = vmul.f32 %v420, %v570
        %v686 = vmul.f32 %v420, %v574
        %v687 = vmul.f32 %v420, %v578
        %v688 = vmul.f32 %v420, %v582
        %v689 = vmul.f32 %v420, %v586
        %v690 = vmul.f32 %v420, %v590
        %v691 = vmul.f32 %v425, %v494
        %v692 = vmul.f32 %v425, %v498
        %v693 = vmul.f32 %v425, %v502
        %v694 = vmul.f32 %v425, %v506
        %v695 = vmul.f32 %v425, %v510
        %v696 = vmul.f32 %v425, %v514
        %v697 = vmul.f32 %v425, %v518
        %v698 = vmul.f32 %v425, %v522
        %v699 = vmul.f32 %v425, %v526
        %v700 = vmul.f32 %v425, %v530
        %v701 = vmul.f32 %v425, %v534
        %v702 = vmul.f32 %v425, %v538
        %v703 = vmul.f32 %v425, %v542
        %v704 = vmul.f32 %v425, %v546
        %v705 = vmul.f32 %v425, %v550
        %v706 = vmul.f32 %v425, %v554
        %v707 = vmul.f32 %v425, %v558
        %v708 = vmul.f32 %v425, %v562
        %v709 = vmul.f32 %v425, %v566
        %v710 = vmul.f32 %v425, %v570
        %v711 = vmul.f32 %v425, %v574
        %v712 = vmul.f32 %v425, %v578
        %v713 = vmul.f32 %v425, %v582
        %v714 = vmul.f32 %v425, %v586
        %v715 = vmul.f32 %v425, %v590
        %v716 = vmul.f32 %v430, %v494
        %v717 = vmul.f32 %v430, %v498
        %v718 = vmul.f32 %v430, %v502
        %v719 = vmul.f32 %v430, %v506
        %v720 = vmul.f32 %v430, %v510
        %v721 = vmul.f32 %v430, %v514
        %v722 = vmul.f32 %v430, %v518
        %v723 = vmul.f32 %v430, %v522
        %v724 = vmul.f32 %v430, %v526
        %v725 = vmul.f32 %v430, %v530
        %v726 = vmul.f32 %v430, %v534
        %v727 = vmul.f32 %v430, %v538
        %v728 = vmul.f32 %v430, %v542
        %v729 = vmul.f32 %v430, %v546
        %v730 = vmul.f32 %v430, %v550
        %v731 = vmul.f32 %v430, %v554
        %v732 = vmul.f32 %v430, %v558
        %v733 = vmul.f32 %v430, %v562
        %v734 = vmul.f32 %v430, %v566
        %v735 = vmul.f32 %v430, %v570
        %v736 = vmul.f32 %v430, %v574
        %v737 = vmul.f32 %v430, %v578
        %v738 = vmul.f32 %v430, %v582
        %v739 = vmul.f32 %v430, %v586
        %v740 = vmul.f32 %v430, %v590
        %v741 = vmul.f32 %v435, %v494
        %v742 = vmul.f32 %v435, %v498
        %v743 = vmul.f32 %v435, %v502
        %v744 = vmul.f32 %v435, %v506
        %v745 = vmul.f32 %v435, %v510
        %v746 = vmul.f32 %v435, %v514
        %v747 = vmul.f32 %v435, %v518
        %v748 = vmul.f32 %v435, %v522
        %v749 = vmul.f32 %v435, %v526
        %v750 = vmul.f32 %v435, %v530
        %v751 = vmul.f32 %v435, %v534
        %v752 = vmul.f32 %v435, %v538
        %v753 = vmul.f32 %v435, %v542
        %v754 = vmul.f32 %v435, %v546
        %v755 = vmul.f32 %v435, %v550
        %v756 = vmul.f32 %v435, %v554
        %v757 = vmul.f32 %v435, %v558
        %v758 = vmul.f32 %v435, %v562
        %v759 = vmul.f32 %v435, %v566
        %v760 = vmul.f32 %v435, %v570
        %v761 = vmul.f32 %v435, %v574
        %v762 = vmul.f32 %v435, %v578
        %v763 = vmul.f32 %v435, %v582
        %v764 = vmul.f32 %v435, %v586
        %v765 = vmul.f32 %v435, %v590
        %v766 = vmul.f32 %v440, %v494
        %v767 = vmul.f32 %v440, %v498
        %v768 = vmul.f32 %v440, %v502
        %v769 = vmul.f32 %v440, %v506
        %v770 = vmul.f32 %v440, %v510
        %v771 = vmul.f32 %v440, %v514
        %v772 = vmul.f32 %v440, %v518
        %v773 = vmul.f32 %v440, %v522
        %v774 = vmul.f32 %v440, %v526
        %v775 = vmul.f32 %v440, %v530
        %v776 = vmul.f32 %v440, %v534
        %v777 = vmul.f32 %v440, %v538
        %v778 = vmul.f32 %v440, %v542
        %v779 = vmul.f32 %v440, %v546
        %v780 = vmul.f32 %v440, %v550
        %v781 = vmul.f32 %v440, %v554
        %v782 = vmul.f32 %v440, %v558
        %v783 = vmul.f32 %v440, %v562
        %v784 = vmul.f32 %v440, %v566
        %v785 = vmul.f32 %v440, %v570
        %v786 = vmul.f32 %v440, %v574
        %v787 = vmul.f32 %v440, %v578
        %v788 = vmul.f32 %v440, %v582
        %v789 = vmul.f32 %v440, %v586
        %v790 = vmul.f32 %v440, %v590
        %v791 = vmul.f32 %v445, %v494
        %v792 = vmul.f32 %v445, %v498
        %v793 = vmul.f32 %v445, %v502
        %v794 = vmul.f32 %v445, %v506
        %v795 = vmul.f32 %v445, %v510
        %v796 = vmul.f32 %v445, %v514
        %v797 = vmul.f32 %v445, %v518
        %v798 = vmul.f32 %v445, %v522
        %v799 = vmul.f32 %v445, %v526
        %v800 = vmul.f32 %v445, %v530
        %v801 = vmul.f32 %v445, %v534
        %v802 = vmul.f32 %v445, %v538
        %v803 = vmul.f32 %v445, %v542
        %v804 = vmul.f32 %v445, %v546
        %v805 = vmul.f32 %v445, %v550
        %v806 = vmul.f32 %v445, %v554
        %v807 = vmul.f32 %v445, %v558
        %v808 = vmul.f32 %v445, %v562
        %v809 = vmul.f32 %v445, %v566
        %v810 = vmul.f32 %v445, %v570
        %v811 = vmul.f32 %v445, %v574
        %v812 = vmul.f32 %v445, %v578
        %v813 = vmul.f32 %v445, %v582
        %v814 = vmul.f32 %v445, %v586
        %v815 = vmul.f32 %v445, %v590
        %v816 = vmul.f32 %v450, %v494
        %v817 = vmul.f32 %v450, %v498
        %v818 = vmul.f32 %v450, %v502
        %v819 = vmul.f32 %v450, %v506
        %v820 = vmul.f32 %v450, %v510
        %v821 = vmul.f32 %v450, %v514
        %v822 = vmul.f32 %v450, %v518
        %v823 = vmul.f32 %v450, %v522
        %v824 = vmul.f32 %v450, %v526
        %v825 = vmul.f32 %v450, %v530
        %v826 = vmul.f32 %v450, %v534
        %v827 = vmul.f32 %v450, %v538
        %v828 = vmul.f32 %v450, %v542
        %v829 = vmul.f32 %v450, %v546
        %v830 = vmul.f32 %v450, %v550
        %v831 = vmul.f32 %v450, %v554
        %v832 = vmul.f32 %v450, %v558
        %v833 = vmul.f32 %v450, %v562
        %v834 = vmul.f32 %v450, %v566
        %v835 = vmul.f32 %v450, %v570
        %v836 = vmul.f32 %v450, %v574
        %v837 = vmul.f32 %v450, %v578
        %v838 = vmul.f32 %v450, %v582
        %v839 = vmul.f32 %v450, %v586
        %v840 = vmul.f32 %v450, %v590
        %v841 = vmul.f32 %v455, %v494
        %v842 = vmul.f32 %v455, %v498
        %v843 = vmul.f32 %v455, %v502
        %v844 = vmul.f32 %v455, %v506
        %v845 = vmul.f32 %v455, %v510
        %v846 = vmul.f32 %v455, %v514
        %v847 = vmul.f32 %v455, %v518
        %v848 = vmul.f32 %v455, %v522
        %v849 = vmul.f32 %v455, %v526
        %v850 = vmul.f32 %v455, %v530
        %v851 = vmul.f32 %v455, %v534
        %v852 = vmul.f32 %v455, %v538
        %v853 = vmul.f32 %v455, %v542
        %v854 = vmul.f32 %v455, %v546
        %v855 = vmul.f32 %v455, %v550
        %v856 = vmul.f32 %v455, %v554
        %v857 = vmul.f32 %v455, %v558
        %v858 = vmul.f32 %v455, %v562
        %v859 = vmul.f32 %v455, %v566
        %v860 = vmul.f32 %v455, %v570
        %v861 = vmul.f32 %v455, %v574
        %v862 = vmul.f32 %v455, %v578
        %v863 = vmul.f32 %v455, %v582
        %v864 = vmul.f32 %v455, %v586
        %v865 = vmul.f32 %v455, %v590
        %v866 = vmul.f32 %v460, %v494
        %v867 = vmul.f32 %v460, %v498
        %v868 = vmul.f32 %v460, %v502
        %v869 = vmul.f32 %v460, %v506
        %v870 = vmul.f32 %v460, %v510
        %v871 = vmul.f32 %v460, %v514
        %v872 = vmul.f32 %v460, %v518
        %v873 = vmul.f32 %v460, %v522
        %v874 = vmul.f32 %v460, %v526
        %v875 = vmul.f32 %v460, %v530
        %v876 = vmul.f32 %v460, %v534
        %v877 = vmul.f32 %v460, %v538
        %v878 = vmul.f32 %v460, %v542
        %v879 = vmul.f32 %v460, %v546
        %v880 = vmul.f32 %v460, %v550
        %v881 = vmul.f32 %v460, %v554
        %v882 = vmul.f32 %v460, %v558
        %v883 = vmul.f32 %v460, %v562
        %v884 = vmul.f32 %v460, %v566
        %v885 = vmul.f32 %v460, %v570
        %v886 = vmul.f32 %v460, %v574
        %v887 = vmul.f32 %v460, %v578
        %v888 = vmul.f32 %v460, %v582
        %v889 = vmul.f32 %v460, %v586
        %v890 = vmul.f32 %v460, %v590
        %v891 = vmul.f32 %v465, %v494
        %v892 = vmul.f32 %v465, %v498
        %v893 = vmul.f32 %v465, %v502
        %v894 = vmul.f32 %v465, %v506
        %v895 = vmul.f32 %v465, %v510
        %v896 = vmul.f32 %v465, %v514
        %v897 = vmul.f32 %v465, %v518
        %v898 = vmul.f32 %v465, %v522
        %v899 = vmul.f32 %v465, %v526
        %v900 = vmul.f32 %v465, %v530
        %v901 = vmul.f32 %v465, %v534
        %v902 = vmul.f32 %v465, %v538
        %v903 = vmul.f32 %v465, %v542
        %v904 = vmul.f32 %v465, %v546
        %v905 = vmul.f32 %v465, %v550
        %v906 = vmul.f32 %v465, %v554
        %v907 = vmul.f32 %v465, %v558
        %v908 = vmul.f32 %v465, %v562
        %v909 = vmul.f32 %v465, %v566
        %v910 = vmul.f32 %v465, %v570
        %v911 = vmul.f32 %v465, %v574
        %v912 = vmul.f32 %v465, %v578
        %v913 = vmul.f32 %v465, %v582
        %v914 = vmul.f32 %v465, %v586
        %v915 = vmul.f32 %v465, %v590
        %v916 = vmul.f32 %v470, %v494
        %v917 = vmul.f32 %v470, %v498
        %v918 = vmul.f32 %v470, %v502
        %v919 = vmul.f32 %v470, %v506
        %v920 = vmul.f32 %v470, %v510
        %v921 = vmul.f32 %v470, %v514
        %v922 = vmul.f32 %v470, %v518
        %v923 = vmul.f32 %v470, %v522
        %v924 = vmul.f32 %v470, %v526
        %v925 = vmul.f32 %v470, %v530
        %v926 = vmul.f32 %v470, %v534
        %v927 = vmul.f32 %v470, %v538
        %v928 = vmul.f32 %v470, %v542
        %v929 = vmul.f32 %v470, %v546
        %v930 = vmul.f32 %v470, %v550
        %v931 = vmul.f32 %v470, %v554
        %v932 = vmul.f32 %v470, %v558
        %v933 = vmul.f32 %v470, %v562
        %v934 = vmul.f32 %v470, %v566
        %v935 = vmul.f32 %v470, %v570
        %v936 = vmul.f32 %v470, %v574
        %v937 = vmul.f32 %v470, %v578
        %v938 = vmul.f32 %v470, %v582
        %v939 = vmul.f32 %v470, %v586
        %v940 = vmul.f32 %v470, %v590
        %v941 = vmul.f32 %v475, %v494
        %v942 = vmul.f32 %v475, %v498
        %v943 = vmul.f32 %v475, %v502
        %v944 = vmul.f32 %v475, %v506
        %v945 = vmul.f32 %v475, %v510
        %v946 = vmul.f32 %v475, %v514
        %v947 = vmul.f32 %v475, %v518
        %v948 = vmul.f32 %v475, %v522
        %v949 = vmul.f32 %v475, %v526
        %v950 = vmul.f32 %v475, %v530
        %v951 = vmul.f32 %v475, %v534
        %v952 = vmul.f32 %v475, %v538
        %v953 = vmul.f32 %v475, %v542
        %v954 = vmul.f32 %v475, %v546
        %v955 = vmul.f32 %v475, %v550
        %v956 = vmul.f32 %v475, %v554
        %v957 = vmul.f32 %v475, %v558
        %v958 = vmul.f32 %v475, %v562
        %v959 = vmul.f32 %v475, %v566
        %v960 = vmul.f32 %v475, %v570
        %v961 = vmul.f32 %v475, %v574
        %v962 = vmul.f32 %v475, %v578
        %v963 = vmul.f32 %v475, %v582
        %v964 = vmul.f32 %v475, %v586
        %v965 = vmul.f32 %v475, %v590
        %v966 = vmul.f32 %v480, %v494
        %v967 = vmul.f32 %v480, %v498
        %v968 = vmul.f32 %v480, %v502
        %v969 = vmul.f32 %v480, %v506
        %v970 = vmul.f32 %v480, %v510
        %v971 = vmul.f32 %v480, %v514
        %v972 = vmul.f32 %v480, %v518
        %v973 = vmul.f32 %v480, %v522
        %v974 = vmul.f32 %v480, %v526
        %v975 = vmul.f32 %v480, %v530
        %v976 = vmul.f32 %v480, %v534
        %v977 = vmul.f32 %v480, %v538
        %v978 = vmul.f32 %v480, %v542
        %v979 = vmul.f32 %v480, %v546
        %v980 = vmul.f32 %v480, %v550
        %v981 = vmul.f32 %v480, %v554
        %v982 = vmul.f32 %v480, %v558
        %v983 = vmul.f32 %v480, %v562
        %v984 = vmul.f32 %v480, %v566
        %v985 = vmul.f32 %v480, %v570
        %v986 = vmul.f32 %v480, %v574
        %v987 = vmul.f32 %v480, %v578
        %v988 = vmul.f32 %v480, %v582
        %v989 = vmul.f32 %v480, %v586
        %v990 = vmul.f32 %v480, %v590
        %v991 = vmul.f32 %v485, %v494
        %v992 = vmul.f32 %v485, %v498
        %v993 = vmul.f32 %v485, %v502
        %v994 = vmul.f32 %v485, %v506
        %v995 = vmul.f32 %v485, %v510
        %v996 = vmul.f32 %v485, %v514
        %v997 = vmul.f32 %v485, %v518
        %v998 = vmul.f32 %v485, %v522
        %v999 = vmul.f32 %v485, %v526
        %v1000 = vmul.f32 %v485, %v530
        %v1001 = vmul.f32 %v485, %v534
        %v1002 = vmul.f32 %v485, %v538
        %v1003 = vmul.f32 %v485, %v542
        %v1004 = vmul.f32 %v485, %v546
        %v1005 = vmul.f32 %v485, %v550
        %v1006 = vmul.f32 %v485, %v554
        %v1007 = vmul.f32 %v485, %v558
        %v1008 = vmul.f32 %v485, %v562
        %v1009 = vmul.f32 %v485, %v566
        %v1010 = vmul.f32 %v485, %v570
        %v1011 = vmul.f32 %v485, %v574
        %v1012 = vmul.f32 %v485, %v578
        %v1013 = vmul.f32 %v485, %v582
        %v1014 = vmul.f32 %v485, %v586
        %v1015 = vmul.f32 %v485, %v590
        %v1016 = vld [vmem:[%s351] sm:$0xff]
        %v1017 = vld [vmem:[%s351 + $0x8] sm:$0xff]
        %v1018 = vld [vmem:[%s351 + $0x10] sm:$0xff]
        %v1019 = vld [vmem:[%s351 + $0x18] sm:$0xff]
        %v1020 = vld [vmem:[%s351 + $0x20] sm:$0xff]
        %v1021 = vld [vmem:[%s351 + $0x28] sm:$0xff]
        %v1022 = vld [vmem:[%s351 + $0x30] sm:$0xff]
        %v1023 = vld [vmem:[%s351 + $0x38] sm:$0xff]
        %v1024 = vld [vmem:[%s351 + $0x40] sm:$0xff]
        %v1025 = vld [vmem:[%s351 + $0x48] sm:$0xff]
        %v1026 = vld [vmem:[%s351 + $0x50] sm:$0xff]
        %v1027 = vld [vmem:[%s351 + $0x58] sm:$0xff]
        %v1028 = vld [vmem:[%s351 + $0x60] sm:$0xf]
        %v1029 = vld [vmem:[%s351 + $0x64] sm:$0xff]
        %v1030 = vld [vmem:[%s351 + $0x6c] sm:$0xff]
        %v1031 = vld [vmem:[%s351 + $0x74] sm:$0xff]
        %v1032 = vld [vmem:[%s351 + $0x7c] sm:$0xff]
        %v1033 = vld [vmem:[%s351 + $0x84] sm:$0xff]
        %v1034 = vld [vmem:[%s351 + $0x8c] sm:$0xff]
        %v1035 = vld [vmem:[%s351 + $0x94] sm:$0xff]
        %v1036 = vld [vmem:[%s351 + $0x9c] sm:$0xff]
        %v1037 = vld [vmem:[%s351 + $0xa4] sm:$0xff]
        %v1038 = vld [vmem:[%s351 + $0xac] sm:$0xff]
        %v1039 = vld [vmem:[%s351 + $0xb4] sm:$0xff]
        %v1040 = vld [vmem:[%s351 + $0xbc] sm:$0xff]
        %v1041 = vld [vmem:[%s351 + $0xc4] sm:$0xf]
        %v1042 = vld [vmem:[%s351 + $0xc8] sm:$0xff]
        %v1043 = vld [vmem:[%s351 + $0xd0] sm:$0xff]
        %v1044 = vld [vmem:[%s351 + $0xd8] sm:$0xff]
        %v1045 = vld [vmem:[%s351 + $0xe0] sm:$0xff]
        %v1046 = vld [vmem:[%s351 + $0xe8] sm:$0xff]
        %v1047 = vld [vmem:[%s351 + $0xf0] sm:$0xff]
        %v1048 = vld [vmem:[%s351 + $0xf8] sm:$0xff]
        %v1049 = vld [vmem:[%s351 + $0x100] sm:$0xff]
        %v1050 = vld [vmem:[%s351 + $0x108] sm:$0xff]
        %v1051 = vld [vmem:[%s351 + $0x110] sm:$0xff]
        %v1052 = vld [vmem:[%s351 + $0x118] sm:$0xff]
        %v1053 = vld [vmem:[%s351 + $0x120] sm:$0xff]
        %v1054 = vld [vmem:[%s351 + $0x128] sm:$0xf]
        %v1055 = vld [vmem:[%s351 + $0x12c] sm:$0xff]
        %v1056 = vld [vmem:[%s351 + $0x134] sm:$0xff]
        %v1057 = vld [vmem:[%s351 + $0x13c] sm:$0xff]
        %v1058 = vld [vmem:[%s351 + $0x144] sm:$0xff]
        %v1059 = vld [vmem:[%s351 + $0x14c] sm:$0xff]
        %v1060 = vld [vmem:[%s351 + $0x154] sm:$0xff]
        %v1061 = vld [vmem:[%s351 + $0x15c] sm:$0xff]
        %v1062 = vld [vmem:[%s351 + $0x164] sm:$0xff]
        %v1063 = vld [vmem:[%s351 + $0x16c] sm:$0xff]
        %v1064 = vld [vmem:[%s351 + $0x174] sm:$0xff]
        %v1065 = vld [vmem:[%s351 + $0x17c] sm:$0xff]
        %v1066 = vld [vmem:[%s351 + $0x184] sm:$0xff]
        %v1067 = vld [vmem:[%s351 + $0x18c] sm:$0xf]
        %v1068 = vld [vmem:[%s351 + $0x190] sm:$0xff]
        %v1069 = vld [vmem:[%s351 + $0x198] sm:$0xff]
        %v1070 = vld [vmem:[%s351 + $0x1a0] sm:$0xff]
        %v1071 = vld [vmem:[%s351 + $0x1a8] sm:$0xff]
        %v1072 = vld [vmem:[%s351 + $0x1b0] sm:$0xff]
        %v1073 = vld [vmem:[%s351 + $0x1b8] sm:$0xff]
        %v1074 = vld [vmem:[%s351 + $0x1c0] sm:$0xff]
        %v1075 = vld [vmem:[%s351 + $0x1c8] sm:$0xff]
        %v1076 = vld [vmem:[%s351 + $0x1d0] sm:$0xff]
        %v1077 = vld [vmem:[%s351 + $0x1d8] sm:$0xff]
        %v1078 = vld [vmem:[%s351 + $0x1e0] sm:$0xff]
        %v1079 = vld [vmem:[%s351 + $0x1e8] sm:$0xff]
        %v1080 = vld [vmem:[%s351 + $0x1f0] sm:$0xf]
        %v1081 = vld [vmem:[%s351 + $0x1f4] sm:$0xff]
        %v1082 = vld [vmem:[%s351 + $0x1fc] sm:$0xff]
        %v1083 = vld [vmem:[%s351 + $0x204] sm:$0xff]
        %v1084 = vld [vmem:[%s351 + $0x20c] sm:$0xff]
        %v1085 = vld [vmem:[%s351 + $0x214] sm:$0xff]
        %v1086 = vld [vmem:[%s351 + $0x21c] sm:$0xff]
        %v1087 = vld [vmem:[%s351 + $0x224] sm:$0xff]
        %v1088 = vld [vmem:[%s351 + $0x22c] sm:$0xff]
        %v1089 = vld [vmem:[%s351 + $0x234] sm:$0xff]
        %v1090 = vld [vmem:[%s351 + $0x23c] sm:$0xff]
        %v1091 = vld [vmem:[%s351 + $0x244] sm:$0xff]
        %v1092 = vld [vmem:[%s351 + $0x24c] sm:$0xff]
        %v1093 = vld [vmem:[%s351 + $0x254] sm:$0xf]
        %v1094 = vld [vmem:[%s351 + $0x258] sm:$0xff]
        %v1095 = vld [vmem:[%s351 + $0x260] sm:$0xff]
        %v1096 = vld [vmem:[%s351 + $0x268] sm:$0xff]
        %v1097 = vld [vmem:[%s351 + $0x270] sm:$0xff]
        %v1098 = vld [vmem:[%s351 + $0x278] sm:$0xff]
        %v1099 = vld [vmem:[%s351 + $0x280] sm:$0xff]
        %v1100 = vld [vmem:[%s351 + $0x288] sm:$0xff]
        %v1101 = vld [vmem:[%s351 + $0x290] sm:$0xff]
        %v1102 = vld [vmem:[%s351 + $0x298] sm:$0xff]
        %v1103 = vld [vmem:[%s351 + $0x2a0] sm:$0xff]
        %v1104 = vld [vmem:[%s351 + $0x2a8] sm:$0xff]
        %v1105 = vld [vmem:[%s351 + $0x2b0] sm:$0xff]
        %v1106 = vld [vmem:[%s351 + $0x2b8] sm:$0xf]
        %v1107 = vld [vmem:[%s351 + $0x2bc] sm:$0xff]
        %v1108 = vld [vmem:[%s351 + $0x2c4] sm:$0xff]
        %v1109 = vld [vmem:[%s351 + $0x2cc] sm:$0xff]
        %v1110 = vld [vmem:[%s351 + $0x2d4] sm:$0xff]
        %v1111 = vld [vmem:[%s351 + $0x2dc] sm:$0xff]
        %v1112 = vld [vmem:[%s351 + $0x2e4] sm:$0xff]
        %v1113 = vld [vmem:[%s351 + $0x2ec] sm:$0xff]
        %v1114 = vld [vmem:[%s351 + $0x2f4] sm:$0xff]
        %v1115 = vld [vmem:[%s351 + $0x2fc] sm:$0xff]
        %v1116 = vld [vmem:[%s351 + $0x304] sm:$0xff]
        %v1117 = vld [vmem:[%s351 + $0x30c] sm:$0xff]
        %v1118 = vld [vmem:[%s351 + $0x314] sm:$0xff]
        %v1119 = vld [vmem:[%s351 + $0x31c] sm:$0xf]
        %v1120 = vld [vmem:[%s351 + $0x320] sm:$0xff]
        %v1121 = vld [vmem:[%s351 + $0x328] sm:$0xff]
        %v1122 = vld [vmem:[%s351 + $0x330] sm:$0xff]
        %v1123 = vld [vmem:[%s351 + $0x338] sm:$0xff]
        %v1124 = vld [vmem:[%s351 + $0x340] sm:$0xff]
        %v1125 = vld [vmem:[%s351 + $0x348] sm:$0xff]
        %v1126 = vld [vmem:[%s351 + $0x350] sm:$0xff]
        %v1127 = vld [vmem:[%s351 + $0x358] sm:$0xff]
        %v1128 = vld [vmem:[%s351 + $0x360] sm:$0xff]
        %v1129 = vld [vmem:[%s351 + $0x368] sm:$0xff]
        %v1130 = vld [vmem:[%s351 + $0x370] sm:$0xff]
        %v1131 = vld [vmem:[%s351 + $0x378] sm:$0xff]
        %v1132 = vld [vmem:[%s351 + $0x380] sm:$0xf]
        %v1133 = vld [vmem:[%s351 + $0x384] sm:$0xff]
        %v1134 = vld [vmem:[%s351 + $0x38c] sm:$0xff]
        %v1135 = vld [vmem:[%s351 + $0x394] sm:$0xff]
        %v1136 = vld [vmem:[%s351 + $0x39c] sm:$0xff]
        %v1137 = vld [vmem:[%s351 + $0x3a4] sm:$0xff]
        %v1138 = vld [vmem:[%s351 + $0x3ac] sm:$0xff]
        %v1139 = vld [vmem:[%s351 + $0x3b4] sm:$0xff]
        %v1140 = vld [vmem:[%s351 + $0x3bc] sm:$0xff]
        %v1141 = vld [vmem:[%s351 + $0x3c4] sm:$0xff]
        %v1142 = vld [vmem:[%s351 + $0x3cc] sm:$0xff]
        %v1143 = vld [vmem:[%s351 + $0x3d4] sm:$0xff]
        %v1144 = vld [vmem:[%s351 + $0x3dc] sm:$0xff]
        %v1145 = vld [vmem:[%s351 + $0x3e4] sm:$0xf]
        %v1146 = vld [vmem:[%s351 + $0x3e8] sm:$0xff]
        %v1147 = vld [vmem:[%s351 + $0x3f0] sm:$0xff]
        %v1148 = vld [vmem:[%s351 + $0x3f8] sm:$0xff]
        %v1149 = vld [vmem:[%s351 + $0x400] sm:$0xff]
        %v1150 = vld [vmem:[%s351 + $0x408] sm:$0xff]
        %v1151 = vld [vmem:[%s351 + $0x410] sm:$0xff]
        %v1152 = vld [vmem:[%s351 + $0x418] sm:$0xff]
        %v1153 = vld [vmem:[%s351 + $0x420] sm:$0xff]
        %v1154 = vld [vmem:[%s351 + $0x428] sm:$0xff]
        %v1155 = vld [vmem:[%s351 + $0x430] sm:$0xff]
        %v1156 = vld [vmem:[%s351 + $0x438] sm:$0xff]
        %v1157 = vld [vmem:[%s351 + $0x440] sm:$0xff]
        %v1158 = vld [vmem:[%s351 + $0x448] sm:$0xf]
        %v1159 = vld [vmem:[%s351 + $0x44c] sm:$0xff]
        %v1160 = vld [vmem:[%s351 + $0x454] sm:$0xff]
        %v1161 = vld [vmem:[%s351 + $0x45c] sm:$0xff]
        %v1162 = vld [vmem:[%s351 + $0x464] sm:$0xff]
        %v1163 = vld [vmem:[%s351 + $0x46c] sm:$0xff]
        %v1164 = vld [vmem:[%s351 + $0x474] sm:$0xff]
        %v1165 = vld [vmem:[%s351 + $0x47c] sm:$0xff]
        %v1166 = vld [vmem:[%s351 + $0x484] sm:$0xff]
        %v1167 = vld [vmem:[%s351 + $0x48c] sm:$0xff]
        %v1168 = vld [vmem:[%s351 + $0x494] sm:$0xff]
        %v1169 = vld [vmem:[%s351 + $0x49c] sm:$0xff]
        %v1170 = vld [vmem:[%s351 + $0x4a4] sm:$0xff]
        %v1171 = vld [vmem:[%s351 + $0x4ac] sm:$0xf]
        %v1172 = vld [vmem:[%s351 + $0x4b0] sm:$0xff]
        %v1173 = vld [vmem:[%s351 + $0x4b8] sm:$0xff]
        %v1174 = vld [vmem:[%s351 + $0x4c0] sm:$0xff]
        %v1175 = vld [vmem:[%s351 + $0x4c8] sm:$0xff]
        %v1176 = vld [vmem:[%s351 + $0x4d0] sm:$0xff]
        %v1177 = vld [vmem:[%s351 + $0x4d8] sm:$0xff]
        %v1178 = vld [vmem:[%s351 + $0x4e0] sm:$0xff]
        %v1179 = vld [vmem:[%s351 + $0x4e8] sm:$0xff]
        %v1180 = vld [vmem:[%s351 + $0x4f0] sm:$0xff]
        %v1181 = vld [vmem:[%s351 + $0x4f8] sm:$0xff]
        %v1182 = vld [vmem:[%s351 + $0x500] sm:$0xff]
        %v1183 = vld [vmem:[%s351 + $0x508] sm:$0xff]
        %v1184 = vld [vmem:[%s351 + $0x510] sm:$0xf]
        %v1185 = vld [vmem:[%s351 + $0x514] sm:$0xff]
        %v1186 = vld [vmem:[%s351 + $0x51c] sm:$0xff]
        %v1187 = vld [vmem:[%s351 + $0x524] sm:$0xff]
        %v1188 = vld [vmem:[%s351 + $0x52c] sm:$0xff]
        %v1189 = vld [vmem:[%s351 + $0x534] sm:$0xff]
        %v1190 = vld [vmem:[%s351 + $0x53c] sm:$0xff]
        %v1191 = vld [vmem:[%s351 + $0x544] sm:$0xff]
        %v1192 = vld [vmem:[%s351 + $0x54c] sm:$0xff]
        %v1193 = vld [vmem:[%s351 + $0x554] sm:$0xff]
        %v1194 = vld [vmem:[%s351 + $0x55c] sm:$0xff]
        %v1195 = vld [vmem:[%s351 + $0x564] sm:$0xff]
        %v1196 = vld [vmem:[%s351 + $0x56c] sm:$0xff]
        %v1197 = vld [vmem:[%s351 + $0x574] sm:$0xf]
        %v1198 = vld [vmem:[%s351 + $0x578] sm:$0xff]
        %v1199 = vld [vmem:[%s351 + $0x580] sm:$0xff]
        %v1200 = vld [vmem:[%s351 + $0x588] sm:$0xff]
        %v1201 = vld [vmem:[%s351 + $0x590] sm:$0xff]
        %v1202 = vld [vmem:[%s351 + $0x598] sm:$0xff]
        %v1203 = vld [vmem:[%s351 + $0x5a0] sm:$0xff]
        %v1204 = vld [vmem:[%s351 + $0x5a8] sm:$0xff]
        %v1205 = vld [vmem:[%s351 + $0x5b0] sm:$0xff]
        %v1206 = vld [vmem:[%s351 + $0x5b8] sm:$0xff]
        %v1207 = vld [vmem:[%s351 + $0x5c0] sm:$0xff]
        %v1208 = vld [vmem:[%s351 + $0x5c8] sm:$0xff]
        %v1209 = vld [vmem:[%s351 + $0x5d0] sm:$0xff]
        %v1210 = vld [vmem:[%s351 + $0x5d8] sm:$0xf]
        %v1211 = vld [vmem:[%s351 + $0x5dc] sm:$0xff]
        %v1212 = vld [vmem:[%s351 + $0x5e4] sm:$0xff]
        %v1213 = vld [vmem:[%s351 + $0x5ec] sm:$0xff]
        %v1214 = vld [vmem:[%s351 + $0x5f4] sm:$0xff]
        %v1215 = vld [vmem:[%s351 + $0x5fc] sm:$0xff]
        %v1216 = vld [vmem:[%s351 + $0x604] sm:$0xff]
        %v1217 = vld [vmem:[%s351 + $0x60c] sm:$0xff]
        %v1218 = vld [vmem:[%s351 + $0x614] sm:$0xff]
        %v1219 = vld [vmem:[%s351 + $0x61c] sm:$0xff]
        %v1220 = vld [vmem:[%s351 + $0x624] sm:$0xff]
        %v1221 = vld [vmem:[%s351 + $0x62c] sm:$0xff]
        %v1222 = vld [vmem:[%s351 + $0x634] sm:$0xff]
        %v1223 = vld [vmem:[%s351 + $0x63c] sm:$0xf]
        %v1224 = vunpack.c.l.bf16 %v1016
        %v1225 = vunpack.c.h.bf16 %v1016
        %v1226 = vunpack.c.l.bf16 %v1017
        %v1227 = vunpack.c.h.bf16 %v1017
        %v1228 = vunpack.c.l.bf16 %v1018
        %v1229 = vunpack.c.h.bf16 %v1018
        %v1230 = vunpack.c.l.bf16 %v1019
        %v1231 = vunpack.c.h.bf16 %v1019
        %v1232 = vunpack.c.l.bf16 %v1020
        %v1233 = vunpack.c.h.bf16 %v1020
        %v1234 = vunpack.c.l.bf16 %v1021
        %v1235 = vunpack.c.h.bf16 %v1021
        %v1236 = vunpack.c.l.bf16 %v1022
        %v1237 = vunpack.c.h.bf16 %v1022
        %v1238 = vunpack.c.l.bf16 %v1023
        %v1239 = vunpack.c.h.bf16 %v1023
        %v1240 = vunpack.c.l.bf16 %v1024
        %v1241 = vunpack.c.h.bf16 %v1024
        %v1242 = vunpack.c.l.bf16 %v1025
        %v1243 = vunpack.c.h.bf16 %v1025
        %v1244 = vunpack.c.l.bf16 %v1026
        %v1245 = vunpack.c.h.bf16 %v1026
        %v1246 = vunpack.c.l.bf16 %v1027
        %v1247 = vunpack.c.h.bf16 %v1027
        %v1248 = vunpack.c.l.bf16 %v1028
        %v1249 = vunpack.c.l.bf16 %v1029
        %v1250 = vunpack.c.h.bf16 %v1029
        %v1251 = vunpack.c.l.bf16 %v1030
        %v1252 = vunpack.c.h.bf16 %v1030
        %v1253 = vunpack.c.l.bf16 %v1031
        %v1254 = vunpack.c.h.bf16 %v1031
        %v1255 = vunpack.c.l.bf16 %v1032
        %v1256 = vunpack.c.h.bf16 %v1032
        %v1257 = vunpack.c.l.bf16 %v1033
        %v1258 = vunpack.c.h.bf16 %v1033
        %v1259 = vunpack.c.l.bf16 %v1034
        %v1260 = vunpack.c.h.bf16 %v1034
        %v1261 = vunpack.c.l.bf16 %v1035
        %v1262 = vunpack.c.h.bf16 %v1035
        %v1263 = vunpack.c.l.bf16 %v1036
        %v1264 = vunpack.c.h.bf16 %v1036
        %v1265 = vunpack.c.l.bf16 %v1037
        %v1266 = vunpack.c.h.bf16 %v1037
        %v1267 = vunpack.c.l.bf16 %v1038
        %v1268 = vunpack.c.h.bf16 %v1038
        %v1269 = vunpack.c.l.bf16 %v1039
        %v1270 = vunpack.c.h.bf16 %v1039
        %v1271 = vunpack.c.l.bf16 %v1040
        %v1272 = vunpack.c.h.bf16 %v1040
        %v1273 = vunpack.c.l.bf16 %v1041
        %v1274 = vunpack.c.l.bf16 %v1042
        %v1275 = vunpack.c.h.bf16 %v1042
        %v1276 = vunpack.c.l.bf16 %v1043
        %v1277 = vunpack.c.h.bf16 %v1043
        %v1278 = vunpack.c.l.bf16 %v1044
        %v1279 = vunpack.c.h.bf16 %v1044
        %v1280 = vunpack.c.l.bf16 %v1045
        %v1281 = vunpack.c.h.bf16 %v1045
        %v1282 = vunpack.c.l.bf16 %v1046
        %v1283 = vunpack.c.h.bf16 %v1046
        %v1284 = vunpack.c.l.bf16 %v1047
        %v1285 = vunpack.c.h.bf16 %v1047
        %v1286 = vunpack.c.l.bf16 %v1048
        %v1287 = vunpack.c.h.bf16 %v1048
        %v1288 = vunpack.c.l.bf16 %v1049
        %v1289 = vunpack.c.h.bf16 %v1049
        %v1290 = vunpack.c.l.bf16 %v1050
        %v1291 = vunpack.c.h.bf16 %v1050
        %v1292 = vunpack.c.l.bf16 %v1051
        %v1293 = vunpack.c.h.bf16 %v1051
        %v1294 = vunpack.c.l.bf16 %v1052
        %v1295 = vunpack.c.h.bf16 %v1052
        %v1296 = vunpack.c.l.bf16 %v1053
        %v1297 = vunpack.c.h.bf16 %v1053
        %v1298 = vunpack.c.l.bf16 %v1054
        %v1299 = vunpack.c.l.bf16 %v1055
        %v1300 = vunpack.c.h.bf16 %v1055
        %v1301 = vunpack.c.l.bf16 %v1056
        %v1302 = vunpack.c.h.bf16 %v1056
        %v1303 = vunpack.c.l.bf16 %v1057
        %v1304 = vunpack.c.h.bf16 %v1057
        %v1305 = vunpack.c.l.bf16 %v1058
        %v1306 = vunpack.c.h.bf16 %v1058
        %v1307 = vunpack.c.l.bf16 %v1059
        %v1308 = vunpack.c.h.bf16 %v1059
        %v1309 = vunpack.c.l.bf16 %v1060
        %v1310 = vunpack.c.h.bf16 %v1060
        %v1311 = vunpack.c.l.bf16 %v1061
        %v1312 = vunpack.c.h.bf16 %v1061
        %v1313 = vunpack.c.l.bf16 %v1062
        %v1314 = vunpack.c.h.bf16 %v1062
        %v1315 = vunpack.c.l.bf16 %v1063
        %v1316 = vunpack.c.h.bf16 %v1063
        %v1317 = vunpack.c.l.bf16 %v1064
        %v1318 = vunpack.c.h.bf16 %v1064
        %v1319 = vunpack.c.l.bf16 %v1065
        %v1320 = vunpack.c.h.bf16 %v1065
        %v1321 = vunpack.c.l.bf16 %v1066
        %v1322 = vunpack.c.h.bf16 %v1066
        %v1323 = vunpack.c.l.bf16 %v1067
        %v1324 = vunpack.c.l.bf16 %v1068
        %v1325 = vunpack.c.h.bf16 %v1068
        %v1326 = vunpack.c.l.bf16 %v1069
        %v1327 = vunpack.c.h.bf16 %v1069
        %v1328 = vunpack.c.l.bf16 %v1070
        %v1329 = vunpack.c.h.bf16 %v1070
        %v1330 = vunpack.c.l.bf16 %v1071
        %v1331 = vunpack.c.h.bf16 %v1071
        %v1332 = vunpack.c.l.bf16 %v1072
        %v1333 = vunpack.c.h.bf16 %v1072
        %v1334 = vunpack.c.l.bf16 %v1073
        %v1335 = vunpack.c.h.bf16 %v1073
        %v1336 = vunpack.c.l.bf16 %v1074
        %v1337 = vunpack.c.h.bf16 %v1074
        %v1338 = vunpack.c.l.bf16 %v1075
        %v1339 = vunpack.c.h.bf16 %v1075
        %v1340 = vunpack.c.l.bf16 %v1076
        %v1341 = vunpack.c.h.bf16 %v1076
        %v1342 = vunpack.c.l.bf16 %v1077
        %v1343 = vunpack.c.h.bf16 %v1077
        %v1344 = vunpack.c.l.bf16 %v1078
        %v1345 = vunpack.c.h.bf16 %v1078
        %v1346 = vunpack.c.l.bf16 %v1079
        %v1347 = vunpack.c.h.bf16 %v1079
        %v1348 = vunpack.c.l.bf16 %v1080
        %v1349 = vunpack.c.l.bf16 %v1081
        %v1350 = vunpack.c.h.bf16 %v1081
        %v1351 = vunpack.c.l.bf16 %v1082
        %v1352 = vunpack.c.h.bf16 %v1082
        %v1353 = vunpack.c.l.bf16 %v1083
        %v1354 = vunpack.c.h.bf16 %v1083
        %v1355 = vunpack.c.l.bf16 %v1084
        %v1356 = vunpack.c.h.bf16 %v1084
        %v1357 = vunpack.c.l.bf16 %v1085
        %v1358 = vunpack.c.h.bf16 %v1085
        %v1359 = vunpack.c.l.bf16 %v1086
        %v1360 = vunpack.c.h.bf16 %v1086
        %v1361 = vunpack.c.l.bf16 %v1087
        %v1362 = vunpack.c.h.bf16 %v1087
        %v1363 = vunpack.c.l.bf16 %v1088
        %v1364 = vunpack.c.h.bf16 %v1088
        %v1365 = vunpack.c.l.bf16 %v1089
        %v1366 = vunpack.c.h.bf16 %v1089
        %v1367 = vunpack.c.l.bf16 %v1090
        %v1368 = vunpack.c.h.bf16 %v1090
        %v1369 = vunpack.c.l.bf16 %v1091
        %v1370 = vunpack.c.h.bf16 %v1091
        %v1371 = vunpack.c.l.bf16 %v1092
        %v1372 = vunpack.c.h.bf16 %v1092
        %v1373 = vunpack.c.l.bf16 %v1093
        %v1374 = vunpack.c.l.bf16 %v1094
        %v1375 = vunpack.c.h.bf16 %v1094
        %v1376 = vunpack.c.l.bf16 %v1095
        %v1377 = vunpack.c.h.bf16 %v1095
        %v1378 = vunpack.c.l.bf16 %v1096
        %v1379 = vunpack.c.h.bf16 %v1096
        %v1380 = vunpack.c.l.bf16 %v1097
        %v1381 = vunpack.c.h.bf16 %v1097
        %v1382 = vunpack.c.l.bf16 %v1098
        %v1383 = vunpack.c.h.bf16 %v1098
        %v1384 = vunpack.c.l.bf16 %v1099
        %v1385 = vunpack.c.h.bf16 %v1099
        %v1386 = vunpack.c.l.bf16 %v1100
        %v1387 = vunpack.c.h.bf16 %v1100
        %v1388 = vunpack.c.l.bf16 %v1101
        %v1389 = vunpack.c.h.bf16 %v1101
        %v1390 = vunpack.c.l.bf16 %v1102
        %v1391 = vunpack.c.h.bf16 %v1102
        %v1392 = vunpack.c.l.bf16 %v1103
        %v1393 = vunpack.c.h.bf16 %v1103
        %v1394 = vunpack.c.l.bf16 %v1104
        %v1395 = vunpack.c.h.bf16 %v1104
        %v1396 = vunpack.c.l.bf16 %v1105
        %v1397 = vunpack.c.h.bf16 %v1105
        %v1398 = vunpack.c.l.bf16 %v1106
        %v1399 = vunpack.c.l.bf16 %v1107
        %v1400 = vunpack.c.h.bf16 %v1107
        %v1401 = vunpack.c.l.bf16 %v1108
        %v1402 = vunpack.c.h.bf16 %v1108
        %v1403 = vunpack.c.l.bf16 %v1109
        %v1404 = vunpack.c.h.bf16 %v1109
        %v1405 = vunpack.c.l.bf16 %v1110
        %v1406 = vunpack.c.h.bf16 %v1110
        %v1407 = vunpack.c.l.bf16 %v1111
        %v1408 = vunpack.c.h.bf16 %v1111
        %v1409 = vunpack.c.l.bf16 %v1112
        %v1410 = vunpack.c.h.bf16 %v1112
        %v1411 = vunpack.c.l.bf16 %v1113
        %v1412 = vunpack.c.h.bf16 %v1113
        %v1413 = vunpack.c.l.bf16 %v1114
        %v1414 = vunpack.c.h.bf16 %v1114
        %v1415 = vunpack.c.l.bf16 %v1115
        %v1416 = vunpack.c.h.bf16 %v1115
        %v1417 = vunpack.c.l.bf16 %v1116
        %v1418 = vunpack.c.h.bf16 %v1116
        %v1419 = vunpack.c.l.bf16 %v1117
        %v1420 = vunpack.c.h.bf16 %v1117
        %v1421 = vunpack.c.l.bf16 %v1118
        %v1422 = vunpack.c.h.bf16 %v1118
        %v1423 = vunpack.c.l.bf16 %v1119
        %v1424 = vunpack.c.l.bf16 %v1120
        %v1425 = vunpack.c.h.bf16 %v1120
        %v1426 = vunpack.c.l.bf16 %v1121
        %v1427 = vunpack.c.h.bf16 %v1121
        %v1428 = vunpack.c.l.bf16 %v1122
        %v1429 = vunpack.c.h.bf16 %v1122
        %v1430 = vunpack.c.l.bf16 %v1123
        %v1431 = vunpack.c.h.bf16 %v1123
        %v1432 = vunpack.c.l.bf16 %v1124
        %v1433 = vunpack.c.h.bf16 %v1124
        %v1434 = vunpack.c.l.bf16 %v1125
        %v1435 = vunpack.c.h.bf16 %v1125
        %v1436 = vunpack.c.l.bf16 %v1126
        %v1437 = vunpack.c.h.bf16 %v1126
        %v1438 = vunpack.c.l.bf16 %v1127
        %v1439 = vunpack.c.h.bf16 %v1127
        %v1440 = vunpack.c.l.bf16 %v1128
        %v1441 = vunpack.c.h.bf16 %v1128
        %v1442 = vunpack.c.l.bf16 %v1129
        %v1443 = vunpack.c.h.bf16 %v1129
        %v1444 = vunpack.c.l.bf16 %v1130
        %v1445 = vunpack.c.h.bf16 %v1130
        %v1446 = vunpack.c.l.bf16 %v1131
        %v1447 = vunpack.c.h.bf16 %v1131
        %v1448 = vunpack.c.l.bf16 %v1132
        %v1449 = vunpack.c.l.bf16 %v1133
        %v1450 = vunpack.c.h.bf16 %v1133
        %v1451 = vunpack.c.l.bf16 %v1134
        %v1452 = vunpack.c.h.bf16 %v1134
        %v1453 = vunpack.c.l.bf16 %v1135
        %v1454 = vunpack.c.h.bf16 %v1135
        %v1455 = vunpack.c.l.bf16 %v1136
        %v1456 = vunpack.c.h.bf16 %v1136
        %v1457 = vunpack.c.l.bf16 %v1137
        %v1458 = vunpack.c.h.bf16 %v1137
        %v1459 = vunpack.c.l.bf16 %v1138
        %v1460 = vunpack.c.h.bf16 %v1138
        %v1461 = vunpack.c.l.bf16 %v1139
        %v1462 = vunpack.c.h.bf16 %v1139
        %v1463 = vunpack.c.l.bf16 %v1140
        %v1464 = vunpack.c.h.bf16 %v1140
        %v1465 = vunpack.c.l.bf16 %v1141
        %v1466 = vunpack.c.h.bf16 %v1141
        %v1467 = vunpack.c.l.bf16 %v1142
        %v1468 = vunpack.c.h.bf16 %v1142
        %v1469 = vunpack.c.l.bf16 %v1143
        %v1470 = vunpack.c.h.bf16 %v1143
        %v1471 = vunpack.c.l.bf16 %v1144
        %v1472 = vunpack.c.h.bf16 %v1144
        %v1473 = vunpack.c.l.bf16 %v1145
        %v1474 = vunpack.c.l.bf16 %v1146
        %v1475 = vunpack.c.h.bf16 %v1146
        %v1476 = vunpack.c.l.bf16 %v1147
        %v1477 = vunpack.c.h.bf16 %v1147
        %v1478 = vunpack.c.l.bf16 %v1148
        %v1479 = vunpack.c.h.bf16 %v1148
        %v1480 = vunpack.c.l.bf16 %v1149
        %v1481 = vunpack.c.h.bf16 %v1149
        %v1482 = vunpack.c.l.bf16 %v1150
        %v1483 = vunpack.c.h.bf16 %v1150
        %v1484 = vunpack.c.l.bf16 %v1151
        %v1485 = vunpack.c.h.bf16 %v1151
        %v1486 = vunpack.c.l.bf16 %v1152
        %v1487 = vunpack.c.h.bf16 %v1152
        %v1488 = vunpack.c.l.bf16 %v1153
        %v1489 = vunpack.c.h.bf16 %v1153
        %v1490 = vunpack.c.l.bf16 %v1154
        %v1491 = vunpack.c.h.bf16 %v1154
        %v1492 = vunpack.c.l.bf16 %v1155
        %v1493 = vunpack.c.h.bf16 %v1155
        %v1494 = vunpack.c.l.bf16 %v1156
        %v1495 = vunpack.c.h.bf16 %v1156
        %v1496 = vunpack.c.l.bf16 %v1157
        %v1497 = vunpack.c.h.bf16 %v1157
        %v1498 = vunpack.c.l.bf16 %v1158
        %v1499 = vunpack.c.l.bf16 %v1159
        %v1500 = vunpack.c.h.bf16 %v1159
        %v1501 = vunpack.c.l.bf16 %v1160
        %v1502 = vunpack.c.h.bf16 %v1160
        %v1503 = vunpack.c.l.bf16 %v1161
        %v1504 = vunpack.c.h.bf16 %v1161
        %v1505 = vunpack.c.l.bf16 %v1162
        %v1506 = vunpack.c.h.bf16 %v1162
        %v1507 = vunpack.c.l.bf16 %v1163
        %v1508 = vunpack.c.h.bf16 %v1163
        %v1509 = vunpack.c.l.bf16 %v1164
        %v1510 = vunpack.c.h.bf16 %v1164
        %v1511 = vunpack.c.l.bf16 %v1165
        %v1512 = vunpack.c.h.bf16 %v1165
        %v1513 = vunpack.c.l.bf16 %v1166
        %v1514 = vunpack.c.h.bf16 %v1166
        %v1515 = vunpack.c.l.bf16 %v1167
        %v1516 = vunpack.c.h.bf16 %v1167
        %v1517 = vunpack.c.l.bf16 %v1168
        %v1518 = vunpack.c.h.bf16 %v1168
        %v1519 = vunpack.c.l.bf16 %v1169
        %v1520 = vunpack.c.h.bf16 %v1169
        %v1521 = vunpack.c.l.bf16 %v1170
        %v1522 = vunpack.c.h.bf16 %v1170
        %v1523 = vunpack.c.l.bf16 %v1171
        %v1524 = vunpack.c.l.bf16 %v1172
        %v1525 = vunpack.c.h.bf16 %v1172
        %v1526 = vunpack.c.l.bf16 %v1173
        %v1527 = vunpack.c.h.bf16 %v1173
        %v1528 = vunpack.c.l.bf16 %v1174
        %v1529 = vunpack.c.h.bf16 %v1174
        %v1530 = vunpack.c.l.bf16 %v1175
        %v1531 = vunpack.c.h.bf16 %v1175
        %v1532 = vunpack.c.l.bf16 %v1176
        %v1533 = vunpack.c.h.bf16 %v1176
        %v1534 = vunpack.c.l.bf16 %v1177
        %v1535 = vunpack.c.h.bf16 %v1177
        %v1536 = vunpack.c.l.bf16 %v1178
        %v1537 = vunpack.c.h.bf16 %v1178
        %v1538 = vunpack.c.l.bf16 %v1179
        %v1539 = vunpack.c.h.bf16 %v1179
        %v1540 = vunpack.c.l.bf16 %v1180
        %v1541 = vunpack.c.h.bf16 %v1180
        %v1542 = vunpack.c.l.bf16 %v1181
        %v1543 = vunpack.c.h.bf16 %v1181
        %v1544 = vunpack.c.l.bf16 %v1182
        %v1545 = vunpack.c.h.bf16 %v1182
        %v1546 = vunpack.c.l.bf16 %v1183
        %v1547 = vunpack.c.h.bf16 %v1183
        %v1548 = vunpack.c.l.bf16 %v1184
        %v1549 = vunpack.c.l.bf16 %v1185
        %v1550 = vunpack.c.h.bf16 %v1185
        %v1551 = vunpack.c.l.bf16 %v1186
        %v1552 = vunpack.c.h.bf16 %v1186
        %v1553 = vunpack.c.l.bf16 %v1187
        %v1554 = vunpack.c.h.bf16 %v1187
        %v1555 = vunpack.c.l.bf16 %v1188
        %v1556 = vunpack.c.h.bf16 %v1188
        %v1557 = vunpack.c.l.bf16 %v1189
        %v1558 = vunpack.c.h.bf16 %v1189
        %v1559 = vunpack.c.l.bf16 %v1190
        %v1560 = vunpack.c.h.bf16 %v1190
        %v1561 = vunpack.c.l.bf16 %v1191
        %v1562 = vunpack.c.h.bf16 %v1191
        %v1563 = vunpack.c.l.bf16 %v1192
        %v1564 = vunpack.c.h.bf16 %v1192
        %v1565 = vunpack.c.l.bf16 %v1193
        %v1566 = vunpack.c.h.bf16 %v1193
        %v1567 = vunpack.c.l.bf16 %v1194
        %v1568 = vunpack.c.h.bf16 %v1194
        %v1569 = vunpack.c.l.bf16 %v1195
        %v1570 = vunpack.c.h.bf16 %v1195
        %v1571 = vunpack.c.l.bf16 %v1196
        %v1572 = vunpack.c.h.bf16 %v1196
        %v1573 = vunpack.c.l.bf16 %v1197
        %v1574 = vunpack.c.l.bf16 %v1198
        %v1575 = vunpack.c.h.bf16 %v1198
        %v1576 = vunpack.c.l.bf16 %v1199
        %v1577 = vunpack.c.h.bf16 %v1199
        %v1578 = vunpack.c.l.bf16 %v1200
        %v1579 = vunpack.c.h.bf16 %v1200
        %v1580 = vunpack.c.l.bf16 %v1201
        %v1581 = vunpack.c.h.bf16 %v1201
        %v1582 = vunpack.c.l.bf16 %v1202
        %v1583 = vunpack.c.h.bf16 %v1202
        %v1584 = vunpack.c.l.bf16 %v1203
        %v1585 = vunpack.c.h.bf16 %v1203
        %v1586 = vunpack.c.l.bf16 %v1204
        %v1587 = vunpack.c.h.bf16 %v1204
        %v1588 = vunpack.c.l.bf16 %v1205
        %v1589 = vunpack.c.h.bf16 %v1205
        %v1590 = vunpack.c.l.bf16 %v1206
        %v1591 = vunpack.c.h.bf16 %v1206
        %v1592 = vunpack.c.l.bf16 %v1207
        %v1593 = vunpack.c.h.bf16 %v1207
        %v1594 = vunpack.c.l.bf16 %v1208
        %v1595 = vunpack.c.h.bf16 %v1208
        %v1596 = vunpack.c.l.bf16 %v1209
        %v1597 = vunpack.c.h.bf16 %v1209
        %v1598 = vunpack.c.l.bf16 %v1210
        %v1599 = vunpack.c.l.bf16 %v1211
        %v1600 = vunpack.c.h.bf16 %v1211
        %v1601 = vunpack.c.l.bf16 %v1212
        %v1602 = vunpack.c.h.bf16 %v1212
        %v1603 = vunpack.c.l.bf16 %v1213
        %v1604 = vunpack.c.h.bf16 %v1213
        %v1605 = vunpack.c.l.bf16 %v1214
        %v1606 = vunpack.c.h.bf16 %v1214
        %v1607 = vunpack.c.l.bf16 %v1215
        %v1608 = vunpack.c.h.bf16 %v1215
        %v1609 = vunpack.c.l.bf16 %v1216
        %v1610 = vunpack.c.h.bf16 %v1216
        %v1611 = vunpack.c.l.bf16 %v1217
        %v1612 = vunpack.c.h.bf16 %v1217
        %v1613 = vunpack.c.l.bf16 %v1218
        %v1614 = vunpack.c.h.bf16 %v1218
        %v1615 = vunpack.c.l.bf16 %v1219
        %v1616 = vunpack.c.h.bf16 %v1219
        %v1617 = vunpack.c.l.bf16 %v1220
        %v1618 = vunpack.c.h.bf16 %v1220
        %v1619 = vunpack.c.l.bf16 %v1221
        %v1620 = vunpack.c.h.bf16 %v1221
        %v1621 = vunpack.c.l.bf16 %v1222
        %v1622 = vunpack.c.h.bf16 %v1222
        %v1623 = vunpack.c.l.bf16 %v1223
        %v1624 = vld [vmem:[%s358] sm:$0xff]
        %v1625 = vld [vmem:[%s358 + $0x8] sm:$0xff]
        %v1626 = vld [vmem:[%s358 + $0x10] sm:$0xff]
        %v1627 = vld [vmem:[%s358 + $0x18] sm:$0xff]
        %v1628 = vld [vmem:[%s358 + $0x20] sm:$0xff]
        %v1629 = vld [vmem:[%s358 + $0x28] sm:$0xff]
        %v1630 = vld [vmem:[%s358 + $0x30] sm:$0xff]
        %v1631 = vld [vmem:[%s358 + $0x38] sm:$0xff]
        %v1632 = vld [vmem:[%s358 + $0x40] sm:$0xff]
        %v1633 = vld [vmem:[%s358 + $0x48] sm:$0xff]
        %v1634 = vld [vmem:[%s358 + $0x50] sm:$0xff]
        %v1635 = vld [vmem:[%s358 + $0x58] sm:$0xff]
        %v1636 = vld [vmem:[%s358 + $0x60] sm:$0xf]
        %v1637 = vld [vmem:[%s358 + $0x64] sm:$0xff]
        %v1638 = vld [vmem:[%s358 + $0x6c] sm:$0xff]
        %v1639 = vld [vmem:[%s358 + $0x74] sm:$0xff]
        %v1640 = vld [vmem:[%s358 + $0x7c] sm:$0xff]
        %v1641 = vld [vmem:[%s358 + $0x84] sm:$0xff]
        %v1642 = vld [vmem:[%s358 + $0x8c] sm:$0xff]
        %v1643 = vld [vmem:[%s358 + $0x94] sm:$0xff]
        %v1644 = vld [vmem:[%s358 + $0x9c] sm:$0xff]
        %v1645 = vld [vmem:[%s358 + $0xa4] sm:$0xff]
        %v1646 = vld [vmem:[%s358 + $0xac] sm:$0xff]
        %v1647 = vld [vmem:[%s358 + $0xb4] sm:$0xff]
        %v1648 = vld [vmem:[%s358 + $0xbc] sm:$0xff]
        %v1649 = vld [vmem:[%s358 + $0xc4] sm:$0xf]
        %v1650 = vld [vmem:[%s358 + $0xc8] sm:$0xff]
        %v1651 = vld [vmem:[%s358 + $0xd0] sm:$0xff]
        %v1652 = vld [vmem:[%s358 + $0xd8] sm:$0xff]
        %v1653 = vld [vmem:[%s358 + $0xe0] sm:$0xff]
        %v1654 = vld [vmem:[%s358 + $0xe8] sm:$0xff]
        %v1655 = vld [vmem:[%s358 + $0xf0] sm:$0xff]
        %v1656 = vld [vmem:[%s358 + $0xf8] sm:$0xff]
        %v1657 = vld [vmem:[%s358 + $0x100] sm:$0xff]
        %v1658 = vld [vmem:[%s358 + $0x108] sm:$0xff]
        %v1659 = vld [vmem:[%s358 + $0x110] sm:$0xff]
        %v1660 = vld [vmem:[%s358 + $0x118] sm:$0xff]
        %v1661 = vld [vmem:[%s358 + $0x120] sm:$0xff]
        %v1662 = vld [vmem:[%s358 + $0x128] sm:$0xf]
        %v1663 = vld [vmem:[%s358 + $0x12c] sm:$0xff]
        %v1664 = vld [vmem:[%s358 + $0x134] sm:$0xff]
        %v1665 = vld [vmem:[%s358 + $0x13c] sm:$0xff]
        %v1666 = vld [vmem:[%s358 + $0x144] sm:$0xff]
        %v1667 = vld [vmem:[%s358 + $0x14c] sm:$0xff]
        %v1668 = vld [vmem:[%s358 + $0x154] sm:$0xff]
        %v1669 = vld [vmem:[%s358 + $0x15c] sm:$0xff]
        %v1670 = vld [vmem:[%s358 + $0x164] sm:$0xff]
        %v1671 = vld [vmem:[%s358 + $0x16c] sm:$0xff]
        %v1672 = vld [vmem:[%s358 + $0x174] sm:$0xff]
        %v1673 = vld [vmem:[%s358 + $0x17c] sm:$0xff]
        %v1674 = vld [vmem:[%s358 + $0x184] sm:$0xff]
        %v1675 = vld [vmem:[%s358 + $0x18c] sm:$0xf]
        %v1676 = vld [vmem:[%s358 + $0x190] sm:$0xff]
        %v1677 = vld [vmem:[%s358 + $0x198] sm:$0xff]
        %v1678 = vld [vmem:[%s358 + $0x1a0] sm:$0xff]
        %v1679 = vld [vmem:[%s358 + $0x1a8] sm:$0xff]
        %v1680 = vld [vmem:[%s358 + $0x1b0] sm:$0xff]
        %v1681 = vld [vmem:[%s358 + $0x1b8] sm:$0xff]
        %v1682 = vld [vmem:[%s358 + $0x1c0] sm:$0xff]
        %v1683 = vld [vmem:[%s358 + $0x1c8] sm:$0xff]
        %v1684 = vld [vmem:[%s358 + $0x1d0] sm:$0xff]
        %v1685 = vld [vmem:[%s358 + $0x1d8] sm:$0xff]
        %v1686 = vld [vmem:[%s358 + $0x1e0] sm:$0xff]
        %v1687 = vld [vmem:[%s358 + $0x1e8] sm:$0xff]
        %v1688 = vld [vmem:[%s358 + $0x1f0] sm:$0xf]
        %v1689 = vld [vmem:[%s358 + $0x1f4] sm:$0xff]
        %v1690 = vld [vmem:[%s358 + $0x1fc] sm:$0xff]
        %v1691 = vld [vmem:[%s358 + $0x204] sm:$0xff]
        %v1692 = vld [vmem:[%s358 + $0x20c] sm:$0xff]
        %v1693 = vld [vmem:[%s358 + $0x214] sm:$0xff]
        %v1694 = vld [vmem:[%s358 + $0x21c] sm:$0xff]
        %v1695 = vld [vmem:[%s358 + $0x224] sm:$0xff]
        %v1696 = vld [vmem:[%s358 + $0x22c] sm:$0xff]
        %v1697 = vld [vmem:[%s358 + $0x234] sm:$0xff]
        %v1698 = vld [vmem:[%s358 + $0x23c] sm:$0xff]
        %v1699 = vld [vmem:[%s358 + $0x244] sm:$0xff]
        %v1700 = vld [vmem:[%s358 + $0x24c] sm:$0xff]
        %v1701 = vld [vmem:[%s358 + $0x254] sm:$0xf]
        %v1702 = vld [vmem:[%s358 + $0x258] sm:$0xff]
        %v1703 = vld [vmem:[%s358 + $0x260] sm:$0xff]
        %v1704 = vld [vmem:[%s358 + $0x268] sm:$0xff]
        %v1705 = vld [vmem:[%s358 + $0x270] sm:$0xff]
        %v1706 = vld [vmem:[%s358 + $0x278] sm:$0xff]
        %v1707 = vld [vmem:[%s358 + $0x280] sm:$0xff]
        %v1708 = vld [vmem:[%s358 + $0x288] sm:$0xff]
        %v1709 = vld [vmem:[%s358 + $0x290] sm:$0xff]
        %v1710 = vld [vmem:[%s358 + $0x298] sm:$0xff]
        %v1711 = vld [vmem:[%s358 + $0x2a0] sm:$0xff]
        %v1712 = vld [vmem:[%s358 + $0x2a8] sm:$0xff]
        %v1713 = vld [vmem:[%s358 + $0x2b0] sm:$0xff]
        %v1714 = vld [vmem:[%s358 + $0x2b8] sm:$0xf]
        %v1715 = vld [vmem:[%s358 + $0x2bc] sm:$0xff]
        %v1716 = vld [vmem:[%s358 + $0x2c4] sm:$0xff]
        %v1717 = vld [vmem:[%s358 + $0x2cc] sm:$0xff]
        %v1718 = vld [vmem:[%s358 + $0x2d4] sm:$0xff]
        %v1719 = vld [vmem:[%s358 + $0x2dc] sm:$0xff]
        %v1720 = vld [vmem:[%s358 + $0x2e4] sm:$0xff]
        %v1721 = vld [vmem:[%s358 + $0x2ec] sm:$0xff]
        %v1722 = vld [vmem:[%s358 + $0x2f4] sm:$0xff]
        %v1723 = vld [vmem:[%s358 + $0x2fc] sm:$0xff]
        %v1724 = vld [vmem:[%s358 + $0x304] sm:$0xff]
        %v1725 = vld [vmem:[%s358 + $0x30c] sm:$0xff]
        %v1726 = vld [vmem:[%s358 + $0x314] sm:$0xff]
        %v1727 = vld [vmem:[%s358 + $0x31c] sm:$0xf]
        %v1728 = vld [vmem:[%s358 + $0x320] sm:$0xff]
        %v1729 = vld [vmem:[%s358 + $0x328] sm:$0xff]
        %v1730 = vld [vmem:[%s358 + $0x330] sm:$0xff]
        %v1731 = vld [vmem:[%s358 + $0x338] sm:$0xff]
        %v1732 = vld [vmem:[%s358 + $0x340] sm:$0xff]
        %v1733 = vld [vmem:[%s358 + $0x348] sm:$0xff]
        %v1734 = vld [vmem:[%s358 + $0x350] sm:$0xff]
        %v1735 = vld [vmem:[%s358 + $0x358] sm:$0xff]
        %v1736 = vld [vmem:[%s358 + $0x360] sm:$0xff]
        %v1737 = vld [vmem:[%s358 + $0x368] sm:$0xff]
        %v1738 = vld [vmem:[%s358 + $0x370] sm:$0xff]
        %v1739 = vld [vmem:[%s358 + $0x378] sm:$0xff]
        %v1740 = vld [vmem:[%s358 + $0x380] sm:$0xf]
        %v1741 = vld [vmem:[%s358 + $0x384] sm:$0xff]
        %v1742 = vld [vmem:[%s358 + $0x38c] sm:$0xff]
        %v1743 = vld [vmem:[%s358 + $0x394] sm:$0xff]
        %v1744 = vld [vmem:[%s358 + $0x39c] sm:$0xff]
        %v1745 = vld [vmem:[%s358 + $0x3a4] sm:$0xff]
        %v1746 = vld [vmem:[%s358 + $0x3ac] sm:$0xff]
        %v1747 = vld [vmem:[%s358 + $0x3b4] sm:$0xff]
        %v1748 = vld [vmem:[%s358 + $0x3bc] sm:$0xff]
        %v1749 = vld [vmem:[%s358 + $0x3c4] sm:$0xff]
        %v1750 = vld [vmem:[%s358 + $0x3cc] sm:$0xff]
        %v1751 = vld [vmem:[%s358 + $0x3d4] sm:$0xff]
        %v1752 = vld [vmem:[%s358 + $0x3dc] sm:$0xff]
        %v1753 = vld [vmem:[%s358 + $0x3e4] sm:$0xf]
        %v1754 = vld [vmem:[%s358 + $0x3e8] sm:$0xff]
        %v1755 = vld [vmem:[%s358 + $0x3f0] sm:$0xff]
        %v1756 = vld [vmem:[%s358 + $0x3f8] sm:$0xff]
        %v1757 = vld [vmem:[%s358 + $0x400] sm:$0xff]
        %v1758 = vld [vmem:[%s358 + $0x408] sm:$0xff]
        %v1759 = vld [vmem:[%s358 + $0x410] sm:$0xff]
        %v1760 = vld [vmem:[%s358 + $0x418] sm:$0xff]
        %v1761 = vld [vmem:[%s358 + $0x420] sm:$0xff]
        %v1762 = vld [vmem:[%s358 + $0x428] sm:$0xff]
        %v1763 = vld [vmem:[%s358 + $0x430] sm:$0xff]
        %v1764 = vld [vmem:[%s358 + $0x438] sm:$0xff]
        %v1765 = vld [vmem:[%s358 + $0x440] sm:$0xff]
        %v1766 = vld [vmem:[%s358 + $0x448] sm:$0xf]
        %v1767 = vld [vmem:[%s358 + $0x44c] sm:$0xff]
        %v1768 = vld [vmem:[%s358 + $0x454] sm:$0xff]
        %v1769 = vld [vmem:[%s358 + $0x45c] sm:$0xff]
        %v1770 = vld [vmem:[%s358 + $0x464] sm:$0xff]
        %v1771 = vld [vmem:[%s358 + $0x46c] sm:$0xff]
        %v1772 = vld [vmem:[%s358 + $0x474] sm:$0xff]
        %v1773 = vld [vmem:[%s358 + $0x47c] sm:$0xff]
        %v1774 = vld [vmem:[%s358 + $0x484] sm:$0xff]
        %v1775 = vld [vmem:[%s358 + $0x48c] sm:$0xff]
        %v1776 = vld [vmem:[%s358 + $0x494] sm:$0xff]
        %v1777 = vld [vmem:[%s358 + $0x49c] sm:$0xff]
        %v1778 = vld [vmem:[%s358 + $0x4a4] sm:$0xff]
        %v1779 = vld [vmem:[%s358 + $0x4ac] sm:$0xf]
        %v1780 = vld [vmem:[%s358 + $0x4b0] sm:$0xff]
        %v1781 = vld [vmem:[%s358 + $0x4b8] sm:$0xff]
        %v1782 = vld [vmem:[%s358 + $0x4c0] sm:$0xff]
        %v1783 = vld [vmem:[%s358 + $0x4c8] sm:$0xff]
        %v1784 = vld [vmem:[%s358 + $0x4d0] sm:$0xff]
        %v1785 = vld [vmem:[%s358 + $0x4d8] sm:$0xff]
        %v1786 = vld [vmem:[%s358 + $0x4e0] sm:$0xff]
        %v1787 = vld [vmem:[%s358 + $0x4e8] sm:$0xff]
        %v1788 = vld [vmem:[%s358 + $0x4f0] sm:$0xff]
        %v1789 = vld [vmem:[%s358 + $0x4f8] sm:$0xff]
        %v1790 = vld [vmem:[%s358 + $0x500] sm:$0xff]
        %v1791 = vld [vmem:[%s358 + $0x508] sm:$0xff]
        %v1792 = vld [vmem:[%s358 + $0x510] sm:$0xf]
        %v1793 = vld [vmem:[%s358 + $0x514] sm:$0xff]
        %v1794 = vld [vmem:[%s358 + $0x51c] sm:$0xff]
        %v1795 = vld [vmem:[%s358 + $0x524] sm:$0xff]
        %v1796 = vld [vmem:[%s358 + $0x52c] sm:$0xff]
        %v1797 = vld [vmem:[%s358 + $0x534] sm:$0xff]
        %v1798 = vld [vmem:[%s358 + $0x53c] sm:$0xff]
        %v1799 = vld [vmem:[%s358 + $0x544] sm:$0xff]
        %v1800 = vld [vmem:[%s358 + $0x54c] sm:$0xff]
        %v1801 = vld [vmem:[%s358 + $0x554] sm:$0xff]
        %v1802 = vld [vmem:[%s358 + $0x55c] sm:$0xff]
        %v1803 = vld [vmem:[%s358 + $0x564] sm:$0xff]
        %v1804 = vld [vmem:[%s358 + $0x56c] sm:$0xff]
        %v1805 = vld [vmem:[%s358 + $0x574] sm:$0xf]
        %v1806 = vld [vmem:[%s358 + $0x578] sm:$0xff]
        %v1807 = vld [vmem:[%s358 + $0x580] sm:$0xff]
        %v1808 = vld [vmem:[%s358 + $0x588] sm:$0xff]
        %v1809 = vld [vmem:[%s358 + $0x590] sm:$0xff]
        %v1810 = vld [vmem:[%s358 + $0x598] sm:$0xff]
        %v1811 = vld [vmem:[%s358 + $0x5a0] sm:$0xff]
        %v1812 = vld [vmem:[%s358 + $0x5a8] sm:$0xff]
        %v1813 = vld [vmem:[%s358 + $0x5b0] sm:$0xff]
        %v1814 = vld [vmem:[%s358 + $0x5b8] sm:$0xff]
        %v1815 = vld [vmem:[%s358 + $0x5c0] sm:$0xff]
        %v1816 = vld [vmem:[%s358 + $0x5c8] sm:$0xff]
        %v1817 = vld [vmem:[%s358 + $0x5d0] sm:$0xff]
        %v1818 = vld [vmem:[%s358 + $0x5d8] sm:$0xf]
        %v1819 = vld [vmem:[%s358 + $0x5dc] sm:$0xff]
        %v1820 = vld [vmem:[%s358 + $0x5e4] sm:$0xff]
        %v1821 = vld [vmem:[%s358 + $0x5ec] sm:$0xff]
        %v1822 = vld [vmem:[%s358 + $0x5f4] sm:$0xff]
        %v1823 = vld [vmem:[%s358 + $0x5fc] sm:$0xff]
        %v1824 = vld [vmem:[%s358 + $0x604] sm:$0xff]
        %v1825 = vld [vmem:[%s358 + $0x60c] sm:$0xff]
        %v1826 = vld [vmem:[%s358 + $0x614] sm:$0xff]
        %v1827 = vld [vmem:[%s358 + $0x61c] sm:$0xff]
        %v1828 = vld [vmem:[%s358 + $0x624] sm:$0xff]
        %v1829 = vld [vmem:[%s358 + $0x62c] sm:$0xff]
        %v1830 = vld [vmem:[%s358 + $0x634] sm:$0xff]
        %v1831 = vld [vmem:[%s358 + $0x63c] sm:$0xf]
        %v1832 = vunpack.c.l.bf16 %v1624
        %v1833 = vunpack.c.h.bf16 %v1624
        %v1834 = vunpack.c.l.bf16 %v1625
        %v1835 = vunpack.c.h.bf16 %v1625
        %v1836 = vunpack.c.l.bf16 %v1626
        %v1837 = vunpack.c.h.bf16 %v1626
        %v1838 = vunpack.c.l.bf16 %v1627
        %v1839 = vunpack.c.h.bf16 %v1627
        %v1840 = vunpack.c.l.bf16 %v1628
        %v1841 = vunpack.c.h.bf16 %v1628
        %v1842 = vunpack.c.l.bf16 %v1629
        %v1843 = vunpack.c.h.bf16 %v1629
        %v1844 = vunpack.c.l.bf16 %v1630
        %v1845 = vunpack.c.h.bf16 %v1630
        %v1846 = vunpack.c.l.bf16 %v1631
        %v1847 = vunpack.c.h.bf16 %v1631
        %v1848 = vunpack.c.l.bf16 %v1632
        %v1849 = vunpack.c.h.bf16 %v1632
        %v1850 = vunpack.c.l.bf16 %v1633
        %v1851 = vunpack.c.h.bf16 %v1633
        %v1852 = vunpack.c.l.bf16 %v1634
        %v1853 = vunpack.c.h.bf16 %v1634
        %v1854 = vunpack.c.l.bf16 %v1635
        %v1855 = vunpack.c.h.bf16 %v1635
        %v1856 = vunpack.c.l.bf16 %v1636
        %v1857 = vunpack.c.l.bf16 %v1637
        %v1858 = vunpack.c.h.bf16 %v1637
        %v1859 = vunpack.c.l.bf16 %v1638
        %v1860 = vunpack.c.h.bf16 %v1638
        %v1861 = vunpack.c.l.bf16 %v1639
        %v1862 = vunpack.c.h.bf16 %v1639
        %v1863 = vunpack.c.l.bf16 %v1640
        %v1864 = vunpack.c.h.bf16 %v1640
        %v1865 = vunpack.c.l.bf16 %v1641
        %v1866 = vunpack.c.h.bf16 %v1641
        %v1867 = vunpack.c.l.bf16 %v1642
        %v1868 = vunpack.c.h.bf16 %v1642
        %v1869 = vunpack.c.l.bf16 %v1643
        %v1870 = vunpack.c.h.bf16 %v1643
        %v1871 = vunpack.c.l.bf16 %v1644
        %v1872 = vunpack.c.h.bf16 %v1644
        %v1873 = vunpack.c.l.bf16 %v1645
        %v1874 = vunpack.c.h.bf16 %v1645
        %v1875 = vunpack.c.l.bf16 %v1646
        %v1876 = vunpack.c.h.bf16 %v1646
        %v1877 = vunpack.c.l.bf16 %v1647
        %v1878 = vunpack.c.h.bf16 %v1647
        %v1879 = vunpack.c.l.bf16 %v1648
        %v1880 = vunpack.c.h.bf16 %v1648
        %v1881 = vunpack.c.l.bf16 %v1649
        %v1882 = vunpack.c.l.bf16 %v1650
        %v1883 = vunpack.c.h.bf16 %v1650
        %v1884 = vunpack.c.l.bf16 %v1651
        %v1885 = vunpack.c.h.bf16 %v1651
        %v1886 = vunpack.c.l.bf16 %v1652
        %v1887 = vunpack.c.h.bf16 %v1652
        %v1888 = vunpack.c.l.bf16 %v1653
        %v1889 = vunpack.c.h.bf16 %v1653
        %v1890 = vunpack.c.l.bf16 %v1654
        %v1891 = vunpack.c.h.bf16 %v1654
        %v1892 = vunpack.c.l.bf16 %v1655
        %v1893 = vunpack.c.h.bf16 %v1655
        %v1894 = vunpack.c.l.bf16 %v1656
        %v1895 = vunpack.c.h.bf16 %v1656
        %v1896 = vunpack.c.l.bf16 %v1657
        %v1897 = vunpack.c.h.bf16 %v1657
        %v1898 = vunpack.c.l.bf16 %v1658
        %v1899 = vunpack.c.h.bf16 %v1658
        %v1900 = vunpack.c.l.bf16 %v1659
        %v1901 = vunpack.c.h.bf16 %v1659
        %v1902 = vunpack.c.l.bf16 %v1660
        %v1903 = vunpack.c.h.bf16 %v1660
        %v1904 = vunpack.c.l.bf16 %v1661
        %v1905 = vunpack.c.h.bf16 %v1661
        %v1906 = vunpack.c.l.bf16 %v1662
        %v1907 = vunpack.c.l.bf16 %v1663
        %v1908 = vunpack.c.h.bf16 %v1663
        %v1909 = vunpack.c.l.bf16 %v1664
        %v1910 = vunpack.c.h.bf16 %v1664
        %v1911 = vunpack.c.l.bf16 %v1665
        %v1912 = vunpack.c.h.bf16 %v1665
        %v1913 = vunpack.c.l.bf16 %v1666
        %v1914 = vunpack.c.h.bf16 %v1666
        %v1915 = vunpack.c.l.bf16 %v1667
        %v1916 = vunpack.c.h.bf16 %v1667
        %v1917 = vunpack.c.l.bf16 %v1668
        %v1918 = vunpack.c.h.bf16 %v1668
        %v1919 = vunpack.c.l.bf16 %v1669
        %v1920 = vunpack.c.h.bf16 %v1669
        %v1921 = vunpack.c.l.bf16 %v1670
        %v1922 = vunpack.c.h.bf16 %v1670
        %v1923 = vunpack.c.l.bf16 %v1671
        %v1924 = vunpack.c.h.bf16 %v1671
        %v1925 = vunpack.c.l.bf16 %v1672
        %v1926 = vunpack.c.h.bf16 %v1672
        %v1927 = vunpack.c.l.bf16 %v1673
        %v1928 = vunpack.c.h.bf16 %v1673
        %v1929 = vunpack.c.l.bf16 %v1674
        %v1930 = vunpack.c.h.bf16 %v1674
        %v1931 = vunpack.c.l.bf16 %v1675
        %v1932 = vunpack.c.l.bf16 %v1676
        %v1933 = vunpack.c.h.bf16 %v1676
        %v1934 = vunpack.c.l.bf16 %v1677
        %v1935 = vunpack.c.h.bf16 %v1677
        %v1936 = vunpack.c.l.bf16 %v1678
        %v1937 = vunpack.c.h.bf16 %v1678
        %v1938 = vunpack.c.l.bf16 %v1679
        %v1939 = vunpack.c.h.bf16 %v1679
        %v1940 = vunpack.c.l.bf16 %v1680
        %v1941 = vunpack.c.h.bf16 %v1680
        %v1942 = vunpack.c.l.bf16 %v1681
        %v1943 = vunpack.c.h.bf16 %v1681
        %v1944 = vunpack.c.l.bf16 %v1682
        %v1945 = vunpack.c.h.bf16 %v1682
        %v1946 = vunpack.c.l.bf16 %v1683
        %v1947 = vunpack.c.h.bf16 %v1683
        %v1948 = vunpack.c.l.bf16 %v1684
        %v1949 = vunpack.c.h.bf16 %v1684
        %v1950 = vunpack.c.l.bf16 %v1685
        %v1951 = vunpack.c.h.bf16 %v1685
        %v1952 = vunpack.c.l.bf16 %v1686
        %v1953 = vunpack.c.h.bf16 %v1686
        %v1954 = vunpack.c.l.bf16 %v1687
        %v1955 = vunpack.c.h.bf16 %v1687
        %v1956 = vunpack.c.l.bf16 %v1688
        %v1957 = vunpack.c.l.bf16 %v1689
        %v1958 = vunpack.c.h.bf16 %v1689
        %v1959 = vunpack.c.l.bf16 %v1690
        %v1960 = vunpack.c.h.bf16 %v1690
        %v1961 = vunpack.c.l.bf16 %v1691
        %v1962 = vunpack.c.h.bf16 %v1691
        %v1963 = vunpack.c.l.bf16 %v1692
        %v1964 = vunpack.c.h.bf16 %v1692
        %v1965 = vunpack.c.l.bf16 %v1693
        %v1966 = vunpack.c.h.bf16 %v1693
        %v1967 = vunpack.c.l.bf16 %v1694
        %v1968 = vunpack.c.h.bf16 %v1694
        %v1969 = vunpack.c.l.bf16 %v1695
        %v1970 = vunpack.c.h.bf16 %v1695
        %v1971 = vunpack.c.l.bf16 %v1696
        %v1972 = vunpack.c.h.bf16 %v1696
        %v1973 = vunpack.c.l.bf16 %v1697
        %v1974 = vunpack.c.h.bf16 %v1697
        %v1975 = vunpack.c.l.bf16 %v1698
        %v1976 = vunpack.c.h.bf16 %v1698
        %v1977 = vunpack.c.l.bf16 %v1699
        %v1978 = vunpack.c.h.bf16 %v1699
        %v1979 = vunpack.c.l.bf16 %v1700
        %v1980 = vunpack.c.h.bf16 %v1700
        %v1981 = vunpack.c.l.bf16 %v1701
        %v1982 = vunpack.c.l.bf16 %v1702
        %v1983 = vunpack.c.h.bf16 %v1702
        %v1984 = vunpack.c.l.bf16 %v1703
        %v1985 = vunpack.c.h.bf16 %v1703
        %v1986 = vunpack.c.l.bf16 %v1704
        %v1987 = vunpack.c.h.bf16 %v1704
        %v1988 = vunpack.c.l.bf16 %v1705
        %v1989 = vunpack.c.h.bf16 %v1705
        %v1990 = vunpack.c.l.bf16 %v1706
        %v1991 = vunpack.c.h.bf16 %v1706
        %v1992 = vunpack.c.l.bf16 %v1707
        %v1993 = vunpack.c.h.bf16 %v1707
        %v1994 = vunpack.c.l.bf16 %v1708
        %v1995 = vunpack.c.h.bf16 %v1708
        %v1996 = vunpack.c.l.bf16 %v1709
        %v1997 = vunpack.c.h.bf16 %v1709
        %v1998 = vunpack.c.l.bf16 %v1710
        %v1999 = vunpack.c.h.bf16 %v1710
        %v2000 = vunpack.c.l.bf16 %v1711
        %v2001 = vunpack.c.h.bf16 %v1711
        %v2002 = vunpack.c.l.bf16 %v1712
        %v2003 = vunpack.c.h.bf16 %v1712
        %v2004 = vunpack.c.l.bf16 %v1713
        %v2005 = vunpack.c.h.bf16 %v1713
        %v2006 = vunpack.c.l.bf16 %v1714
        %v2007 = vunpack.c.l.bf16 %v1715
        %v2008 = vunpack.c.h.bf16 %v1715
        %v2009 = vunpack.c.l.bf16 %v1716
        %v2010 = vunpack.c.h.bf16 %v1716
        %v2011 = vunpack.c.l.bf16 %v1717
        %v2012 = vunpack.c.h.bf16 %v1717
        %v2013 = vunpack.c.l.bf16 %v1718
        %v2014 = vunpack.c.h.bf16 %v1718
        %v2015 = vunpack.c.l.bf16 %v1719
        %v2016 = vunpack.c.h.bf16 %v1719
        %v2017 = vunpack.c.l.bf16 %v1720
        %v2018 = vunpack.c.h.bf16 %v1720
        %v2019 = vunpack.c.l.bf16 %v1721
        %v2020 = vunpack.c.h.bf16 %v1721
        %v2021 = vunpack.c.l.bf16 %v1722
        %v2022 = vunpack.c.h.bf16 %v1722
        %v2023 = vunpack.c.l.bf16 %v1723
        %v2024 = vunpack.c.h.bf16 %v1723
        %v2025 = vunpack.c.l.bf16 %v1724
        %v2026 = vunpack.c.h.bf16 %v1724
        %v2027 = vunpack.c.l.bf16 %v1725
        %v2028 = vunpack.c.h.bf16 %v1725
        %v2029 = vunpack.c.l.bf16 %v1726
        %v2030 = vunpack.c.h.bf16 %v1726
        %v2031 = vunpack.c.l.bf16 %v1727
        %v2032 = vunpack.c.l.bf16 %v1728
        %v2033 = vunpack.c.h.bf16 %v1728
        %v2034 = vunpack.c.l.bf16 %v1729
        %v2035 = vunpack.c.h.bf16 %v1729
        %v2036 = vunpack.c.l.bf16 %v1730
        %v2037 = vunpack.c.h.bf16 %v1730
        %v2038 = vunpack.c.l.bf16 %v1731
        %v2039 = vunpack.c.h.bf16 %v1731
        %v2040 = vunpack.c.l.bf16 %v1732
        %v2041 = vunpack.c.h.bf16 %v1732
        %v2042 = vunpack.c.l.bf16 %v1733
        %v2043 = vunpack.c.h.bf16 %v1733
        %v2044 = vunpack.c.l.bf16 %v1734
        %v2045 = vunpack.c.h.bf16 %v1734
        %v2046 = vunpack.c.l.bf16 %v1735
        %v2047 = vunpack.c.h.bf16 %v1735
        %v2048 = vunpack.c.l.bf16 %v1736
        %v2049 = vunpack.c.h.bf16 %v1736
        %v2050 = vunpack.c.l.bf16 %v1737
        %v2051 = vunpack.c.h.bf16 %v1737
        %v2052 = vunpack.c.l.bf16 %v1738
        %v2053 = vunpack.c.h.bf16 %v1738
        %v2054 = vunpack.c.l.bf16 %v1739
        %v2055 = vunpack.c.h.bf16 %v1739
        %v2056 = vunpack.c.l.bf16 %v1740
        %v2057 = vunpack.c.l.bf16 %v1741
        %v2058 = vunpack.c.h.bf16 %v1741
        %v2059 = vunpack.c.l.bf16 %v1742
        %v2060 = vunpack.c.h.bf16 %v1742
        %v2061 = vunpack.c.l.bf16 %v1743
        %v2062 = vunpack.c.h.bf16 %v1743
        %v2063 = vunpack.c.l.bf16 %v1744
        %v2064 = vunpack.c.h.bf16 %v1744
        %v2065 = vunpack.c.l.bf16 %v1745
        %v2066 = vunpack.c.h.bf16 %v1745
        %v2067 = vunpack.c.l.bf16 %v1746
        %v2068 = vunpack.c.h.bf16 %v1746
        %v2069 = vunpack.c.l.bf16 %v1747
        %v2070 = vunpack.c.h.bf16 %v1747
        %v2071 = vunpack.c.l.bf16 %v1748
        %v2072 = vunpack.c.h.bf16 %v1748
        %v2073 = vunpack.c.l.bf16 %v1749
        %v2074 = vunpack.c.h.bf16 %v1749
        %v2075 = vunpack.c.l.bf16 %v1750
        %v2076 = vunpack.c.h.bf16 %v1750
        %v2077 = vunpack.c.l.bf16 %v1751
        %v2078 = vunpack.c.h.bf16 %v1751
        %v2079 = vunpack.c.l.bf16 %v1752
        %v2080 = vunpack.c.h.bf16 %v1752
        %v2081 = vunpack.c.l.bf16 %v1753
        %v2082 = vunpack.c.l.bf16 %v1754
        %v2083 = vunpack.c.h.bf16 %v1754
        %v2084 = vunpack.c.l.bf16 %v1755
        %v2085 = vunpack.c.h.bf16 %v1755
        %v2086 = vunpack.c.l.bf16 %v1756
        %v2087 = vunpack.c.h.bf16 %v1756
        %v2088 = vunpack.c.l.bf16 %v1757
        %v2089 = vunpack.c.h.bf16 %v1757
        %v2090 = vunpack.c.l.bf16 %v1758
        %v2091 = vunpack.c.h.bf16 %v1758
        %v2092 = vunpack.c.l.bf16 %v1759
        %v2093 = vunpack.c.h.bf16 %v1759
        %v2094 = vunpack.c.l.bf16 %v1760
        %v2095 = vunpack.c.h.bf16 %v1760
        %v2096 = vunpack.c.l.bf16 %v1761
        %v2097 = vunpack.c.h.bf16 %v1761
        %v2098 = vunpack.c.l.bf16 %v1762
        %v2099 = vunpack.c.h.bf16 %v1762
        %v2100 = vunpack.c.l.bf16 %v1763
        %v2101 = vunpack.c.h.bf16 %v1763
        %v2102 = vunpack.c.l.bf16 %v1764
        %v2103 = vunpack.c.h.bf16 %v1764
        %v2104 = vunpack.c.l.bf16 %v1765
        %v2105 = vunpack.c.h.bf16 %v1765
        %v2106 = vunpack.c.l.bf16 %v1766
        %v2107 = vunpack.c.l.bf16 %v1767
        %v2108 = vunpack.c.h.bf16 %v1767
        %v2109 = vunpack.c.l.bf16 %v1768
        %v2110 = vunpack.c.h.bf16 %v1768
        %v2111 = vunpack.c.l.bf16 %v1769
        %v2112 = vunpack.c.h.bf16 %v1769
        %v2113 = vunpack.c.l.bf16 %v1770
        %v2114 = vunpack.c.h.bf16 %v1770
        %v2115 = vunpack.c.l.bf16 %v1771
        %v2116 = vunpack.c.h.bf16 %v1771
        %v2117 = vunpack.c.l.bf16 %v1772
        %v2118 = vunpack.c.h.bf16 %v1772
        %v2119 = vunpack.c.l.bf16 %v1773
        %v2120 = vunpack.c.h.bf16 %v1773
        %v2121 = vunpack.c.l.bf16 %v1774
        %v2122 = vunpack.c.h.bf16 %v1774
        %v2123 = vunpack.c.l.bf16 %v1775
        %v2124 = vunpack.c.h.bf16 %v1775
        %v2125 = vunpack.c.l.bf16 %v1776
        %v2126 = vunpack.c.h.bf16 %v1776
        %v2127 = vunpack.c.l.bf16 %v1777
        %v2128 = vunpack.c.h.bf16 %v1777
        %v2129 = vunpack.c.l.bf16 %v1778
        %v2130 = vunpack.c.h.bf16 %v1778
        %v2131 = vunpack.c.l.bf16 %v1779
        %v2132 = vunpack.c.l.bf16 %v1780
        %v2133 = vunpack.c.h.bf16 %v1780
        %v2134 = vunpack.c.l.bf16 %v1781
        %v2135 = vunpack.c.h.bf16 %v1781
        %v2136 = vunpack.c.l.bf16 %v1782
        %v2137 = vunpack.c.h.bf16 %v1782
        %v2138 = vunpack.c.l.bf16 %v1783
        %v2139 = vunpack.c.h.bf16 %v1783
        %v2140 = vunpack.c.l.bf16 %v1784
        %v2141 = vunpack.c.h.bf16 %v1784
        %v2142 = vunpack.c.l.bf16 %v1785
        %v2143 = vunpack.c.h.bf16 %v1785
        %v2144 = vunpack.c.l.bf16 %v1786
        %v2145 = vunpack.c.h.bf16 %v1786
        %v2146 = vunpack.c.l.bf16 %v1787
        %v2147 = vunpack.c.h.bf16 %v1787
        %v2148 = vunpack.c.l.bf16 %v1788
        %v2149 = vunpack.c.h.bf16 %v1788
        %v2150 = vunpack.c.l.bf16 %v1789
        %v2151 = vunpack.c.h.bf16 %v1789
        %v2152 = vunpack.c.l.bf16 %v1790
        %v2153 = vunpack.c.h.bf16 %v1790
        %v2154 = vunpack.c.l.bf16 %v1791
        %v2155 = vunpack.c.h.bf16 %v1791
        %v2156 = vunpack.c.l.bf16 %v1792
        %v2157 = vunpack.c.l.bf16 %v1793
        %v2158 = vunpack.c.h.bf16 %v1793
        %v2159 = vunpack.c.l.bf16 %v1794
        %v2160 = vunpack.c.h.bf16 %v1794
        %v2161 = vunpack.c.l.bf16 %v1795
        %v2162 = vunpack.c.h.bf16 %v1795
        %v2163 = vunpack.c.l.bf16 %v1796
        %v2164 = vunpack.c.h.bf16 %v1796
        %v2165 = vunpack.c.l.bf16 %v1797
        %v2166 = vunpack.c.h.bf16 %v1797
        %v2167 = vunpack.c.l.bf16 %v1798
        %v2168 = vunpack.c.h.bf16 %v1798
        %v2169 = vunpack.c.l.bf16 %v1799
        %v2170 = vunpack.c.h.bf16 %v1799
        %v2171 = vunpack.c.l.bf16 %v1800
        %v2172 = vunpack.c.h.bf16 %v1800
        %v2173 = vunpack.c.l.bf16 %v1801
        %v2174 = vunpack.c.h.bf16 %v1801
        %v2175 = vunpack.c.l.bf16 %v1802
        %v2176 = vunpack.c.h.bf16 %v1802
        %v2177 = vunpack.c.l.bf16 %v1803
        %v2178 = vunpack.c.h.bf16 %v1803
        %v2179 = vunpack.c.l.bf16 %v1804
        %v2180 = vunpack.c.h.bf16 %v1804
        %v2181 = vunpack.c.l.bf16 %v1805
        %v2182 = vunpack.c.l.bf16 %v1806
        %v2183 = vunpack.c.h.bf16 %v1806
        %v2184 = vunpack.c.l.bf16 %v1807
        %v2185 = vunpack.c.h.bf16 %v1807
        %v2186 = vunpack.c.l.bf16 %v1808
        %v2187 = vunpack.c.h.bf16 %v1808
        %v2188 = vunpack.c.l.bf16 %v1809
        %v2189 = vunpack.c.h.bf16 %v1809
        %v2190 = vunpack.c.l.bf16 %v1810
        %v2191 = vunpack.c.h.bf16 %v1810
        %v2192 = vunpack.c.l.bf16 %v1811
        %v2193 = vunpack.c.h.bf16 %v1811
        %v2194 = vunpack.c.l.bf16 %v1812
        %v2195 = vunpack.c.h.bf16 %v1812
        %v2196 = vunpack.c.l.bf16 %v1813
        %v2197 = vunpack.c.h.bf16 %v1813
        %v2198 = vunpack.c.l.bf16 %v1814
        %v2199 = vunpack.c.h.bf16 %v1814
        %v2200 = vunpack.c.l.bf16 %v1815
        %v2201 = vunpack.c.h.bf16 %v1815
        %v2202 = vunpack.c.l.bf16 %v1816
        %v2203 = vunpack.c.h.bf16 %v1816
        %v2204 = vunpack.c.l.bf16 %v1817
        %v2205 = vunpack.c.h.bf16 %v1817
        %v2206 = vunpack.c.l.bf16 %v1818
        %v2207 = vunpack.c.l.bf16 %v1819
        %v2208 = vunpack.c.h.bf16 %v1819
        %v2209 = vunpack.c.l.bf16 %v1820
        %v2210 = vunpack.c.h.bf16 %v1820
        %v2211 = vunpack.c.l.bf16 %v1821
        %v2212 = vunpack.c.h.bf16 %v1821
        %v2213 = vunpack.c.l.bf16 %v1822
        %v2214 = vunpack.c.h.bf16 %v1822
        %v2215 = vunpack.c.l.bf16 %v1823
        %v2216 = vunpack.c.h.bf16 %v1823
        %v2217 = vunpack.c.l.bf16 %v1824
        %v2218 = vunpack.c.h.bf16 %v1824
        %v2219 = vunpack.c.l.bf16 %v1825
        %v2220 = vunpack.c.h.bf16 %v1825
        %v2221 = vunpack.c.l.bf16 %v1826
        %v2222 = vunpack.c.h.bf16 %v1826
        %v2223 = vunpack.c.l.bf16 %v1827
        %v2224 = vunpack.c.h.bf16 %v1827
        %v2225 = vunpack.c.l.bf16 %v1828
        %v2226 = vunpack.c.h.bf16 %v1828
        %v2227 = vunpack.c.l.bf16 %v1829
        %v2228 = vunpack.c.h.bf16 %v1829
        %v2229 = vunpack.c.l.bf16 %v1830
        %v2230 = vunpack.c.h.bf16 %v1830
        %v2231 = vunpack.c.l.bf16 %v1831
        %v2232 = vmul.f32 %v1832, %v616
        %v2233 = vmul.f32 %v1833, %v617
        %v2234 = vmul.f32 %v1834, %v618
        %v2235 = vmul.f32 %v1835, %v619
        %v2236 = vmul.f32 %v1836, %v620
        %v2237 = vmul.f32 %v1837, %v621
        %v2238 = vmul.f32 %v1838, %v622
        %v2239 = vmul.f32 %v1839, %v623
        %v2240 = vmul.f32 %v1840, %v624
        %v2241 = vmul.f32 %v1841, %v625
        %v2242 = vmul.f32 %v1842, %v626
        %v2243 = vmul.f32 %v1843, %v627
        %v2244 = vmul.f32 %v1844, %v628
        %v2245 = vmul.f32 %v1845, %v629
        %v2246 = vmul.f32 %v1846, %v630
        %v2247 = vmul.f32 %v1847, %v631
        %v2248 = vmul.f32 %v1848, %v632
        %v2249 = vmul.f32 %v1849, %v633
        %v2250 = vmul.f32 %v1850, %v634
        %v2251 = vmul.f32 %v1851, %v635
        %v2252 = vmul.f32 %v1852, %v636
        %v2253 = vmul.f32 %v1853, %v637
        %v2254 = vmul.f32 %v1854, %v638
        %v2255 = vmul.f32 %v1855, %v639
        %v2256 = vmul.f32 %v1856, %v640
        %v2257 = vmul.f32 %v1857, %v641
        %v2258 = vmul.f32 %v1858, %v642
        %v2259 = vmul.f32 %v1859, %v643
        %v2260 = vmul.f32 %v1860, %v644
        %v2261 = vmul.f32 %v1861, %v645
        %v2262 = vmul.f32 %v1862, %v646
        %v2263 = vmul.f32 %v1863, %v647
        %v2264 = vmul.f32 %v1864, %v648
        %v2265 = vmul.f32 %v1865, %v649
        %v2266 = vmul.f32 %v1866, %v650
        %v2267 = vmul.f32 %v1867, %v651
        %v2268 = vmul.f32 %v1868, %v652
        %v2269 = vmul.f32 %v1869, %v653
        %v2270 = vmul.f32 %v1870, %v654
        %v2271 = vmul.f32 %v1871, %v655
        %v2272 = vmul.f32 %v1872, %v656
        %v2273 = vmul.f32 %v1873, %v657
        %v2274 = vmul.f32 %v1874, %v658
        %v2275 = vmul.f32 %v1875, %v659
        %v2276 = vmul.f32 %v1876, %v660
        %v2277 = vmul.f32 %v1877, %v661
        %v2278 = vmul.f32 %v1878, %v662
        %v2279 = vmul.f32 %v1879, %v663
        %v2280 = vmul.f32 %v1880, %v664
        %v2281 = vmul.f32 %v1881, %v665
        %v2282 = vmul.f32 %v1882, %v666
        %v2283 = vmul.f32 %v1883, %v667
        %v2284 = vmul.f32 %v1884, %v668
        %v2285 = vmul.f32 %v1885, %v669
        %v2286 = vmul.f32 %v1886, %v670
        %v2287 = vmul.f32 %v1887, %v671
        %v2288 = vmul.f32 %v1888, %v672
        %v2289 = vmul.f32 %v1889, %v673
        %v2290 = vmul.f32 %v1890, %v674
        %v2291 = vmul.f32 %v1891, %v675
        %v2292 = vmul.f32 %v1892, %v676
        %v2293 = vmul.f32 %v1893, %v677
        %v2294 = vmul.f32 %v1894, %v678
        %v2295 = vmul.f32 %v1895, %v679
        %v2296 = vmul.f32 %v1896, %v680
        %v2297 = vmul.f32 %v1897, %v681
        %v2298 = vmul.f32 %v1898, %v682
        %v2299 = vmul.f32 %v1899, %v683
        %v2300 = vmul.f32 %v1900, %v684
        %v2301 = vmul.f32 %v1901, %v685
        %v2302 = vmul.f32 %v1902, %v686
        %v2303 = vmul.f32 %v1903, %v687
        %v2304 = vmul.f32 %v1904, %v688
        %v2305 = vmul.f32 %v1905, %v689
        %v2306 = vmul.f32 %v1906, %v690
        %v2307 = vmul.f32 %v1907, %v691
        %v2308 = vmul.f32 %v1908, %v692
        %v2309 = vmul.f32 %v1909, %v693
        %v2310 = vmul.f32 %v1910, %v694
        %v2311 = vmul.f32 %v1911, %v695
        %v2312 = vmul.f32 %v1912, %v696
        %v2313 = vmul.f32 %v1913, %v697
        %v2314 = vmul.f32 %v1914, %v698
        %v2315 = vmul.f32 %v1915, %v699
        %v2316 = vmul.f32 %v1916, %v700
        %v2317 = vmul.f32 %v1917, %v701
        %v2318 = vmul.f32 %v1918, %v702
        %v2319 = vmul.f32 %v1919, %v703
        %v2320 = vmul.f32 %v1920, %v704
        %v2321 = vmul.f32 %v1921, %v705
        %v2322 = vmul.f32 %v1922, %v706
        %v2323 = vmul.f32 %v1923, %v707
        %v2324 = vmul.f32 %v1924, %v708
        %v2325 = vmul.f32 %v1925, %v709
        %v2326 = vmul.f32 %v1926, %v710
        %v2327 = vmul.f32 %v1927, %v711
        %v2328 = vmul.f32 %v1928, %v712
        %v2329 = vmul.f32 %v1929, %v713
        %v2330 = vmul.f32 %v1930, %v714
        %v2331 = vmul.f32 %v1931, %v715
        %v2332 = vmul.f32 %v1932, %v716
        %v2333 = vmul.f32 %v1933, %v717
        %v2334 = vmul.f32 %v1934, %v718
        %v2335 = vmul.f32 %v1935, %v719
        %v2336 = vmul.f32 %v1936, %v720
        %v2337 = vmul.f32 %v1937, %v721
        %v2338 = vmul.f32 %v1938, %v722
        %v2339 = vmul.f32 %v1939, %v723
        %v2340 = vmul.f32 %v1940, %v724
        %v2341 = vmul.f32 %v1941, %v725
        %v2342 = vmul.f32 %v1942, %v726
        %v2343 = vmul.f32 %v1943, %v727
        %v2344 = vmul.f32 %v1944, %v728
        %v2345 = vmul.f32 %v1945, %v729
        %v2346 = vmul.f32 %v1946, %v730
        %v2347 = vmul.f32 %v1947, %v731
        %v2348 = vmul.f32 %v1948, %v732
        %v2349 = vmul.f32 %v1949, %v733
        %v2350 = vmul.f32 %v1950, %v734
        %v2351 = vmul.f32 %v1951, %v735
        %v2352 = vmul.f32 %v1952, %v736
        %v2353 = vmul.f32 %v1953, %v737
        %v2354 = vmul.f32 %v1954, %v738
        %v2355 = vmul.f32 %v1955, %v739
        %v2356 = vmul.f32 %v1956, %v740
        %v2357 = vmul.f32 %v1957, %v741
        %v2358 = vmul.f32 %v1958, %v742
        %v2359 = vmul.f32 %v1959, %v743
        %v2360 = vmul.f32 %v1960, %v744
        %v2361 = vmul.f32 %v1961, %v745
        %v2362 = vmul.f32 %v1962, %v746
        %v2363 = vmul.f32 %v1963, %v747
        %v2364 = vmul.f32 %v1964, %v748
        %v2365 = vmul.f32 %v1965, %v749
        %v2366 = vmul.f32 %v1966, %v750
        %v2367 = vmul.f32 %v1967, %v751
        %v2368 = vmul.f32 %v1968, %v752
        %v2369 = vmul.f32 %v1969, %v753
        %v2370 = vmul.f32 %v1970, %v754
        %v2371 = vmul.f32 %v1971, %v755
        %v2372 = vmul.f32 %v1972, %v756
        %v2373 = vmul.f32 %v1973, %v757
        %v2374 = vmul.f32 %v1974, %v758
        %v2375 = vmul.f32 %v1975, %v759
        %v2376 = vmul.f32 %v1976, %v760
        %v2377 = vmul.f32 %v1977, %v761
        %v2378 = vmul.f32 %v1978, %v762
        %v2379 = vmul.f32 %v1979, %v763
        %v2380 = vmul.f32 %v1980, %v764
        %v2381 = vmul.f32 %v1981, %v765
        %v2382 = vmul.f32 %v1982, %v766
        %v2383 = vmul.f32 %v1983, %v767
        %v2384 = vmul.f32 %v1984, %v768
        %v2385 = vmul.f32 %v1985, %v769
        %v2386 = vmul.f32 %v1986, %v770
        %v2387 = vmul.f32 %v1987, %v771
        %v2388 = vmul.f32 %v1988, %v772
        %v2389 = vmul.f32 %v1989, %v773
        %v2390 = vmul.f32 %v1990, %v774
        %v2391 = vmul.f32 %v1991, %v775
        %v2392 = vmul.f32 %v1992, %v776
        %v2393 = vmul.f32 %v1993, %v777
        %v2394 = vmul.f32 %v1994, %v778
        %v2395 = vmul.f32 %v1995, %v779
        %v2396 = vmul.f32 %v1996, %v780
        %v2397 = vmul.f32 %v1997, %v781
        %v2398 = vmul.f32 %v1998, %v782
        %v2399 = vmul.f32 %v1999, %v783
        %v2400 = vmul.f32 %v2000, %v784
        %v2401 = vmul.f32 %v2001, %v785
        %v2402 = vmul.f32 %v2002, %v786
        %v2403 = vmul.f32 %v2003, %v787
        %v2404 = vmul.f32 %v2004, %v788
        %v2405 = vmul.f32 %v2005, %v789
        %v2406 = vmul.f32 %v2006, %v790
        %v2407 = vmul.f32 %v2007, %v791
        %v2408 = vmul.f32 %v2008, %v792
        %v2409 = vmul.f32 %v2009, %v793
        %v2410 = vmul.f32 %v2010, %v794
        %v2411 = vmul.f32 %v2011, %v795
        %v2412 = vmul.f32 %v2012, %v796
        %v2413 = vmul.f32 %v2013, %v797
        %v2414 = vmul.f32 %v2014, %v798
        %v2415 = vmul.f32 %v2015, %v799
        %v2416 = vmul.f32 %v2016, %v800
        %v2417 = vmul.f32 %v2017, %v801
        %v2418 = vmul.f32 %v2018, %v802
        %v2419 = vmul.f32 %v2019, %v803
        %v2420 = vmul.f32 %v2020, %v804
        %v2421 = vmul.f32 %v2021, %v805
        %v2422 = vmul.f32 %v2022, %v806
        %v2423 = vmul.f32 %v2023, %v807
        %v2424 = vmul.f32 %v2024, %v808
        %v2425 = vmul.f32 %v2025, %v809
        %v2426 = vmul.f32 %v2026, %v810
        %v2427 = vmul.f32 %v2027, %v811
        %v2428 = vmul.f32 %v2028, %v812
        %v2429 = vmul.f32 %v2029, %v813
        %v2430 = vmul.f32 %v2030, %v814
        %v2431 = vmul.f32 %v2031, %v815
        %v2432 = vmul.f32 %v2032, %v816
        %v2433 = vmul.f32 %v2033, %v817
        %v2434 = vmul.f32 %v2034, %v818
        %v2435 = vmul.f32 %v2035, %v819
        %v2436 = vmul.f32 %v2036, %v820
        %v2437 = vmul.f32 %v2037, %v821
        %v2438 = vmul.f32 %v2038, %v822
        %v2439 = vmul.f32 %v2039, %v823
        %v2440 = vmul.f32 %v2040, %v824
        %v2441 = vmul.f32 %v2041, %v825
        %v2442 = vmul.f32 %v2042, %v826
        %v2443 = vmul.f32 %v2043, %v827
        %v2444 = vmul.f32 %v2044, %v828
        %v2445 = vmul.f32 %v2045, %v829
        %v2446 = vmul.f32 %v2046, %v830
        %v2447 = vmul.f32 %v2047, %v831
        %v2448 = vmul.f32 %v2048, %v832
        %v2449 = vmul.f32 %v2049, %v833
        %v2450 = vmul.f32 %v2050, %v834
        %v2451 = vmul.f32 %v2051, %v835
        %v2452 = vmul.f32 %v2052, %v836
        %v2453 = vmul.f32 %v2053, %v837
        %v2454 = vmul.f32 %v2054, %v838
        %v2455 = vmul.f32 %v2055, %v839
        %v2456 = vmul.f32 %v2056, %v840
        %v2457 = vmul.f32 %v2057, %v841
        %v2458 = vmul.f32 %v2058, %v842
        %v2459 = vmul.f32 %v2059, %v843
        %v2460 = vmul.f32 %v2060, %v844
        %v2461 = vmul.f32 %v2061, %v845
        %v2462 = vmul.f32 %v2062, %v846
        %v2463 = vmul.f32 %v2063, %v847
        %v2464 = vmul.f32 %v2064, %v848
        %v2465 = vmul.f32 %v2065, %v849
        %v2466 = vmul.f32 %v2066, %v850
        %v2467 = vmul.f32 %v2067, %v851
        %v2468 = vmul.f32 %v2068, %v852
        %v2469 = vmul.f32 %v2069, %v853
        %v2470 = vmul.f32 %v2070, %v854
        %v2471 = vmul.f32 %v2071, %v855
        %v2472 = vmul.f32 %v2072, %v856
        %v2473 = vmul.f32 %v2073, %v857
        %v2474 = vmul.f32 %v2074, %v858
        %v2475 = vmul.f32 %v2075, %v859
        %v2476 = vmul.f32 %v2076, %v860
        %v2477 = vmul.f32 %v2077, %v861
        %v2478 = vmul.f32 %v2078, %v862
        %v2479 = vmul.f32 %v2079, %v863
        %v2480 = vmul.f32 %v2080, %v864
        %v2481 = vmul.f32 %v2081, %v865
        %v2482 = vmul.f32 %v2082, %v866
        %v2483 = vmul.f32 %v2083, %v867
        %v2484 = vmul.f32 %v2084, %v868
        %v2485 = vmul.f32 %v2085, %v869
        %v2486 = vmul.f32 %v2086, %v870
        %v2487 = vmul.f32 %v2087, %v871
        %v2488 = vmul.f32 %v2088, %v872
        %v2489 = vmul.f32 %v2089, %v873
        %v2490 = vmul.f32 %v2090, %v874
        %v2491 = vmul.f32 %v2091, %v875
        %v2492 = vmul.f32 %v2092, %v876
        %v2493 = vmul.f32 %v2093, %v877
        %v2494 = vmul.f32 %v2094, %v878
        %v2495 = vmul.f32 %v2095, %v879
        %v2496 = vmul.f32 %v2096, %v880
        %v2497 = vmul.f32 %v2097, %v881
        %v2498 = vmul.f32 %v2098, %v882
        %v2499 = vmul.f32 %v2099, %v883
        %v2500 = vmul.f32 %v2100, %v884
        %v2501 = vmul.f32 %v2101, %v885
        %v2502 = vmul.f32 %v2102, %v886
        %v2503 = vmul.f32 %v2103, %v887
        %v2504 = vmul.f32 %v2104, %v888
        %v2505 = vmul.f32 %v2105, %v889
        %v2506 = vmul.f32 %v2106, %v890
        %v2507 = vmul.f32 %v2107, %v891
        %v2508 = vmul.f32 %v2108, %v892
        %v2509 = vmul.f32 %v2109, %v893
        %v2510 = vmul.f32 %v2110, %v894
        %v2511 = vmul.f32 %v2111, %v895
        %v2512 = vmul.f32 %v2112, %v896
        %v2513 = vmul.f32 %v2113, %v897
        %v2514 = vmul.f32 %v2114, %v898
        %v2515 = vmul.f32 %v2115, %v899
        %v2516 = vmul.f32 %v2116, %v900
        %v2517 = vmul.f32 %v2117, %v901
        %v2518 = vmul.f32 %v2118, %v902
        %v2519 = vmul.f32 %v2119, %v903
        %v2520 = vmul.f32 %v2120, %v904
        %v2521 = vmul.f32 %v2121, %v905
        %v2522 = vmul.f32 %v2122, %v906
        %v2523 = vmul.f32 %v2123, %v907
        %v2524 = vmul.f32 %v2124, %v908
        %v2525 = vmul.f32 %v2125, %v909
        %v2526 = vmul.f32 %v2126, %v910
        %v2527 = vmul.f32 %v2127, %v911
        %v2528 = vmul.f32 %v2128, %v912
        %v2529 = vmul.f32 %v2129, %v913
        %v2530 = vmul.f32 %v2130, %v914
        %v2531 = vmul.f32 %v2131, %v915
        %v2532 = vmul.f32 %v2132, %v916
        %v2533 = vmul.f32 %v2133, %v917
        %v2534 = vmul.f32 %v2134, %v918
        %v2535 = vmul.f32 %v2135, %v919
        %v2536 = vmul.f32 %v2136, %v920
        %v2537 = vmul.f32 %v2137, %v921
        %v2538 = vmul.f32 %v2138, %v922
        %v2539 = vmul.f32 %v2139, %v923
        %v2540 = vmul.f32 %v2140, %v924
        %v2541 = vmul.f32 %v2141, %v925
        %v2542 = vmul.f32 %v2142, %v926
        %v2543 = vmul.f32 %v2143, %v927
        %v2544 = vmul.f32 %v2144, %v928
        %v2545 = vmul.f32 %v2145, %v929
        %v2546 = vmul.f32 %v2146, %v930
        %v2547 = vmul.f32 %v2147, %v931
        %v2548 = vmul.f32 %v2148, %v932
        %v2549 = vmul.f32 %v2149, %v933
        %v2550 = vmul.f32 %v2150, %v934
        %v2551 = vmul.f32 %v2151, %v935
        %v2552 = vmul.f32 %v2152, %v936
        %v2553 = vmul.f32 %v2153, %v937
        %v2554 = vmul.f32 %v2154, %v938
        %v2555 = vmul.f32 %v2155, %v939
        %v2556 = vmul.f32 %v2156, %v940
        %v2557 = vmul.f32 %v2157, %v941
        %v2558 = vmul.f32 %v2158, %v942
        %v2559 = vmul.f32 %v2159, %v943
        %v2560 = vmul.f32 %v2160, %v944
        %v2561 = vmul.f32 %v2161, %v945
        %v2562 = vmul.f32 %v2162, %v946
        %v2563 = vmul.f32 %v2163, %v947
        %v2564 = vmul.f32 %v2164, %v948
        %v2565 = vmul.f32 %v2165, %v949
        %v2566 = vmul.f32 %v2166, %v950
        %v2567 = vmul.f32 %v2167, %v951
        %v2568 = vmul.f32 %v2168, %v952
        %v2569 = vmul.f32 %v2169, %v953
        %v2570 = vmul.f32 %v2170, %v954
        %v2571 = vmul.f32 %v2171, %v955
        %v2572 = vmul.f32 %v2172, %v956
        %v2573 = vmul.f32 %v2173, %v957
        %v2574 = vmul.f32 %v2174, %v958
        %v2575 = vmul.f32 %v2175, %v959
        %v2576 = vmul.f32 %v2176, %v960
        %v2577 = vmul.f32 %v2177, %v961
        %v2578 = vmul.f32 %v2178, %v962
        %v2579 = vmul.f32 %v2179, %v963
        %v2580 = vmul.f32 %v2180, %v964
        %v2581 = vmul.f32 %v2181, %v965
        %v2582 = vmul.f32 %v2182, %v966
        %v2583 = vmul.f32 %v2183, %v967
        %v2584 = vmul.f32 %v2184, %v968
        %v2585 = vmul.f32 %v2185, %v969
        %v2586 = vmul.f32 %v2186, %v970
        %v2587 = vmul.f32 %v2187, %v971
        %v2588 = vmul.f32 %v2188, %v972
        %v2589 = vmul.f32 %v2189, %v973
        %v2590 = vmul.f32 %v2190, %v974
        %v2591 = vmul.f32 %v2191, %v975
        %v2592 = vmul.f32 %v2192, %v976
        %v2593 = vmul.f32 %v2193, %v977
        %v2594 = vmul.f32 %v2194, %v978
        %v2595 = vmul.f32 %v2195, %v979
        %v2596 = vmul.f32 %v2196, %v980
        %v2597 = vmul.f32 %v2197, %v981
        %v2598 = vmul.f32 %v2198, %v982
        %v2599 = vmul.f32 %v2199, %v983
        %v2600 = vmul.f32 %v2200, %v984
        %v2601 = vmul.f32 %v2201, %v985
        %v2602 = vmul.f32 %v2202, %v986
        %v2603 = vmul.f32 %v2203, %v987
        %v2604 = vmul.f32 %v2204, %v988
        %v2605 = vmul.f32 %v2205, %v989
        %v2606 = vmul.f32 %v2206, %v990
        %v2607 = vmul.f32 %v2207, %v991
        %v2608 = vmul.f32 %v2208, %v992
        %v2609 = vmul.f32 %v2209, %v993
        %v2610 = vmul.f32 %v2210, %v994
        %v2611 = vmul.f32 %v2211, %v995
        %v2612 = vmul.f32 %v2212, %v996
        %v2613 = vmul.f32 %v2213, %v997
        %v2614 = vmul.f32 %v2214, %v998
        %v2615 = vmul.f32 %v2215, %v999
        %v2616 = vmul.f32 %v2216, %v1000
        %v2617 = vmul.f32 %v2217, %v1001
        %v2618 = vmul.f32 %v2218, %v1002
        %v2619 = vmul.f32 %v2219, %v1003
        %v2620 = vmul.f32 %v2220, %v1004
        %v2621 = vmul.f32 %v2221, %v1005
        %v2622 = vmul.f32 %v2222, %v1006
        %v2623 = vmul.f32 %v2223, %v1007
        %v2624 = vmul.f32 %v2224, %v1008
        %v2625 = vmul.f32 %v2225, %v1009
        %v2626 = vmul.f32 %v2226, %v1010
        %v2627 = vmul.f32 %v2227, %v1011
        %v2628 = vmul.f32 %v2228, %v1012
        %v2629 = vmul.f32 %v2229, %v1013
        %v2630 = vmul.f32 %v2230, %v1014
        %v2631 = vmul.f32 %v2231, %v1015
        %v2632 = vadd.f32 %v1224, %v2232
        %v2633 = vadd.f32 %v1225, %v2233
        %v2634 = vadd.f32 %v1226, %v2234
        %v2635 = vadd.f32 %v1227, %v2235
        %v2636 = vadd.f32 %v1228, %v2236
        %v2637 = vadd.f32 %v1229, %v2237
        %v2638 = vadd.f32 %v1230, %v2238
        %v2639 = vadd.f32 %v1231, %v2239
        %v2640 = vadd.f32 %v1232, %v2240
        %v2641 = vadd.f32 %v1233, %v2241
        %v2642 = vadd.f32 %v1234, %v2242
        %v2643 = vadd.f32 %v1235, %v2243
        %v2644 = vadd.f32 %v1236, %v2244
        %v2645 = vadd.f32 %v1237, %v2245
        %v2646 = vadd.f32 %v1238, %v2246
        %v2647 = vadd.f32 %v1239, %v2247
        %v2648 = vadd.f32 %v1240, %v2248
        %v2649 = vadd.f32 %v1241, %v2249
        %v2650 = vadd.f32 %v1242, %v2250
        %v2651 = vadd.f32 %v1243, %v2251
        %v2652 = vadd.f32 %v1244, %v2252
        %v2653 = vadd.f32 %v1245, %v2253
        %v2654 = vadd.f32 %v1246, %v2254
        %v2655 = vadd.f32 %v1247, %v2255
        %v2656 = vadd.f32 %v1248, %v2256
        %v2657 = vadd.f32 %v1249, %v2257
        %v2658 = vadd.f32 %v1250, %v2258
        %v2659 = vadd.f32 %v1251, %v2259
        %v2660 = vadd.f32 %v1252, %v2260
        %v2661 = vadd.f32 %v1253, %v2261
        %v2662 = vadd.f32 %v1254, %v2262
        %v2663 = vadd.f32 %v1255, %v2263
        %v2664 = vadd.f32 %v1256, %v2264
        %v2665 = vadd.f32 %v1257, %v2265
        %v2666 = vadd.f32 %v1258, %v2266
        %v2667 = vadd.f32 %v1259, %v2267
        %v2668 = vadd.f32 %v1260, %v2268
        %v2669 = vadd.f32 %v1261, %v2269
        %v2670 = vadd.f32 %v1262, %v2270
        %v2671 = vadd.f32 %v1263, %v2271
        %v2672 = vadd.f32 %v1264, %v2272
        %v2673 = vadd.f32 %v1265, %v2273
        %v2674 = vadd.f32 %v1266, %v2274
        %v2675 = vadd.f32 %v1267, %v2275
        %v2676 = vadd.f32 %v1268, %v2276
        %v2677 = vadd.f32 %v1269, %v2277
        %v2678 = vadd.f32 %v1270, %v2278
        %v2679 = vadd.f32 %v1271, %v2279
        %v2680 = vadd.f32 %v1272, %v2280
        %v2681 = vadd.f32 %v1273, %v2281
        %v2682 = vadd.f32 %v1274, %v2282
        %v2683 = vadd.f32 %v1275, %v2283
        %v2684 = vadd.f32 %v1276, %v2284
        %v2685 = vadd.f32 %v1277, %v2285
        %v2686 = vadd.f32 %v1278, %v2286
        %v2687 = vadd.f32 %v1279, %v2287
        %v2688 = vadd.f32 %v1280, %v2288
        %v2689 = vadd.f32 %v1281, %v2289
        %v2690 = vadd.f32 %v1282, %v2290
        %v2691 = vadd.f32 %v1283, %v2291
        %v2692 = vadd.f32 %v1284, %v2292
        %v2693 = vadd.f32 %v1285, %v2293
        %v2694 = vadd.f32 %v1286, %v2294
        %v2695 = vadd.f32 %v1287, %v2295
        %v2696 = vadd.f32 %v1288, %v2296
        %v2697 = vadd.f32 %v1289, %v2297
        %v2698 = vadd.f32 %v1290, %v2298
        %v2699 = vadd.f32 %v1291, %v2299
        %v2700 = vadd.f32 %v1292, %v2300
        %v2701 = vadd.f32 %v1293, %v2301
        %v2702 = vadd.f32 %v1294, %v2302
        %v2703 = vadd.f32 %v1295, %v2303
        %v2704 = vadd.f32 %v1296, %v2304
        %v2705 = vadd.f32 %v1297, %v2305
        %v2706 = vadd.f32 %v1298, %v2306
        %v2707 = vadd.f32 %v1299, %v2307
        %v2708 = vadd.f32 %v1300, %v2308
        %v2709 = vadd.f32 %v1301, %v2309
        %v2710 = vadd.f32 %v1302, %v2310
        %v2711 = vadd.f32 %v1303, %v2311
        %v2712 = vadd.f32 %v1304, %v2312
        %v2713 = vadd.f32 %v1305, %v2313
        %v2714 = vadd.f32 %v1306, %v2314
        %v2715 = vadd.f32 %v1307, %v2315
        %v2716 = vadd.f32 %v1308, %v2316
        %v2717 = vadd.f32 %v1309, %v2317
        %v2718 = vadd.f32 %v1310, %v2318
        %v2719 = vadd.f32 %v1311, %v2319
        %v2720 = vadd.f32 %v1312, %v2320
        %v2721 = vadd.f32 %v1313, %v2321
        %v2722 = vadd.f32 %v1314, %v2322
        %v2723 = vadd.f32 %v1315, %v2323
        %v2724 = vadd.f32 %v1316, %v2324
        %v2725 = vadd.f32 %v1317, %v2325
        %v2726 = vadd.f32 %v1318, %v2326
        %v2727 = vadd.f32 %v1319, %v2327
        %v2728 = vadd.f32 %v1320, %v2328
        %v2729 = vadd.f32 %v1321, %v2329
        %v2730 = vadd.f32 %v1322, %v2330
        %v2731 = vadd.f32 %v1323, %v2331
        %v2732 = vadd.f32 %v1324, %v2332
        %v2733 = vadd.f32 %v1325, %v2333
        %v2734 = vadd.f32 %v1326, %v2334
        %v2735 = vadd.f32 %v1327, %v2335
        %v2736 = vadd.f32 %v1328, %v2336
        %v2737 = vadd.f32 %v1329, %v2337
        %v2738 = vadd.f32 %v1330, %v2338
        %v2739 = vadd.f32 %v1331, %v2339
        %v2740 = vadd.f32 %v1332, %v2340
        %v2741 = vadd.f32 %v1333, %v2341
        %v2742 = vadd.f32 %v1334, %v2342
        %v2743 = vadd.f32 %v1335, %v2343
        %v2744 = vadd.f32 %v1336, %v2344
        %v2745 = vadd.f32 %v1337, %v2345
        %v2746 = vadd.f32 %v1338, %v2346
        %v2747 = vadd.f32 %v1339, %v2347
        %v2748 = vadd.f32 %v1340, %v2348
        %v2749 = vadd.f32 %v1341, %v2349
        %v2750 = vadd.f32 %v1342, %v2350
        %v2751 = vadd.f32 %v1343, %v2351
        %v2752 = vadd.f32 %v1344, %v2352
        %v2753 = vadd.f32 %v1345, %v2353
        %v2754 = vadd.f32 %v1346, %v2354
        %v2755 = vadd.f32 %v1347, %v2355
        %v2756 = vadd.f32 %v1348, %v2356
        %v2757 = vadd.f32 %v1349, %v2357
        %v2758 = vadd.f32 %v1350, %v2358
        %v2759 = vadd.f32 %v1351, %v2359
        %v2760 = vadd.f32 %v1352, %v2360
        %v2761 = vadd.f32 %v1353, %v2361
        %v2762 = vadd.f32 %v1354, %v2362
        %v2763 = vadd.f32 %v1355, %v2363
        %v2764 = vadd.f32 %v1356, %v2364
        %v2765 = vadd.f32 %v1357, %v2365
        %v2766 = vadd.f32 %v1358, %v2366
        %v2767 = vadd.f32 %v1359, %v2367
        %v2768 = vadd.f32 %v1360, %v2368
        %v2769 = vadd.f32 %v1361, %v2369
        %v2770 = vadd.f32 %v1362, %v2370
        %v2771 = vadd.f32 %v1363, %v2371
        %v2772 = vadd.f32 %v1364, %v2372
        %v2773 = vadd.f32 %v1365, %v2373
        %v2774 = vadd.f32 %v1366, %v2374
        %v2775 = vadd.f32 %v1367, %v2375
        %v2776 = vadd.f32 %v1368, %v2376
        %v2777 = vadd.f32 %v1369, %v2377
        %v2778 = vadd.f32 %v1370, %v2378
        %v2779 = vadd.f32 %v1371, %v2379
        %v2780 = vadd.f32 %v1372, %v2380
        %v2781 = vadd.f32 %v1373, %v2381
        %v2782 = vadd.f32 %v1374, %v2382
        %v2783 = vadd.f32 %v1375, %v2383
        %v2784 = vadd.f32 %v1376, %v2384
        %v2785 = vadd.f32 %v1377, %v2385
        %v2786 = vadd.f32 %v1378, %v2386
        %v2787 = vadd.f32 %v1379, %v2387
        %v2788 = vadd.f32 %v1380, %v2388
        %v2789 = vadd.f32 %v1381, %v2389
        %v2790 = vadd.f32 %v1382, %v2390
        %v2791 = vadd.f32 %v1383, %v2391
        %v2792 = vadd.f32 %v1384, %v2392
        %v2793 = vadd.f32 %v1385, %v2393
        %v2794 = vadd.f32 %v1386, %v2394
        %v2795 = vadd.f32 %v1387, %v2395
        %v2796 = vadd.f32 %v1388, %v2396
        %v2797 = vadd.f32 %v1389, %v2397
        %v2798 = vadd.f32 %v1390, %v2398
        %v2799 = vadd.f32 %v1391, %v2399
        %v2800 = vadd.f32 %v1392, %v2400
        %v2801 = vadd.f32 %v1393, %v2401
        %v2802 = vadd.f32 %v1394, %v2402
        %v2803 = vadd.f32 %v1395, %v2403
        %v2804 = vadd.f32 %v1396, %v2404
        %v2805 = vadd.f32 %v1397, %v2405
        %v2806 = vadd.f32 %v1398, %v2406
        %v2807 = vadd.f32 %v1399, %v2407
        %v2808 = vadd.f32 %v1400, %v2408
        %v2809 = vadd.f32 %v1401, %v2409
        %v2810 = vadd.f32 %v1402, %v2410
        %v2811 = vadd.f32 %v1403, %v2411
        %v2812 = vadd.f32 %v1404, %v2412
        %v2813 = vadd.f32 %v1405, %v2413
        %v2814 = vadd.f32 %v1406, %v2414
        %v2815 = vadd.f32 %v1407, %v2415
        %v2816 = vadd.f32 %v1408, %v2416
        %v2817 = vadd.f32 %v1409, %v2417
        %v2818 = vadd.f32 %v1410, %v2418
        %v2819 = vadd.f32 %v1411, %v2419
        %v2820 = vadd.f32 %v1412, %v2420
        %v2821 = vadd.f32 %v1413, %v2421
        %v2822 = vadd.f32 %v1414, %v2422
        %v2823 = vadd.f32 %v1415, %v2423
        %v2824 = vadd.f32 %v1416, %v2424
        %v2825 = vadd.f32 %v1417, %v2425
        %v2826 = vadd.f32 %v1418, %v2426
        %v2827 = vadd.f32 %v1419, %v2427
        %v2828 = vadd.f32 %v1420, %v2428
        %v2829 = vadd.f32 %v1421, %v2429
        %v2830 = vadd.f32 %v1422, %v2430
        %v2831 = vadd.f32 %v1423, %v2431
        %v2832 = vadd.f32 %v1424, %v2432
        %v2833 = vadd.f32 %v1425, %v2433
        %v2834 = vadd.f32 %v1426, %v2434
        %v2835 = vadd.f32 %v1427, %v2435
        %v2836 = vadd.f32 %v1428, %v2436
        %v2837 = vadd.f32 %v1429, %v2437
        %v2838 = vadd.f32 %v1430, %v2438
        %v2839 = vadd.f32 %v1431, %v2439
        %v2840 = vadd.f32 %v1432, %v2440
        %v2841 = vadd.f32 %v1433, %v2441
        %v2842 = vadd.f32 %v1434, %v2442
        %v2843 = vadd.f32 %v1435, %v2443
        %v2844 = vadd.f32 %v1436, %v2444
        %v2845 = vadd.f32 %v1437, %v2445
        %v2846 = vadd.f32 %v1438, %v2446
        %v2847 = vadd.f32 %v1439, %v2447
        %v2848 = vadd.f32 %v1440, %v2448
        %v2849 = vadd.f32 %v1441, %v2449
        %v2850 = vadd.f32 %v1442, %v2450
        %v2851 = vadd.f32 %v1443, %v2451
        %v2852 = vadd.f32 %v1444, %v2452
        %v2853 = vadd.f32 %v1445, %v2453
        %v2854 = vadd.f32 %v1446, %v2454
        %v2855 = vadd.f32 %v1447, %v2455
        %v2856 = vadd.f32 %v1448, %v2456
        %v2857 = vadd.f32 %v1449, %v2457
        %v2858 = vadd.f32 %v1450, %v2458
        %v2859 = vadd.f32 %v1451, %v2459
        %v2860 = vadd.f32 %v1452, %v2460
        %v2861 = vadd.f32 %v1453, %v2461
        %v2862 = vadd.f32 %v1454, %v2462
        %v2863 = vadd.f32 %v1455, %v2463
        %v2864 = vadd.f32 %v1456, %v2464
        %v2865 = vadd.f32 %v1457, %v2465
        %v2866 = vadd.f32 %v1458, %v2466
        %v2867 = vadd.f32 %v1459, %v2467
        %v2868 = vadd.f32 %v1460, %v2468
        %v2869 = vadd.f32 %v1461, %v2469
        %v2870 = vadd.f32 %v1462, %v2470
        %v2871 = vadd.f32 %v1463, %v2471
        %v2872 = vadd.f32 %v1464, %v2472
        %v2873 = vadd.f32 %v1465, %v2473
        %v2874 = vadd.f32 %v1466, %v2474
        %v2875 = vadd.f32 %v1467, %v2475
        %v2876 = vadd.f32 %v1468, %v2476
        %v2877 = vadd.f32 %v1469, %v2477
        %v2878 = vadd.f32 %v1470, %v2478
        %v2879 = vadd.f32 %v1471, %v2479
        %v2880 = vadd.f32 %v1472, %v2480
        %v2881 = vadd.f32 %v1473, %v2481
        %v2882 = vadd.f32 %v1474, %v2482
        %v2883 = vadd.f32 %v1475, %v2483
        %v2884 = vadd.f32 %v1476, %v2484
        %v2885 = vadd.f32 %v1477, %v2485
        %v2886 = vadd.f32 %v1478, %v2486
        %v2887 = vadd.f32 %v1479, %v2487
        %v2888 = vadd.f32 %v1480, %v2488
        %v2889 = vadd.f32 %v1481, %v2489
        %v2890 = vadd.f32 %v1482, %v2490
        %v2891 = vadd.f32 %v1483, %v2491
        %v2892 = vadd.f32 %v1484, %v2492
        %v2893 = vadd.f32 %v1485, %v2493
        %v2894 = vadd.f32 %v1486, %v2494
        %v2895 = vadd.f32 %v1487, %v2495
        %v2896 = vadd.f32 %v1488, %v2496
        %v2897 = vadd.f32 %v1489, %v2497
        %v2898 = vadd.f32 %v1490, %v2498
        %v2899 = vadd.f32 %v1491, %v2499
        %v2900 = vadd.f32 %v1492, %v2500
        %v2901 = vadd.f32 %v1493, %v2501
        %v2902 = vadd.f32 %v1494, %v2502
        %v2903 = vadd.f32 %v1495, %v2503
        %v2904 = vadd.f32 %v1496, %v2504
        %v2905 = vadd.f32 %v1497, %v2505
        %v2906 = vadd.f32 %v1498, %v2506
        %v2907 = vadd.f32 %v1499, %v2507
        %v2908 = vadd.f32 %v1500, %v2508
        %v2909 = vadd.f32 %v1501, %v2509
        %v2910 = vadd.f32 %v1502, %v2510
        %v2911 = vadd.f32 %v1503, %v2511
        %v2912 = vadd.f32 %v1504, %v2512
        %v2913 = vadd.f32 %v1505, %v2513
        %v2914 = vadd.f32 %v1506, %v2514
        %v2915 = vadd.f32 %v1507, %v2515
        %v2916 = vadd.f32 %v1508, %v2516
        %v2917 = vadd.f32 %v1509, %v2517
        %v2918 = vadd.f32 %v1510, %v2518
        %v2919 = vadd.f32 %v1511, %v2519
        %v2920 = vadd.f32 %v1512, %v2520
        %v2921 = vadd.f32 %v1513, %v2521
        %v2922 = vadd.f32 %v1514, %v2522
        %v2923 = vadd.f32 %v1515, %v2523
        %v2924 = vadd.f32 %v1516, %v2524
        %v2925 = vadd.f32 %v1517, %v2525
        %v2926 = vadd.f32 %v1518, %v2526
        %v2927 = vadd.f32 %v1519, %v2527
        %v2928 = vadd.f32 %v1520, %v2528
        %v2929 = vadd.f32 %v1521, %v2529
        %v2930 = vadd.f32 %v1522, %v2530
        %v2931 = vadd.f32 %v1523, %v2531
        %v2932 = vadd.f32 %v1524, %v2532
        %v2933 = vadd.f32 %v1525, %v2533
        %v2934 = vadd.f32 %v1526, %v2534
        %v2935 = vadd.f32 %v1527, %v2535
        %v2936 = vadd.f32 %v1528, %v2536
        %v2937 = vadd.f32 %v1529, %v2537
        %v2938 = vadd.f32 %v1530, %v2538
        %v2939 = vadd.f32 %v1531, %v2539
        %v2940 = vadd.f32 %v1532, %v2540
        %v2941 = vadd.f32 %v1533, %v2541
        %v2942 = vadd.f32 %v1534, %v2542
        %v2943 = vadd.f32 %v1535, %v2543
        %v2944 = vadd.f32 %v1536, %v2544
        %v2945 = vadd.f32 %v1537, %v2545
        %v2946 = vadd.f32 %v1538, %v2546
        %v2947 = vadd.f32 %v1539, %v2547
        %v2948 = vadd.f32 %v1540, %v2548
        %v2949 = vadd.f32 %v1541, %v2549
        %v2950 = vadd.f32 %v1542, %v2550
        %v2951 = vadd.f32 %v1543, %v2551
        %v2952 = vadd.f32 %v1544, %v2552
        %v2953 = vadd.f32 %v1545, %v2553
        %v2954 = vadd.f32 %v1546, %v2554
        %v2955 = vadd.f32 %v1547, %v2555
        %v2956 = vadd.f32 %v1548, %v2556
        %v2957 = vadd.f32 %v1549, %v2557
        %v2958 = vadd.f32 %v1550, %v2558
        %v2959 = vadd.f32 %v1551, %v2559
        %v2960 = vadd.f32 %v1552, %v2560
        %v2961 = vadd.f32 %v1553, %v2561
        %v2962 = vadd.f32 %v1554, %v2562
        %v2963 = vadd.f32 %v1555, %v2563
        %v2964 = vadd.f32 %v1556, %v2564
        %v2965 = vadd.f32 %v1557, %v2565
        %v2966 = vadd.f32 %v1558, %v2566
        %v2967 = vadd.f32 %v1559, %v2567
        %v2968 = vadd.f32 %v1560, %v2568
        %v2969 = vadd.f32 %v1561, %v2569
        %v2970 = vadd.f32 %v1562, %v2570
        %v2971 = vadd.f32 %v1563, %v2571
        %v2972 = vadd.f32 %v1564, %v2572
        %v2973 = vadd.f32 %v1565, %v2573
        %v2974 = vadd.f32 %v1566, %v2574
        %v2975 = vadd.f32 %v1567, %v2575
        %v2976 = vadd.f32 %v1568, %v2576
        %v2977 = vadd.f32 %v1569, %v2577
        %v2978 = vadd.f32 %v1570, %v2578
        %v2979 = vadd.f32 %v1571, %v2579
        %v2980 = vadd.f32 %v1572, %v2580
        %v2981 = vadd.f32 %v1573, %v2581
        %v2982 = vadd.f32 %v1574, %v2582
        %v2983 = vadd.f32 %v1575, %v2583
        %v2984 = vadd.f32 %v1576, %v2584
        %v2985 = vadd.f32 %v1577, %v2585
        %v2986 = vadd.f32 %v1578, %v2586
        %v2987 = vadd.f32 %v1579, %v2587
        %v2988 = vadd.f32 %v1580, %v2588
        %v2989 = vadd.f32 %v1581, %v2589
        %v2990 = vadd.f32 %v1582, %v2590
        %v2991 = vadd.f32 %v1583, %v2591
        %v2992 = vadd.f32 %v1584, %v2592
        %v2993 = vadd.f32 %v1585, %v2593
        %v2994 = vadd.f32 %v1586, %v2594
        %v2995 = vadd.f32 %v1587, %v2595
        %v2996 = vadd.f32 %v1588, %v2596
        %v2997 = vadd.f32 %v1589, %v2597
        %v2998 = vadd.f32 %v1590, %v2598
        %v2999 = vadd.f32 %v1591, %v2599
        %v3000 = vadd.f32 %v1592, %v2600
        %v3001 = vadd.f32 %v1593, %v2601
        %v3002 = vadd.f32 %v1594, %v2602
        %v3003 = vadd.f32 %v1595, %v2603
        %v3004 = vadd.f32 %v1596, %v2604
        %v3005 = vadd.f32 %v1597, %v2605
        %v3006 = vadd.f32 %v1598, %v2606
        %v3007 = vadd.f32 %v1599, %v2607
        %v3008 = vadd.f32 %v1600, %v2608
        %v3009 = vadd.f32 %v1601, %v2609
        %v3010 = vadd.f32 %v1602, %v2610
        %v3011 = vadd.f32 %v1603, %v2611
        %v3012 = vadd.f32 %v1604, %v2612
        %v3013 = vadd.f32 %v1605, %v2613
        %v3014 = vadd.f32 %v1606, %v2614
        %v3015 = vadd.f32 %v1607, %v2615
        %v3016 = vadd.f32 %v1608, %v2616
        %v3017 = vadd.f32 %v1609, %v2617
        %v3018 = vadd.f32 %v1610, %v2618
        %v3019 = vadd.f32 %v1611, %v2619
        %v3020 = vadd.f32 %v1612, %v2620
        %v3021 = vadd.f32 %v1613, %v2621
        %v3022 = vadd.f32 %v1614, %v2622
        %v3023 = vadd.f32 %v1615, %v2623
        %v3024 = vadd.f32 %v1616, %v2624
        %v3025 = vadd.f32 %v1617, %v2625
        %v3026 = vadd.f32 %v1618, %v2626
        %v3027 = vadd.f32 %v1619, %v2627
        %v3028 = vadd.f32 %v1620, %v2628
        %v3029 = vadd.f32 %v1621, %v2629
        %v3030 = vadd.f32 %v1622, %v2630
        %v3031 = vadd.f32 %v1623, %v2631
        %v3032 = vpack.c.bf16 %v2657, %v2632
        %v3033 = vpack.c.bf16 %v2658, %v2633
        %v3034 = vpack.c.bf16 %v2659, %v2634
        %v3035 = vpack.c.bf16 %v2660, %v2635
        %v3036 = vpack.c.bf16 %v2661, %v2636
        %v3037 = vpack.c.bf16 %v2662, %v2637
        %v3038 = vpack.c.bf16 %v2663, %v2638
        %v3039 = vpack.c.bf16 %v2664, %v2639
        %v3040 = vpack.c.bf16 %v2665, %v2640
        %v3041 = vpack.c.bf16 %v2666, %v2641
        %v3042 = vpack.c.bf16 %v2667, %v2642
        %v3043 = vpack.c.bf16 %v2668, %v2643
        %v3044 = vpack.c.bf16 %v2669, %v2644
        %v3045 = vpack.c.bf16 %v2670, %v2645
        %v3046 = vpack.c.bf16 %v2671, %v2646
        %v3047 = vpack.c.bf16 %v2672, %v2647
        %v3048 = vpack.c.bf16 %v2673, %v2648
        %v3049 = vpack.c.bf16 %v2674, %v2649
        %v3050 = vpack.c.bf16 %v2675, %v2650
        %v3051 = vpack.c.bf16 %v2676, %v2651
        %v3052 = vpack.c.bf16 %v2677, %v2652
        %v3053 = vpack.c.bf16 %v2678, %v2653
        %v3054 = vpack.c.bf16 %v2679, %v2654
        %v3055 = vpack.c.bf16 %v2680, %v2655
        %v3056 = vpack.c.bf16 %v2681, %v2656
        %v3057 = vpack.c.bf16 %v2707, %v2682
        %v3058 = vpack.c.bf16 %v2708, %v2683
        %v3059 = vpack.c.bf16 %v2709, %v2684
        %v3060 = vpack.c.bf16 %v2710, %v2685
        %v3061 = vpack.c.bf16 %v2711, %v2686
        %v3062 = vpack.c.bf16 %v2712, %v2687
        %v3063 = vpack.c.bf16 %v2713, %v2688
        %v3064 = vpack.c.bf16 %v2714, %v2689
        %v3065 = vpack.c.bf16 %v2715, %v2690
        %v3066 = vpack.c.bf16 %v2716, %v2691
        %v3067 = vpack.c.bf16 %v2717, %v2692
        %v3068 = vpack.c.bf16 %v2718, %v2693
        %v3069 = vpack.c.bf16 %v2719, %v2694
        %v3070 = vpack.c.bf16 %v2720, %v2695
        %v3071 = vpack.c.bf16 %v2721, %v2696
        %v3072 = vpack.c.bf16 %v2722, %v2697
        %v3073 = vpack.c.bf16 %v2723, %v2698
        %v3074 = vpack.c.bf16 %v2724, %v2699
        %v3075 = vpack.c.bf16 %v2725, %v2700
        %v3076 = vpack.c.bf16 %v2726, %v2701
        %v3077 = vpack.c.bf16 %v2727, %v2702
        %v3078 = vpack.c.bf16 %v2728, %v2703
        %v3079 = vpack.c.bf16 %v2729, %v2704
        %v3080 = vpack.c.bf16 %v2730, %v2705
        %v3081 = vpack.c.bf16 %v2731, %v2706
        %v3082 = vpack.c.bf16 %v2757, %v2732
        %v3083 = vpack.c.bf16 %v2758, %v2733
        %v3084 = vpack.c.bf16 %v2759, %v2734
        %v3085 = vpack.c.bf16 %v2760, %v2735
        %v3086 = vpack.c.bf16 %v2761, %v2736
        %v3087 = vpack.c.bf16 %v2762, %v2737
        %v3088 = vpack.c.bf16 %v2763, %v2738
        %v3089 = vpack.c.bf16 %v2764, %v2739
        %v3090 = vpack.c.bf16 %v2765, %v2740
        %v3091 = vpack.c.bf16 %v2766, %v2741
        %v3092 = vpack.c.bf16 %v2767, %v2742
        %v3093 = vpack.c.bf16 %v2768, %v2743
        %v3094 = vpack.c.bf16 %v2769, %v2744
        %v3095 = vpack.c.bf16 %v2770, %v2745
        %v3096 = vpack.c.bf16 %v2771, %v2746
        %v3097 = vpack.c.bf16 %v2772, %v2747
        %v3098 = vpack.c.bf16 %v2773, %v2748
        %v3099 = vpack.c.bf16 %v2774, %v2749
        %v3100 = vpack.c.bf16 %v2775, %v2750
        %v3101 = vpack.c.bf16 %v2776, %v2751
        %v3102 = vpack.c.bf16 %v2777, %v2752
        %v3103 = vpack.c.bf16 %v2778, %v2753
        %v3104 = vpack.c.bf16 %v2779, %v2754
        %v3105 = vpack.c.bf16 %v2780, %v2755
        %v3106 = vpack.c.bf16 %v2781, %v2756
        %v3107 = vpack.c.bf16 %v2807, %v2782
        %v3108 = vpack.c.bf16 %v2808, %v2783
        %v3109 = vpack.c.bf16 %v2809, %v2784
        %v3110 = vpack.c.bf16 %v2810, %v2785
        %v3111 = vpack.c.bf16 %v2811, %v2786
        %v3112 = vpack.c.bf16 %v2812, %v2787
        %v3113 = vpack.c.bf16 %v2813, %v2788
        %v3114 = vpack.c.bf16 %v2814, %v2789
        %v3115 = vpack.c.bf16 %v2815, %v2790
        %v3116 = vpack.c.bf16 %v2816, %v2791
        %v3117 = vpack.c.bf16 %v2817, %v2792
        %v3118 = vpack.c.bf16 %v2818, %v2793
        %v3119 = vpack.c.bf16 %v2819, %v2794
        %v3120 = vpack.c.bf16 %v2820, %v2795
        %v3121 = vpack.c.bf16 %v2821, %v2796
        %v3122 = vpack.c.bf16 %v2822, %v2797
        %v3123 = vpack.c.bf16 %v2823, %v2798
        %v3124 = vpack.c.bf16 %v2824, %v2799
        %v3125 = vpack.c.bf16 %v2825, %v2800
        %v3126 = vpack.c.bf16 %v2826, %v2801
        %v3127 = vpack.c.bf16 %v2827, %v2802
        %v3128 = vpack.c.bf16 %v2828, %v2803
        %v3129 = vpack.c.bf16 %v2829, %v2804
        %v3130 = vpack.c.bf16 %v2830, %v2805
        %v3131 = vpack.c.bf16 %v2831, %v2806
        %v3132 = vpack.c.bf16 %v2857, %v2832
        %v3133 = vpack.c.bf16 %v2858, %v2833
        %v3134 = vpack.c.bf16 %v2859, %v2834
        %v3135 = vpack.c.bf16 %v2860, %v2835
        %v3136 = vpack.c.bf16 %v2861, %v2836
        %v3137 = vpack.c.bf16 %v2862, %v2837
        %v3138 = vpack.c.bf16 %v2863, %v2838
        %v3139 = vpack.c.bf16 %v2864, %v2839
        %v3140 = vpack.c.bf16 %v2865, %v2840
        %v3141 = vpack.c.bf16 %v2866, %v2841
        %v3142 = vpack.c.bf16 %v2867, %v2842
        %v3143 = vpack.c.bf16 %v2868, %v2843
        %v3144 = vpack.c.bf16 %v2869, %v2844
        %v3145 = vpack.c.bf16 %v2870, %v2845
        %v3146 = vpack.c.bf16 %v2871, %v2846
        %v3147 = vpack.c.bf16 %v2872, %v2847
        %v3148 = vpack.c.bf16 %v2873, %v2848
        %v3149 = vpack.c.bf16 %v2874, %v2849
        %v3150 = vpack.c.bf16 %v2875, %v2850
        %v3151 = vpack.c.bf16 %v2876, %v2851
        %v3152 = vpack.c.bf16 %v2877, %v2852
        %v3153 = vpack.c.bf16 %v2878, %v2853
        %v3154 = vpack.c.bf16 %v2879, %v2854
        %v3155 = vpack.c.bf16 %v2880, %v2855
        %v3156 = vpack.c.bf16 %v2881, %v2856
        %v3157 = vpack.c.bf16 %v2907, %v2882
        %v3158 = vpack.c.bf16 %v2908, %v2883
        %v3159 = vpack.c.bf16 %v2909, %v2884
        %v3160 = vpack.c.bf16 %v2910, %v2885
        %v3161 = vpack.c.bf16 %v2911, %v2886
        %v3162 = vpack.c.bf16 %v2912, %v2887
        %v3163 = vpack.c.bf16 %v2913, %v2888
        %v3164 = vpack.c.bf16 %v2914, %v2889
        %v3165 = vpack.c.bf16 %v2915, %v2890
        %v3166 = vpack.c.bf16 %v2916, %v2891
        %v3167 = vpack.c.bf16 %v2917, %v2892
        %v3168 = vpack.c.bf16 %v2918, %v2893
        %v3169 = vpack.c.bf16 %v2919, %v2894
        %v3170 = vpack.c.bf16 %v2920, %v2895
        %v3171 = vpack.c.bf16 %v2921, %v2896
        %v3172 = vpack.c.bf16 %v2922, %v2897
        %v3173 = vpack.c.bf16 %v2923, %v2898
        %v3174 = vpack.c.bf16 %v2924, %v2899
        %v3175 = vpack.c.bf16 %v2925, %v2900
        %v3176 = vpack.c.bf16 %v2926, %v2901
        %v3177 = vpack.c.bf16 %v2927, %v2902
        %v3178 = vpack.c.bf16 %v2928, %v2903
        %v3179 = vpack.c.bf16 %v2929, %v2904
        %v3180 = vpack.c.bf16 %v2930, %v2905
        %v3181 = vpack.c.bf16 %v2931, %v2906
        %v3182 = vpack.c.bf16 %v2957, %v2932
        %v3183 = vpack.c.bf16 %v2958, %v2933
        %v3184 = vpack.c.bf16 %v2959, %v2934
        %v3185 = vpack.c.bf16 %v2960, %v2935
        %v3186 = vpack.c.bf16 %v2961, %v2936
        %v3187 = vpack.c.bf16 %v2962, %v2937
        %v3188 = vpack.c.bf16 %v2963, %v2938
        %v3189 = vpack.c.bf16 %v2964, %v2939
        %v3190 = vpack.c.bf16 %v2965, %v2940
        %v3191 = vpack.c.bf16 %v2966, %v2941
        %v3192 = vpack.c.bf16 %v2967, %v2942
        %v3193 = vpack.c.bf16 %v2968, %v2943
        %v3194 = vpack.c.bf16 %v2969, %v2944
        %v3195 = vpack.c.bf16 %v2970, %v2945
        %v3196 = vpack.c.bf16 %v2971, %v2946
        %v3197 = vpack.c.bf16 %v2972, %v2947
        %v3198 = vpack.c.bf16 %v2973, %v2948
        %v3199 = vpack.c.bf16 %v2974, %v2949
        %v3200 = vpack.c.bf16 %v2975, %v2950
        %v3201 = vpack.c.bf16 %v2976, %v2951
        %v3202 = vpack.c.bf16 %v2977, %v2952
        %v3203 = vpack.c.bf16 %v2978, %v2953
        %v3204 = vpack.c.bf16 %v2979, %v2954
        %v3205 = vpack.c.bf16 %v2980, %v2955
        %v3206 = vpack.c.bf16 %v2981, %v2956
        %v3207 = vpack.c.bf16 %v3007, %v2982
        %v3208 = vpack.c.bf16 %v3008, %v2983
        %v3209 = vpack.c.bf16 %v3009, %v2984
        %v3210 = vpack.c.bf16 %v3010, %v2985
        %v3211 = vpack.c.bf16 %v3011, %v2986
        %v3212 = vpack.c.bf16 %v3012, %v2987
        %v3213 = vpack.c.bf16 %v3013, %v2988
        %v3214 = vpack.c.bf16 %v3014, %v2989
        %v3215 = vpack.c.bf16 %v3015, %v2990
        %v3216 = vpack.c.bf16 %v3016, %v2991
        %v3217 = vpack.c.bf16 %v3017, %v2992
        %v3218 = vpack.c.bf16 %v3018, %v2993
        %v3219 = vpack.c.bf16 %v3019, %v2994
        %v3220 = vpack.c.bf16 %v3020, %v2995
        %v3221 = vpack.c.bf16 %v3021, %v2996
        %v3222 = vpack.c.bf16 %v3022, %v2997
        %v3223 = vpack.c.bf16 %v3023, %v2998
        %v3224 = vpack.c.bf16 %v3024, %v2999
        %v3225 = vpack.c.bf16 %v3025, %v3000
        %v3226 = vpack.c.bf16 %v3026, %v3001
        %v3227 = vpack.c.bf16 %v3027, %v3002
        %v3228 = vpack.c.bf16 %v3028, %v3003
        %v3229 = vpack.c.bf16 %v3029, %v3004
        %v3230 = vpack.c.bf16 %v3030, %v3005
        %v3231 = vpack.c.bf16 %v3031, %v3006
        %v3232 = vld [vmem:[%s0] sm:$0xff]
        %v3233 = vld [vmem:[%s0 + $0x8] sm:$0xff]
        %v3234 = vld [vmem:[%s0 + $0x10] sm:$0xff]
        %v3235 = vld [vmem:[%s0 + $0x18] sm:$0xff]
        %v3236 = vld [vmem:[%s0 + $0x20] sm:$0xff]
        %v3237 = vld [vmem:[%s0 + $0x28] sm:$0xff]
        %v3238 = vld [vmem:[%s0 + $0x30] sm:$0x3]
        %v3246 = vcombine.high %v3232, %v3232
        %v3248 = vunpack.c.l.s4 1983009808
        %v3249 = vunpack.c.0.s8 %v3248
        %v3250 = vlaneseq
        %v3251 = vshrl.u32 %v3250, 7
        %v3252 = vsub.s32 %v3249, %v3251
        %v3253 = vrot.slane %v3232, %v3252
        %v3255 = vunpack.c.l.s4 1983009808
        %v3256 = vunpack.c.0.s8 %v3255
        %v3257 = vlaneseq
        %v3258 = vshrl.u32 %v3257, 7
        %v3259 = vsub.s32 %v3256, %v3258
        %v3260 = vrot.slane %v3246, %v3259
        %v3261 = vcombine.high %v3253, %v3253
        %v3262 = vcombine.high %v3260, %v3260
        %v3263 = vcombine.high %v3233, %v3233
        %v3265 = vunpack.c.l.s4 1983009808
        %v3266 = vunpack.c.0.s8 %v3265
        %v3267 = vlaneseq
        %v3268 = vshrl.u32 %v3267, 7
        %v3269 = vsub.s32 %v3266, %v3268
        %v3270 = vrot.slane %v3233, %v3269
        %v3272 = vunpack.c.l.s4 1983009808
        %v3273 = vunpack.c.0.s8 %v3272
        %v3274 = vlaneseq
        %v3275 = vshrl.u32 %v3274, 7
        %v3276 = vsub.s32 %v3273, %v3275
        %v3277 = vrot.slane %v3263, %v3276
        %v3278 = vcombine.high %v3270, %v3270
        %v3279 = vcombine.high %v3277, %v3277
        %v3280 = vcombine.high %v3234, %v3234
        %v3282 = vunpack.c.l.s4 1983009808
        %v3283 = vunpack.c.0.s8 %v3282
        %v3284 = vlaneseq
        %v3285 = vshrl.u32 %v3284, 7
        %v3286 = vsub.s32 %v3283, %v3285
        %v3287 = vrot.slane %v3234, %v3286
        %v3289 = vunpack.c.l.s4 1983009808
        %v3290 = vunpack.c.0.s8 %v3289
        %v3291 = vlaneseq
        %v3292 = vshrl.u32 %v3291, 7
        %v3293 = vsub.s32 %v3290, %v3292
        %v3294 = vrot.slane %v3280, %v3293
        %v3295 = vcombine.high %v3287, %v3287
        %v3296 = vcombine.high %v3294, %v3294
        %v3297 = vcombine.high %v3235, %v3235
        %v3299 = vunpack.c.l.s4 1983009808
        %v3300 = vunpack.c.0.s8 %v3299
        %v3301 = vlaneseq
        %v3302 = vshrl.u32 %v3301, 7
        %v3303 = vsub.s32 %v3300, %v3302
        %v3304 = vrot.slane %v3235, %v3303
        %v3306 = vunpack.c.l.s4 1983009808
        %v3307 = vunpack.c.0.s8 %v3306
        %v3308 = vlaneseq
        %v3309 = vshrl.u32 %v3308, 7
        %v3310 = vsub.s32 %v3307, %v3309
        %v3311 = vrot.slane %v3297, %v3310
        %v3312 = vcombine.high %v3304, %v3304
        %v3313 = vcombine.high %v3311, %v3311
        %v3314 = vcombine.high %v3236, %v3236
        %v3316 = vunpack.c.l.s4 1983009808
        %v3317 = vunpack.c.0.s8 %v3316
        %v3318 = vlaneseq
        %v3319 = vshrl.u32 %v3318, 7
        %v3320 = vsub.s32 %v3317, %v3319
        %v3321 = vrot.slane %v3236, %v3320
        %v3323 = vunpack.c.l.s4 1983009808
        %v3324 = vunpack.c.0.s8 %v3323
        %v3325 = vlaneseq
        %v3326 = vshrl.u32 %v3325, 7
        %v3327 = vsub.s32 %v3324, %v3326
        %v3328 = vrot.slane %v3314, %v3327
        %v3329 = vcombine.high %v3321, %v3321
        %v3330 = vcombine.high %v3328, %v3328
        %v3331 = vcombine.high %v3237, %v3237
        %v3333 = vunpack.c.l.s4 1983009808
        %v3334 = vunpack.c.0.s8 %v3333
        %v3335 = vlaneseq
        %v3336 = vshrl.u32 %v3335, 7
        %v3337 = vsub.s32 %v3334, %v3336
        %v3338 = vrot.slane %v3237, %v3337
        %v3340 = vunpack.c.l.s4 1983009808
        %v3341 = vunpack.c.0.s8 %v3340
        %v3342 = vlaneseq
        %v3343 = vshrl.u32 %v3342, 7
        %v3344 = vsub.s32 %v3341, %v3343
        %v3345 = vrot.slane %v3331, %v3344
        %v3346 = vcombine.high %v3338, %v3338
        %v3347 = vcombine.high %v3345, %v3345
        %v3349 = vunpack.c.l.s4 1983009808
        %v3350 = vunpack.c.0.s8 %v3349
        %v3351 = vlaneseq
        %v3352 = vshrl.u32 %v3351, 7
        %v3353 = vsub.s32 %v3350, %v3352
        %v3354 = vrot.slane %v3238, %v3353
        %v3380 = vpack.c.bf16 %v3253, %v3253
        %v3381 = vpack.c.bf16 %v3261, %v3261
        %v3382 = vpack.c.bf16 %v3260, %v3260
        %v3383 = vpack.c.bf16 %v3262, %v3262
        %v3384 = vpack.c.bf16 %v3270, %v3270
        %v3385 = vpack.c.bf16 %v3278, %v3278
        %v3386 = vpack.c.bf16 %v3277, %v3277
        %v3387 = vpack.c.bf16 %v3279, %v3279
        %v3388 = vpack.c.bf16 %v3287, %v3287
        %v3389 = vpack.c.bf16 %v3295, %v3295
        %v3390 = vpack.c.bf16 %v3294, %v3294
        %v3391 = vpack.c.bf16 %v3296, %v3296
        %v3392 = vpack.c.bf16 %v3304, %v3304
        %v3393 = vpack.c.bf16 %v3312, %v3312
        %v3394 = vpack.c.bf16 %v3311, %v3311
        %v3395 = vpack.c.bf16 %v3313, %v3313
        %v3396 = vpack.c.bf16 %v3321, %v3321
        %v3397 = vpack.c.bf16 %v3329, %v3329
        %v3398 = vpack.c.bf16 %v3328, %v3328
        %v3399 = vpack.c.bf16 %v3330, %v3330
        %v3400 = vpack.c.bf16 %v3338, %v3338
        %v3401 = vpack.c.bf16 %v3346, %v3346
        %v3402 = vpack.c.bf16 %v3345, %v3345
        %v3403 = vpack.c.bf16 %v3347, %v3347
        %v3404 = vpack.c.bf16 %v3354, %v3354
        %v3405 = vld [vmem:[%s368] sm:$0x1]
        %v3407 = vlaneseq
        %v3408 = vshrl.u32 %v3407, 7
        %v3409 = vsub.s32 0, %v3408
        %v3410 = vrot.slane %v3405, %v3409
        %vm3412 = vcmask 523264
        %v3414 = vsel %vm3412, %v3404, 0
        %v3417 = vsel %vm3412, %v3056, 0
        %v3420 = vsel %vm3412, %v3081, 0
        %v3423 = vsel %vm3412, %v3106, 0
        %v3426 = vsel %vm3412, %v3131, 0
        %v3429 = vsel %vm3412, %v3156, 0
        %v3432 = vsel %vm3412, %v3181, 0
        %v3435 = vsel %vm3412, %v3206, 0
        %v3438 = vsel %vm3412, %v3231, 0
        %3440 = vmatprep.subr.bf16.mxu0 %v3208
        %3441 = vmatpush1.bf16.xpose.msra.mxu0 %v3207
        %3442 = vmatprep.subr.bf16.mxu0 %v3183
        %3443 = vmatpush1.bf16.xpose.msra.mxu0 %v3182
        %3444 = vmatprep.subr.bf16.mxu0 %v3158
        %3445 = vmatpush1.bf16.xpose.msra.mxu0 %v3157
        %3446 = vmatprep.subr.bf16.mxu0 %v3133
        %3447 = vmatpush1.bf16.xpose.msra.mxu0 %v3132
        %3448 = vmatprep.subr.bf16.mxu0 %v3108
        %3449 = vmatpush1.bf16.xpose.msra.mxu0 %v3107
        %3450 = vmatprep.subr.bf16.mxu0 %v3083
        %3451 = vmatpush1.bf16.xpose.msra.mxu0 %v3082
        %3452 = vmatprep.subr.bf16.mxu0 %v3058
        %3453 = vmatpush1.bf16.xpose.msra.mxu0 %v3057
        %3454 = vmatprep.subr.bf16.mxu0 %v3033
        %3455 = vmatpush1.bf16.xpose.msra.mxu0 %v3032
        %3456 = vmatprep.subr.bf16.mxu0 0
        %3457 = vmatpush2.bf16.xpose.msra.mxu0 0
        %3458 = vmatprep.subr.bf16.mxu0 0
        %3459 = vmatpush2.bf16.xpose.msra.mxu0 0
        %3460 = vmatprep.subr.bf16.mxu0 0
        %3461 = vmatpush2.bf16.xpose.msra.mxu0 0
        %3462 = vmatprep.subr.bf16.mxu0 0
        %3463 = vmatpush2.bf16.xpose.msra.mxu0 0
        %3464 = vmatprep.subr.bf16.mxu0 0
        %3465 = vmatpush2.bf16.xpose.msra.mxu0 0
        %3466 = vmatprep.subr.bf16.mxu0 0
        %3467 = vmatpush2.bf16.xpose.msra.mxu0 0
        %3468 = vmatprep.subr.bf16.mxu0 0
        %3469 = vmatpush2.bf16.xpose.msra.mxu0 0
        %3470 = vmatprep.subr.bf16.mxu0 0
        %3471 = vmatpush2.bf16.xpose.msra.mxu0 0
        %3472 = vmatprep.mubr.bf16.mxu0 %v3381
        %3473 = vmatmul.mubr.bf16.gmra.mxu0 %v3380
        %v3474 = vpop.f32.mrf.mxu0
        %v3475 = vadd.f32 %v3410, %v3474
        %v3476 = vpop.f32.mrf.mxu0
        %v3477 = vpop.f32.mrf.mxu0
        %v3478 = vpop.f32.mrf.mxu0
        %3479 = vdwg.mxu0
        %3480 = vmatprep.subr.bf16.mxu0 %v3210
        %3481 = vmatpush1.bf16.xpose.msra.mxu0 %v3209
        %3482 = vmatprep.subr.bf16.mxu0 %v3185
        %3483 = vmatpush1.bf16.xpose.msra.mxu0 %v3184
        %3484 = vmatprep.subr.bf16.mxu0 %v3160
        %3485 = vmatpush1.bf16.xpose.msra.mxu0 %v3159
        %3486 = vmatprep.subr.bf16.mxu0 %v3135
        %3487 = vmatpush1.bf16.xpose.msra.mxu0 %v3134
        %3488 = vmatprep.subr.bf16.mxu0 %v3110
        %3489 = vmatpush1.bf16.xpose.msra.mxu0 %v3109
        %3490 = vmatprep.subr.bf16.mxu0 %v3085
        %3491 = vmatpush1.bf16.xpose.msra.mxu0 %v3084
        %3492 = vmatprep.subr.bf16.mxu0 %v3060
        %3493 = vmatpush1.bf16.xpose.msra.mxu0 %v3059
        %3494 = vmatprep.subr.bf16.mxu0 %v3035
        %3495 = vmatpush1.bf16.xpose.msra.mxu0 %v3034
        %3496 = vmatprep.subr.bf16.mxu0 0
        %3497 = vmatpush2.bf16.xpose.msra.mxu0 0
        %3498 = vmatprep.subr.bf16.mxu0 0
        %3499 = vmatpush2.bf16.xpose.msra.mxu0 0
        %3500 = vmatprep.subr.bf16.mxu0 0
        %3501 = vmatpush2.bf16.xpose.msra.mxu0 0
        %3502 = vmatprep.subr.bf16.mxu0 0
        %3503 = vmatpush2.bf16.xpose.msra.mxu0 0
        %3504 = vmatprep.subr.bf16.mxu0 0
        %3505 = vmatpush2.bf16.xpose.msra.mxu0 0
        %3506 = vmatprep.subr.bf16.mxu0 0
        %3507 = vmatpush2.bf16.xpose.msra.mxu0 0
        %3508 = vmatprep.subr.bf16.mxu0 0
        %3509 = vmatpush2.bf16.xpose.msra.mxu0 0
        %3510 = vmatprep.subr.bf16.mxu0 0
        %3511 = vmatpush2.bf16.xpose.msra.mxu0 0
        %3512 = vmatprep.mubr.bf16.mxu0 %v3383
        %3513 = vmatmul.mubr.bf16.gmra.mxu0 %v3382
        %v3514 = vpop.f32.mrf.mxu0
        %v3515 = vadd.f32 %v3475, %v3514
        %v3516 = vpop.f32.mrf.mxu0
        %v3517 = vpop.f32.mrf.mxu0
        %v3518 = vpop.f32.mrf.mxu0
        %3519 = vdwg.mxu0
        %3520 = vmatprep.subr.bf16.mxu0 %v3212
        %3521 = vmatpush1.bf16.xpose.msra.mxu0 %v3211
        %3522 = vmatprep.subr.bf16.mxu0 %v3187
        %3523 = vmatpush1.bf16.xpose.msra.mxu0 %v3186
        %3524 = vmatprep.subr.bf16.mxu0 %v3162
        %3525 = vmatpush1.bf16.xpose.msra.mxu0 %v3161
        %3526 = vmatprep.subr.bf16.mxu0 %v3137
        %3527 = vmatpush1.bf16.xpose.msra.mxu0 %v3136
        %3528 = vmatprep.subr.bf16.mxu0 %v3112
        %3529 = vmatpush1.bf16.xpose.msra.mxu0 %v3111
        %3530 = vmatprep.subr.bf16.mxu0 %v3087
        %3531 = vmatpush1.bf16.xpose.msra.mxu0 %v3086
        %3532 = vmatprep.subr.bf16.mxu0 %v3062
        %3533 = vmatpush1.bf16.xpose.msra.mxu0 %v3061
        %3534 = vmatprep.subr.bf16.mxu0 %v3037
        %3535 = vmatpush1.bf16.xpose.msra.mxu0 %v3036
        %3536 = vmatprep.subr.bf16.mxu0 0
        %3537 = vmatpush2.bf16.xpose.msra.mxu0 0
        %3538 = vmatprep.subr.bf16.mxu0 0
        %3539 = vmatpush2.bf16.xpose.msra.mxu0 0
        %3540 = vmatprep.subr.bf16.mxu0 0
        %3541 = vmatpush2.bf16.xpose.msra.mxu0 0
        %3542 = vmatprep.subr.bf16.mxu0 0
        %3543 = vmatpush2.bf16.xpose.msra.mxu0 0
        %3544 = vmatprep.subr.bf16.mxu0 0
        %3545 = vmatpush2.bf16.xpose.msra.mxu0 0
        %3546 = vmatprep.subr.bf16.mxu0 0
        %3547 = vmatpush2.bf16.xpose.msra.mxu0 0
        %3548 = vmatprep.subr.bf16.mxu0 0
        %3549 = vmatpush2.bf16.xpose.msra.mxu0 0
        %3550 = vmatprep.subr.bf16.mxu0 0
        %3551 = vmatpush2.bf16.xpose.msra.mxu0 0
        %3552 = vmatprep.mubr.bf16.mxu0 %v3385
        %3553 = vmatmul.mubr.bf16.gmra.mxu0 %v3384
        %v3554 = vpop.f32.mrf.mxu0
        %v3555 = vadd.f32 %v3515, %v3554
        %v3556 = vpop.f32.mrf.mxu0
        %v3557 = vpop.f32.mrf.mxu0
        %v3558 = vpop.f32.mrf.mxu0
        %3559 = vdwg.mxu0
        %3560 = vmatprep.subr.bf16.mxu0 %v3214
        %3561 = vmatpush1.bf16.xpose.msra.mxu0 %v3213
        %3562 = vmatprep.subr.bf16.mxu0 %v3189
        %3563 = vmatpush1.bf16.xpose.msra.mxu0 %v3188
        %3564 = vmatprep.subr.bf16.mxu0 %v3164
        %3565 = vmatpush1.bf16.xpose.msra.mxu0 %v3163
        %3566 = vmatprep.subr.bf16.mxu0 %v3139
        %3567 = vmatpush1.bf16.xpose.msra.mxu0 %v3138
        %3568 = vmatprep.subr.bf16.mxu0 %v3114
        %3569 = vmatpush1.bf16.xpose.msra.mxu0 %v3113
        %3570 = vmatprep.subr.bf16.mxu0 %v3089
        %3571 = vmatpush1.bf16.xpose.msra.mxu0 %v3088
        %3572 = vmatprep.subr.bf16.mxu0 %v3064
        %3573 = vmatpush1.bf16.xpose.msra.mxu0 %v3063
        %3574 = vmatprep.subr.bf16.mxu0 %v3039
        %3575 = vmatpush1.bf16.xpose.msra.mxu0 %v3038
        %3576 = vmatprep.subr.bf16.mxu0 0
        %3577 = vmatpush2.bf16.xpose.msra.mxu0 0
        %3578 = vmatprep.subr.bf16.mxu0 0
        %3579 = vmatpush2.bf16.xpose.msra.mxu0 0
        %3580 = vmatprep.subr.bf16.mxu0 0
        %3581 = vmatpush2.bf16.xpose.msra.mxu0 0
        %3582 = vmatprep.subr.bf16.mxu0 0
        %3583 = vmatpush2.bf16.xpose.msra.mxu0 0
        %3584 = vmatprep.subr.bf16.mxu0 0
        %3585 = vmatpush2.bf16.xpose.msra.mxu0 0
        %3586 = vmatprep.subr.bf16.mxu0 0
        %3587 = vmatpush2.bf16.xpose.msra.mxu0 0
        %3588 = vmatprep.subr.bf16.mxu0 0
        %3589 = vmatpush2.bf16.xpose.msra.mxu0 0
        %3590 = vmatprep.subr.bf16.mxu0 0
        %3591 = vmatpush2.bf16.xpose.msra.mxu0 0
        %3592 = vmatprep.mubr.bf16.mxu0 %v3387
        %3593 = vmatmul.mubr.bf16.gmra.mxu0 %v3386
        %v3594 = vpop.f32.mrf.mxu0
        %v3595 = vadd.f32 %v3555, %v3594
        %v3596 = vpop.f32.mrf.mxu0
        %v3597 = vpop.f32.mrf.mxu0
        %v3598 = vpop.f32.mrf.mxu0
        %3599 = vdwg.mxu0
        %3600 = vmatprep.subr.bf16.mxu0 %v3216
        %3601 = vmatpush1.bf16.xpose.msra.mxu0 %v3215
        %3602 = vmatprep.subr.bf16.mxu0 %v3191
        %3603 = vmatpush1.bf16.xpose.msra.mxu0 %v3190
        %3604 = vmatprep.subr.bf16.mxu0 %v3166
        %3605 = vmatpush1.bf16.xpose.msra.mxu0 %v3165
        %3606 = vmatprep.subr.bf16.mxu0 %v3141
        %3607 = vmatpush1.bf16.xpose.msra.mxu0 %v3140
        %3608 = vmatprep.subr.bf16.mxu0 %v3116
        %3609 = vmatpush1.bf16.xpose.msra.mxu0 %v3115
        %3610 = vmatprep.subr.bf16.mxu0 %v3091
        %3611 = vmatpush1.bf16.xpose.msra.mxu0 %v3090
        %3612 = vmatprep.subr.bf16.mxu0 %v3066
        %3613 = vmatpush1.bf16.xpose.msra.mxu0 %v3065
        %3614 = vmatprep.subr.bf16.mxu0 %v3041
        %3615 = vmatpush1.bf16.xpose.msra.mxu0 %v3040
        %3616 = vmatprep.subr.bf16.mxu0 0
        %3617 = vmatpush2.bf16.xpose.msra.mxu0 0
        %3618 = vmatprep.subr.bf16.mxu0 0
        %3619 = vmatpush2.bf16.xpose.msra.mxu0 0
        %3620 = vmatprep.subr.bf16.mxu0 0
        %3621 = vmatpush2.bf16.xpose.msra.mxu0 0
        %3622 = vmatprep.subr.bf16.mxu0 0
        %3623 = vmatpush2.bf16.xpose.msra.mxu0 0
        %3624 = vmatprep.subr.bf16.mxu0 0
        %3625 = vmatpush2.bf16.xpose.msra.mxu0 0
        %3626 = vmatprep.subr.bf16.mxu0 0
        %3627 = vmatpush2.bf16.xpose.msra.mxu0 0
        %3628 = vmatprep.subr.bf16.mxu0 0
        %3629 = vmatpush2.bf16.xpose.msra.mxu0 0
        %3630 = vmatprep.subr.bf16.mxu0 0
        %3631 = vmatpush2.bf16.xpose.msra.mxu0 0
        %3632 = vmatprep.mubr.bf16.mxu0 %v3389
        %3633 = vmatmul.mubr.bf16.gmra.mxu0 %v3388
        %v3634 = vpop.f32.mrf.mxu0
        %v3635 = vadd.f32 %v3595, %v3634
        %v3636 = vpop.f32.mrf.mxu0
        %v3637 = vpop.f32.mrf.mxu0
        %v3638 = vpop.f32.mrf.mxu0
        %3639 = vdwg.mxu0
        %3640 = vmatprep.subr.bf16.mxu0 %v3218
        %3641 = vmatpush1.bf16.xpose.msra.mxu0 %v3217
        %3642 = vmatprep.subr.bf16.mxu0 %v3193
        %3643 = vmatpush1.bf16.xpose.msra.mxu0 %v3192
        %3644 = vmatprep.subr.bf16.mxu0 %v3168
        %3645 = vmatpush1.bf16.xpose.msra.mxu0 %v3167
        %3646 = vmatprep.subr.bf16.mxu0 %v3143
        %3647 = vmatpush1.bf16.xpose.msra.mxu0 %v3142
        %3648 = vmatprep.subr.bf16.mxu0 %v3118
        %3649 = vmatpush1.bf16.xpose.msra.mxu0 %v3117
        %3650 = vmatprep.subr.bf16.mxu0 %v3093
        %3651 = vmatpush1.bf16.xpose.msra.mxu0 %v3092
        %3652 = vmatprep.subr.bf16.mxu0 %v3068
        %3653 = vmatpush1.bf16.xpose.msra.mxu0 %v3067
        %3654 = vmatprep.subr.bf16.mxu0 %v3043
        %3655 = vmatpush1.bf16.xpose.msra.mxu0 %v3042
        %3656 = vmatprep.subr.bf16.mxu0 0
        %3657 = vmatpush2.bf16.xpose.msra.mxu0 0
        %3658 = vmatprep.subr.bf16.mxu0 0
        %3659 = vmatpush2.bf16.xpose.msra.mxu0 0
        %3660 = vmatprep.subr.bf16.mxu0 0
        %3661 = vmatpush2.bf16.xpose.msra.mxu0 0
        %3662 = vmatprep.subr.bf16.mxu0 0
        %3663 = vmatpush2.bf16.xpose.msra.mxu0 0
        %3664 = vmatprep.subr.bf16.mxu0 0
        %3665 = vmatpush2.bf16.xpose.msra.mxu0 0
        %3666 = vmatprep.subr.bf16.mxu0 0
        %3667 = vmatpush2.bf16.xpose.msra.mxu0 0
        %3668 = vmatprep.subr.bf16.mxu0 0
        %3669 = vmatpush2.bf16.xpose.msra.mxu0 0
        %3670 = vmatprep.subr.bf16.mxu0 0
        %3671 = vmatpush2.bf16.xpose.msra.mxu0 0
        %3672 = vmatprep.mubr.bf16.mxu0 %v3391
        %3673 = vmatmul.mubr.bf16.gmra.mxu0 %v3390
        %v3674 = vpop.f32.mrf.mxu0
        %v3675 = vadd.f32 %v3635, %v3674
        %v3676 = vpop.f32.mrf.mxu0
        %v3677 = vpop.f32.mrf.mxu0
        %v3678 = vpop.f32.mrf.mxu0
        %3679 = vdwg.mxu0
        %3680 = vmatprep.subr.bf16.mxu0 %v3220
        %3681 = vmatpush1.bf16.xpose.msra.mxu0 %v3219
        %3682 = vmatprep.subr.bf16.mxu0 %v3195
        %3683 = vmatpush1.bf16.xpose.msra.mxu0 %v3194
        %3684 = vmatprep.subr.bf16.mxu0 %v3170
        %3685 = vmatpush1.bf16.xpose.msra.mxu0 %v3169
        %3686 = vmatprep.subr.bf16.mxu0 %v3145
        %3687 = vmatpush1.bf16.xpose.msra.mxu0 %v3144
        %3688 = vmatprep.subr.bf16.mxu0 %v3120
        %3689 = vmatpush1.bf16.xpose.msra.mxu0 %v3119
        %3690 = vmatprep.subr.bf16.mxu0 %v3095
        %3691 = vmatpush1.bf16.xpose.msra.mxu0 %v3094
        %3692 = vmatprep.subr.bf16.mxu0 %v3070
        %3693 = vmatpush1.bf16.xpose.msra.mxu0 %v3069
        %3694 = vmatprep.subr.bf16.mxu0 %v3045
        %3695 = vmatpush1.bf16.xpose.msra.mxu0 %v3044
        %3696 = vmatprep.subr.bf16.mxu0 0
        %3697 = vmatpush2.bf16.xpose.msra.mxu0 0
        %3698 = vmatprep.subr.bf16.mxu0 0
        %3699 = vmatpush2.bf16.xpose.msra.mxu0 0
        %3700 = vmatprep.subr.bf16.mxu0 0
        %3701 = vmatpush2.bf16.xpose.msra.mxu0 0
        %3702 = vmatprep.subr.bf16.mxu0 0
        %3703 = vmatpush2.bf16.xpose.msra.mxu0 0
        %3704 = vmatprep.subr.bf16.mxu0 0
        %3705 = vmatpush2.bf16.xpose.msra.mxu0 0
        %3706 = vmatprep.subr.bf16.mxu0 0
        %3707 = vmatpush2.bf16.xpose.msra.mxu0 0
        %3708 = vmatprep.subr.bf16.mxu0 0
        %3709 = vmatpush2.bf16.xpose.msra.mxu0 0
        %3710 = vmatprep.subr.bf16.mxu0 0
        %3711 = vmatpush2.bf16.xpose.msra.mxu0 0
        %3712 = vmatprep.mubr.bf16.mxu0 %v3393
        %3713 = vmatmul.mubr.bf16.gmra.mxu0 %v3392
        %v3714 = vpop.f32.mrf.mxu0
        %v3715 = vadd.f32 %v3675, %v3714
        %v3716 = vpop.f32.mrf.mxu0
        %v3717 = vpop.f32.mrf.mxu0
        %v3718 = vpop.f32.mrf.mxu0
        %3719 = vdwg.mxu0
        %3720 = vmatprep.subr.bf16.mxu0 %v3222
        %3721 = vmatpush1.bf16.xpose.msra.mxu0 %v3221
        %3722 = vmatprep.subr.bf16.mxu0 %v3197
        %3723 = vmatpush1.bf16.xpose.msra.mxu0 %v3196
        %3724 = vmatprep.subr.bf16.mxu0 %v3172
        %3725 = vmatpush1.bf16.xpose.msra.mxu0 %v3171
        %3726 = vmatprep.subr.bf16.mxu0 %v3147
        %3727 = vmatpush1.bf16.xpose.msra.mxu0 %v3146
        %3728 = vmatprep.subr.bf16.mxu0 %v3122
        %3729 = vmatpush1.bf16.xpose.msra.mxu0 %v3121
        %3730 = vmatprep.subr.bf16.mxu0 %v3097
        %3731 = vmatpush1.bf16.xpose.msra.mxu0 %v3096
        %3732 = vmatprep.subr.bf16.mxu0 %v3072
        %3733 = vmatpush1.bf16.xpose.msra.mxu0 %v3071
        %3734 = vmatprep.subr.bf16.mxu0 %v3047
        %3735 = vmatpush1.bf16.xpose.msra.mxu0 %v3046
        %3736 = vmatprep.subr.bf16.mxu0 0
        %3737 = vmatpush2.bf16.xpose.msra.mxu0 0
        %3738 = vmatprep.subr.bf16.mxu0 0
        %3739 = vmatpush2.bf16.xpose.msra.mxu0 0
        %3740 = vmatprep.subr.bf16.mxu0 0
        %3741 = vmatpush2.bf16.xpose.msra.mxu0 0
        %3742 = vmatprep.subr.bf16.mxu0 0
        %3743 = vmatpush2.bf16.xpose.msra.mxu0 0
        %3744 = vmatprep.subr.bf16.mxu0 0
        %3745 = vmatpush2.bf16.xpose.msra.mxu0 0
        %3746 = vmatprep.subr.bf16.mxu0 0
        %3747 = vmatpush2.bf16.xpose.msra.mxu0 0
        %3748 = vmatprep.subr.bf16.mxu0 0
        %3749 = vmatpush2.bf16.xpose.msra.mxu0 0
        %3750 = vmatprep.subr.bf16.mxu0 0
        %3751 = vmatpush2.bf16.xpose.msra.mxu0 0
        %3752 = vmatprep.mubr.bf16.mxu0 %v3395
        %3753 = vmatmul.mubr.bf16.gmra.mxu0 %v3394
        %v3754 = vpop.f32.mrf.mxu0
        %v3755 = vadd.f32 %v3715, %v3754
        %v3756 = vpop.f32.mrf.mxu0
        %v3757 = vpop.f32.mrf.mxu0
        %v3758 = vpop.f32.mrf.mxu0
        %3759 = vdwg.mxu0
        %3760 = vmatprep.subr.bf16.mxu0 %v3224
        %3761 = vmatpush1.bf16.xpose.msra.mxu0 %v3223
        %3762 = vmatprep.subr.bf16.mxu0 %v3199
        %3763 = vmatpush1.bf16.xpose.msra.mxu0 %v3198
        %3764 = vmatprep.subr.bf16.mxu0 %v3174
        %3765 = vmatpush1.bf16.xpose.msra.mxu0 %v3173
        %3766 = vmatprep.subr.bf16.mxu0 %v3149
        %3767 = vmatpush1.bf16.xpose.msra.mxu0 %v3148
        %3768 = vmatprep.subr.bf16.mxu0 %v3124
        %3769 = vmatpush1.bf16.xpose.msra.mxu0 %v3123
        %3770 = vmatprep.subr.bf16.mxu0 %v3099
        %3771 = vmatpush1.bf16.xpose.msra.mxu0 %v3098
        %3772 = vmatprep.subr.bf16.mxu0 %v3074
        %3773 = vmatpush1.bf16.xpose.msra.mxu0 %v3073
        %3774 = vmatprep.subr.bf16.mxu0 %v3049
        %3775 = vmatpush1.bf16.xpose.msra.mxu0 %v3048
        %3776 = vmatprep.subr.bf16.mxu0 0
        %3777 = vmatpush2.bf16.xpose.msra.mxu0 0
        %3778 = vmatprep.subr.bf16.mxu0 0
        %3779 = vmatpush2.bf16.xpose.msra.mxu0 0
        %3780 = vmatprep.subr.bf16.mxu0 0
        %3781 = vmatpush2.bf16.xpose.msra.mxu0 0
        %3782 = vmatprep.subr.bf16.mxu0 0
        %3783 = vmatpush2.bf16.xpose.msra.mxu0 0
        %3784 = vmatprep.subr.bf16.mxu0 0
        %3785 = vmatpush2.bf16.xpose.msra.mxu0 0
        %3786 = vmatprep.subr.bf16.mxu0 0
        %3787 = vmatpush2.bf16.xpose.msra.mxu0 0
        %3788 = vmatprep.subr.bf16.mxu0 0
        %3789 = vmatpush2.bf16.xpose.msra.mxu0 0
        %3790 = vmatprep.subr.bf16.mxu0 0
        %3791 = vmatpush2.bf16.xpose.msra.mxu0 0
        %3792 = vmatprep.mubr.bf16.mxu0 %v3397
        %3793 = vmatmul.mubr.bf16.gmra.mxu0 %v3396
        %v3794 = vpop.f32.mrf.mxu0
        %v3795 = vadd.f32 %v3755, %v3794
        %v3796 = vpop.f32.mrf.mxu0
        %v3797 = vpop.f32.mrf.mxu0
        %v3798 = vpop.f32.mrf.mxu0
        %3799 = vdwg.mxu0
        %3800 = vmatprep.subr.bf16.mxu0 %v3226
        %3801 = vmatpush1.bf16.xpose.msra.mxu0 %v3225
        %3802 = vmatprep.subr.bf16.mxu0 %v3201
        %3803 = vmatpush1.bf16.xpose.msra.mxu0 %v3200
        %3804 = vmatprep.subr.bf16.mxu0 %v3176
        %3805 = vmatpush1.bf16.xpose.msra.mxu0 %v3175
        %3806 = vmatprep.subr.bf16.mxu0 %v3151
        %3807 = vmatpush1.bf16.xpose.msra.mxu0 %v3150
        %3808 = vmatprep.subr.bf16.mxu0 %v3126
        %3809 = vmatpush1.bf16.xpose.msra.mxu0 %v3125
        %3810 = vmatprep.subr.bf16.mxu0 %v3101
        %3811 = vmatpush1.bf16.xpose.msra.mxu0 %v3100
        %3812 = vmatprep.subr.bf16.mxu0 %v3076
        %3813 = vmatpush1.bf16.xpose.msra.mxu0 %v3075
        %3814 = vmatprep.subr.bf16.mxu0 %v3051
        %3815 = vmatpush1.bf16.xpose.msra.mxu0 %v3050
        %3816 = vmatprep.subr.bf16.mxu0 0
        %3817 = vmatpush2.bf16.xpose.msra.mxu0 0
        %3818 = vmatprep.subr.bf16.mxu0 0
        %3819 = vmatpush2.bf16.xpose.msra.mxu0 0
        %3820 = vmatprep.subr.bf16.mxu0 0
        %3821 = vmatpush2.bf16.xpose.msra.mxu0 0
        %3822 = vmatprep.subr.bf16.mxu0 0
        %3823 = vmatpush2.bf16.xpose.msra.mxu0 0
        %3824 = vmatprep.subr.bf16.mxu0 0
        %3825 = vmatpush2.bf16.xpose.msra.mxu0 0
        %3826 = vmatprep.subr.bf16.mxu0 0
        %3827 = vmatpush2.bf16.xpose.msra.mxu0 0
        %3828 = vmatprep.subr.bf16.mxu0 0
        %3829 = vmatpush2.bf16.xpose.msra.mxu0 0
        %3830 = vmatprep.subr.bf16.mxu0 0
        %3831 = vmatpush2.bf16.xpose.msra.mxu0 0
        %3832 = vmatprep.mubr.bf16.mxu0 %v3399
        %3833 = vmatmul.mubr.bf16.gmra.mxu0 %v3398
        %v3834 = vpop.f32.mrf.mxu0
        %v3835 = vadd.f32 %v3795, %v3834
        %v3836 = vpop.f32.mrf.mxu0
        %v3837 = vpop.f32.mrf.mxu0
        %v3838 = vpop.f32.mrf.mxu0
        %3839 = vdwg.mxu0
        %3840 = vmatprep.subr.bf16.mxu0 %v3228
        %3841 = vmatpush1.bf16.xpose.msra.mxu0 %v3227
        %3842 = vmatprep.subr.bf16.mxu0 %v3203
        %3843 = vmatpush1.bf16.xpose.msra.mxu0 %v3202
        %3844 = vmatprep.subr.bf16.mxu0 %v3178
        %3845 = vmatpush1.bf16.xpose.msra.mxu0 %v3177
        %3846 = vmatprep.subr.bf16.mxu0 %v3153
        %3847 = vmatpush1.bf16.xpose.msra.mxu0 %v3152
        %3848 = vmatprep.subr.bf16.mxu0 %v3128
        %3849 = vmatpush1.bf16.xpose.msra.mxu0 %v3127
        %3850 = vmatprep.subr.bf16.mxu0 %v3103
        %3851 = vmatpush1.bf16.xpose.msra.mxu0 %v3102
        %3852 = vmatprep.subr.bf16.mxu0 %v3078
        %3853 = vmatpush1.bf16.xpose.msra.mxu0 %v3077
        %3854 = vmatprep.subr.bf16.mxu0 %v3053
        %3855 = vmatpush1.bf16.xpose.msra.mxu0 %v3052
        %3856 = vmatprep.subr.bf16.mxu0 0
        %3857 = vmatpush2.bf16.xpose.msra.mxu0 0
        %3858 = vmatprep.subr.bf16.mxu0 0
        %3859 = vmatpush2.bf16.xpose.msra.mxu0 0
        %3860 = vmatprep.subr.bf16.mxu0 0
        %3861 = vmatpush2.bf16.xpose.msra.mxu0 0
        %3862 = vmatprep.subr.bf16.mxu0 0
        %3863 = vmatpush2.bf16.xpose.msra.mxu0 0
        %3864 = vmatprep.subr.bf16.mxu0 0
        %3865 = vmatpush2.bf16.xpose.msra.mxu0 0
        %3866 = vmatprep.subr.bf16.mxu0 0
        %3867 = vmatpush2.bf16.xpose.msra.mxu0 0
        %3868 = vmatprep.subr.bf16.mxu0 0
        %3869 = vmatpush2.bf16.xpose.msra.mxu0 0
        %3870 = vmatprep.subr.bf16.mxu0 0
        %3871 = vmatpush2.bf16.xpose.msra.mxu0 0
        %3872 = vmatprep.mubr.bf16.mxu0 %v3401
        %3873 = vmatmul.mubr.bf16.gmra.mxu0 %v3400
        %v3874 = vpop.f32.mrf.mxu0
        %v3875 = vadd.f32 %v3835, %v3874
        %v3876 = vpop.f32.mrf.mxu0
        %v3877 = vpop.f32.mrf.mxu0
        %v3878 = vpop.f32.mrf.mxu0
        %3879 = vdwg.mxu0
        %3880 = vmatprep.subr.bf16.mxu0 %v3230
        %3881 = vmatpush1.bf16.xpose.msra.mxu0 %v3229
        %3882 = vmatprep.subr.bf16.mxu0 %v3205
        %3883 = vmatpush1.bf16.xpose.msra.mxu0 %v3204
        %3884 = vmatprep.subr.bf16.mxu0 %v3180
        %3885 = vmatpush1.bf16.xpose.msra.mxu0 %v3179
        %3886 = vmatprep.subr.bf16.mxu0 %v3155
        %3887 = vmatpush1.bf16.xpose.msra.mxu0 %v3154
        %3888 = vmatprep.subr.bf16.mxu0 %v3130
        %3889 = vmatpush1.bf16.xpose.msra.mxu0 %v3129
        %3890 = vmatprep.subr.bf16.mxu0 %v3105
        %3891 = vmatpush1.bf16.xpose.msra.mxu0 %v3104
        %3892 = vmatprep.subr.bf16.mxu0 %v3080
        %3893 = vmatpush1.bf16.xpose.msra.mxu0 %v3079
        %3894 = vmatprep.subr.bf16.mxu0 %v3055
        %3895 = vmatpush1.bf16.xpose.msra.mxu0 %v3054
        %3896 = vmatprep.subr.bf16.mxu0 0
        %3897 = vmatpush2.bf16.xpose.msra.mxu0 0
        %3898 = vmatprep.subr.bf16.mxu0 0
        %3899 = vmatpush2.bf16.xpose.msra.mxu0 0
        %3900 = vmatprep.subr.bf16.mxu0 0
        %3901 = vmatpush2.bf16.xpose.msra.mxu0 0
        %3902 = vmatprep.subr.bf16.mxu0 0
        %3903 = vmatpush2.bf16.xpose.msra.mxu0 0
        %3904 = vmatprep.subr.bf16.mxu0 0
        %3905 = vmatpush2.bf16.xpose.msra.mxu0 0
        %3906 = vmatprep.subr.bf16.mxu0 0
        %3907 = vmatpush2.bf16.xpose.msra.mxu0 0
        %3908 = vmatprep.subr.bf16.mxu0 0
        %3909 = vmatpush2.bf16.xpose.msra.mxu0 0
        %3910 = vmatprep.subr.bf16.mxu0 0
        %3911 = vmatpush2.bf16.xpose.msra.mxu0 0
        %3912 = vmatprep.mubr.bf16.mxu0 %v3403
        %3913 = vmatmul.mubr.bf16.gmra.mxu0 %v3402
        %v3914 = vpop.f32.mrf.mxu0
        %v3915 = vadd.f32 %v3875, %v3914
        %v3916 = vpop.f32.mrf.mxu0
        %v3917 = vpop.f32.mrf.mxu0
        %v3918 = vpop.f32.mrf.mxu0
        %3919 = vdwg.mxu0
        %3920 = vmatprep.subr.bf16.mxu0 0
        %3921 = vmatpush1.bf16.xpose.msra.mxu0 %v3438
        %3922 = vmatprep.subr.bf16.mxu0 0
        %3923 = vmatpush1.bf16.xpose.msra.mxu0 %v3435
        %3924 = vmatprep.subr.bf16.mxu0 0
        %3925 = vmatpush1.bf16.xpose.msra.mxu0 %v3432
        %3926 = vmatprep.subr.bf16.mxu0 0
        %3927 = vmatpush1.bf16.xpose.msra.mxu0 %v3429
        %3928 = vmatprep.subr.bf16.mxu0 0
        %3929 = vmatpush1.bf16.xpose.msra.mxu0 %v3426
        %3930 = vmatprep.subr.bf16.mxu0 0
        %3931 = vmatpush1.bf16.xpose.msra.mxu0 %v3423
        %3932 = vmatprep.subr.bf16.mxu0 0
        %3933 = vmatpush1.bf16.xpose.msra.mxu0 %v3420
        %3934 = vmatprep.subr.bf16.mxu0 0
        %3935 = vmatpush1.bf16.xpose.msra.mxu0 %v3417
        %3936 = vmatprep.subr.bf16.mxu0 0
        %3937 = vmatpush2.bf16.xpose.msra.mxu0 0
        %3938 = vmatprep.subr.bf16.mxu0 0
        %3939 = vmatpush2.bf16.xpose.msra.mxu0 0
        %3940 = vmatprep.subr.bf16.mxu0 0
        %3941 = vmatpush2.bf16.xpose.msra.mxu0 0
        %3942 = vmatprep.subr.bf16.mxu0 0
        %3943 = vmatpush2.bf16.xpose.msra.mxu0 0
        %3944 = vmatprep.subr.bf16.mxu0 0
        %3945 = vmatpush2.bf16.xpose.msra.mxu0 0
        %3946 = vmatprep.subr.bf16.mxu0 0
        %3947 = vmatpush2.bf16.xpose.msra.mxu0 0
        %3948 = vmatprep.subr.bf16.mxu0 0
        %3949 = vmatpush2.bf16.xpose.msra.mxu0 0
        %3950 = vmatprep.subr.bf16.mxu0 0
        %3951 = vmatpush2.bf16.xpose.msra.mxu0 0
        %3952 = vmatprep.mubr.bf16.mxu0 0
        %3953 = vmatmul.mubr.bf16.gmra.mxu0 %v3414
        %v3954 = vpop.f32.mrf.mxu0
        %v3955 = vadd.f32 %v3915, %v3954
        %v3956 = vpop.f32.mrf.mxu0
        %v3957 = vpop.f32.mrf.mxu0
        %v3958 = vpop.f32.mrf.mxu0
        %3959 = vdwg.mxu0
        %v3960 = vmax.f32 %v3955, 0.0
        %v3961 = vld [vmem:[#allocation2] sm:$0x3]
        %v3962 = vpack.c.bf16 %v3960, %v3960
        %v3963 = vld [vmem:[%s371] sm:$0x1]
        %3964 = vmatprep.subr.bf16.mxu0 0
        %3965 = vmatpush1.bf16.xpose.msra.mxu0 0
        %3966 = vmatprep.subr.bf16.mxu0 0
        %3967 = vmatpush1.bf16.xpose.msra.mxu0 0
        %3968 = vmatprep.subr.bf16.mxu0 0
        %3969 = vmatpush1.bf16.xpose.msra.mxu0 0
        %3970 = vmatprep.subr.bf16.mxu0 0
        %3971 = vmatpush1.bf16.xpose.msra.mxu0 0
        %3972 = vmatprep.subr.bf16.mxu0 0
        %3973 = vmatpush1.bf16.xpose.msra.mxu0 0
        %3974 = vmatprep.subr.bf16.mxu0 0
        %3975 = vmatpush1.bf16.xpose.msra.mxu0 0
        %3976 = vmatprep.subr.bf16.mxu0 0
        %3977 = vmatpush1.bf16.xpose.msra.mxu0 0
        %3978 = vmatprep.subr.bf16.mxu0 0
        %3979 = vmatpush1.bf16.xpose.msra.mxu0 %v3963
        %3980 = vmatprep.subr.bf16.mxu0 0
        %3981 = vmatpush2.bf16.xpose.msra.mxu0 0
        %3982 = vmatprep.subr.bf16.mxu0 0
        %3983 = vmatpush2.bf16.xpose.msra.mxu0 0
        %3984 = vmatprep.subr.bf16.mxu0 0
        %3985 = vmatpush2.bf16.xpose.msra.mxu0 0
        %3986 = vmatprep.subr.bf16.mxu0 0
        %3987 = vmatpush2.bf16.xpose.msra.mxu0 0
        %3988 = vmatprep.subr.bf16.mxu0 0
        %3989 = vmatpush2.bf16.xpose.msra.mxu0 0
        %3990 = vmatprep.subr.bf16.mxu0 0
        %3991 = vmatpush2.bf16.xpose.msra.mxu0 0
        %3992 = vmatprep.subr.bf16.mxu0 0
        %3993 = vmatpush2.bf16.xpose.msra.mxu0 0
        %3994 = vmatprep.subr.bf16.mxu0 0
        %3995 = vmatpush2.bf16.xpose.msra.mxu0 0
        %3996 = vmatprep.mubr.bf16.mxu0 0
        %3997 = vmatmul.mubr.bf16.gmra.mxu0 %v3962
        %v3998 = vpop.f32.mrf.mxu0
        %v3999 = vadd.f32 0.0, %v3998
        %v4000 = vpop.f32.mrf.mxu0
        %v4001 = vpop.f32.mrf.mxu0
        %v4002 = vpop.f32.mrf.mxu0
        %4003 = vdwg.mxu0
        %v4004 = vadd.f32 %v3961, %v3999
        %vm4005 = vcmask 9216
        %4006 = vst.msk [vmem:[#allocation2] sm:$0x3] %vm4005, %v4004
        // Predicated region
        $region57: #{noisy_net_forward.9} parent=51 // pred_check
          %p4007 = pneg %p226
        $region58: #{noisy_net_forward.9} parent=51 // pred_check_branch
          %4009 = sbr.rel (%p4007) target = $region60
        $region59: #{noisy_net_forward.9} parent=51 // pred_region
          %s4011 = ssub.s32 32, 32
          %4012 = vsyncadd [#allocation3], %s4011
          %s4014 = sshll.u32 [#allocation2], 4
          %s4015 = int_to_ptr.vmem [resolvable:$true] %s4014
          %4017 = dma.vmem_to_hbm [thread:$0]  %s4015, 32, %s8, [#allocation3]
        $region60: #{noisy_net_forward.9} parent=51 // pred_fallthru
          _
        // Predicated region
        $region61: #{noisy_net_forward.9} parent=51 // pred_check
          %p4018 = pneg %p226
        $region62: #{noisy_net_forward.9} parent=51 // pred_check_branch
          %4020 = sbr.rel (%p4018) target = $region64
        $region63: #{noisy_net_forward.9} parent=51 // pred_region
          %4021 = dma.done [#allocation3], 32
        $region64: #{noisy_net_forward.9} parent=51 // pred_fallthru
          _
      $region52: #{noisy_net_forward.9} parent=5 // pred_fallthru
        _
      %p4022 = scmp.le.s32.totalorder 2, %s15
      // Predicated region
      $region65: #{noisy_net_forward.9} parent=5 // pred_check
        %p4023 = pneg %p4022
      $region66: #{noisy_net_forward.9} parent=5 // pred_check_branch
        %4025 = sbr.rel (%p4023) target = $region68
      $region67: #{noisy_net_forward.9} parent=5 // pred_region
        %s4026 = ssub.s32 %s15, 2
      $region68: #{noisy_net_forward.9} parent=5 // pred_fallthru
        _
    $region6: #{noisy_net_forward.9} parent=1 // loop_footer
      %s19 = sadd.s32 1, %s15
    $region7: #{noisy_net_forward.9} parent=1 // loop_footer_branch
      %14 = sbr.rel target = $region3
    $region8: #{noisy_net_forward.9} parent=1 // loop_exit
      _
    %4027 = vsyncpa [#allocation3], 1
    %s4028 = scalar_lea.sflag [#allocation3], 1
    %4029 = vsyncpa %s4028, 1

</llo_original>
